<compile_context>
chip_gen: v7x
topology: tpu7x:2x2x1
jax: 0.10.0
libtpu: 0.0.40
codegen_flags: <defaults>
</compile_context>

<pallas_src>
import functools

import numpy as np
import jax
import jax.numpy as jnp
from jax import lax
from jax.experimental import pallas as pl
from jax.experimental.pallas import tpu as pltpu

_EPS = 1e-5


# --------------------------------------------------------------------------------------
# Kernels
# --------------------------------------------------------------------------------------
def _conv3x3_stats_kernel(x_ref, w1_ref, y1_ref, stats_ref, *, out_h, out_w, c_pad):
    """One image per grid step.

    y1[h] = sum_{dy,dx} x_pad[h+dy, dx:dx+W] @ w1[dy, dx]   (f32 MXU accumulation)
    Also accumulates per-channel sum / sum-of-squares of y1 (for training-mode BN1).
    """

    def row_body(h, stats):
        rows = x_ref[0, pl.ds(h, 3), :, :]                       # (3, W+2, Cp) compute dtype
        acc = jnp.zeros((out_w, c_pad), jnp.float32)
        for dy in range(3):                                      # static 3x3 taps
            r = rows[dy]
            for dx in range(3):
                acc = acc + jnp.dot(r[dx:dx + out_w, :], w1_ref[dy, dx, :, :],
                                    preferred_element_type=jnp.float32)
        y1_ref[0, pl.ds(h, 1), :, :] = acc[None]                 # (1, W, Cp) f32
        row_stats = jnp.concatenate(
            [jnp.sum(acc, axis=0, keepdims=True),
             jnp.sum(acc * acc, axis=0, keepdims=True)], axis=0)  # (2, Cp)
        return stats + row_stats

    stats = lax.fori_loop(0, out_h, row_body, jnp.zeros((2, c_pad), jnp.float32))
    stats_ref[...] = stats[None]                                 # (1, 2, Cp)


def _bn_relu_conv1x1_kernel(y1_ref, scale_ref, shift_ref, w2_ref, y2_ref, stats_ref, *,
                            compute_dtype):
    """Fused BN1 (scale/shift) + ReLU + 1x1 conv on a (TM, Cp) row tile.

    Emits this tile's per-channel sum / sum-of-squares of the conv output for BN2.
    """
    hidden = jnp.maximum(y1_ref[...] * scale_ref[...] + shift_ref[...], 0.0)
    y2 = jnp.dot(hidden.astype(compute_dtype), w2_ref[...],
                 preferred_element_type=jnp.float32)             # (TM, Cp) f32
    y2_ref[...] = y2
    stats_ref[...] = jnp.concatenate(
        [jnp.sum(y2, axis=0, keepdims=True),
         jnp.sum(y2 * y2, axis=0, keepdims=True)], axis=0)[None]  # (1, 2, Cp)


def _bn_residual_relu_kernel(y2_ref, xres_ref, scale_ref, shift_ref, o_ref):
    """Fused BN2 (scale/shift) + residual add + ReLU on a (TM, Cp) row tile."""
    o_ref[...] = jnp.maximum(
        xres_ref[...] + y2_ref[...] * scale_ref[...] + shift_ref[...], 0.0)


# --------------------------------------------------------------------------------------
# Wrapper
# --------------------------------------------------------------------------------------
def _pick_block_rows(m, target):
    """Largest multiple-of-8 divisor of m that is <= target (falls back to m)."""
    t = min(target, m)
    while t >= 8:
        if m % t == 0 and t % 8 == 0:
            return t
        t -= 1
    return m


@functools.partial(jax.jit, static_argnames=("compute_dtype", "block_rows"))
def res_block(x_nchw, w1, b1, g1, bt1, w2, b2, g2, bt2,
              *, compute_dtype=jnp.float32, block_rows=512):
    """x_nchw: (N, C, H, W) f32.  PyTorch-layout params: w1 (C,C,3,3), w2 (C,C,1,1),
    conv biases / BN gamma / BN beta as (C,).  compute_dtype=jnp.bfloat16 on v6e/v7x."""
    N, C, H, W = x_nchw.shape
    Cp = ((C + 127) // 128) * 128          # lane-dense channel padding
    M = N * H * W
    itemsize = np.dtype(compute_dtype).itemsize

    # ---------------- layout glue (pure data movement, stays in XLA) ----------------
    x = jnp.transpose(x_nchw, (0, 2, 3, 1)).astype(jnp.float32)              # NHWC
    x = jnp.pad(x, ((0, 0), (0, 0), (0, 0), (0, Cp - C)))                    # channel pad
    xres = x.reshape(M, Cp)                                                  # residual (f32)
    xp = jnp.pad(x, ((0, 0), (1, 1), (1, 1), (0, 0))).astype(compute_dtype)  # spatial pad=1

    # PyTorch conv weights (Cout, Cin, kH, kW) -> matmul operands, channel-padded.
    w1_k = jnp.pad(jnp.transpose(w1, (2, 3, 1, 0)),
                   ((0, 0), (0, 0), (0, Cp - C), (0, Cp - C))).astype(compute_dtype)
    w2_m = jnp.pad(jnp.transpose(w2[:, :, 0, 0], (1, 0)),
                   ((0, Cp - C), (0, Cp - C))).astype(compute_dtype)

    # Conv biases cancel exactly under training-mode BN (mean subtraction) -> not applied.
    del b1, b2

    pad1 = lambda v, cv=0.0: jnp.pad(v.astype(jnp.float32), (0, Cp - C), constant_values=cv)
    g1p, bt1p = pad1(g1, 1.0), pad1(bt1)
    g2p, bt2p = pad1(g2, 1.0), pad1(bt2)

    # ---------------- pass 1: 3x3 conv + per-image BN1 partial stats ----------------
    y1, stats1 = pl.pallas_call(
        functools.partial(_conv3x3_stats_kernel, out_h=H, out_w=W, c_pad=Cp),
        grid=(N,),
        in_specs=[pl.BlockSpec((1, H + 2, W + 2, Cp), lambda n: (n, 0, 0, 0)),
                  pl.BlockSpec((3, 3, Cp, Cp), lambda n: (0, 0, 0, 0))],
        out_specs=[pl.BlockSpec((1, H, W, Cp), lambda n: (n, 0, 0, 0)),
                   pl.BlockSpec((1, 2, Cp), lambda n: (n, 0, 0))],
        out_shape=[jax.ShapeDtypeStruct((N, H, W, Cp), jnp.float32),
                   jax.ShapeDtypeStruct((N, 2, Cp), jnp.float32)],
        compiler_params=pltpu.CompilerParams(
            dimension_semantics=("parallel",),
            vmem_limit_bytes=64 * 1024 * 1024),
        cost_estimate=pl.CostEstimate(
            flops=2 * M * 9 * Cp * Cp, transcendentals=0,
            bytes_accessed=xp.size * itemsize + w1_k.size * itemsize
                           + (M * Cp + N * 2 * Cp) * 4),
    )(xp, w1_k)

    # ---- BN finalize (tiny, once per BN): fused per-channel scale & shift ----
    def finalize(sums, sqs, gamma, beta):
        mean = sums / M
        var = jnp.maximum(sqs / M - mean * mean, 0.0)        # biased batch variance
        scale = gamma * jax.lax.rsqrt(var + _EPS)
        shift = beta - mean * scale
        return scale.reshape(1, Cp), shift.reshape(1, Cp)

    scale1, shift1 = finalize(stats1[:, 0, :].sum(0), stats1[:, 1, :].sum(0), g1p, bt1p)

    # ---------------- pass 2: BN1 + ReLU + 1x1 conv + per-tile BN2 partial stats ------
    TM = _pick_block_rows(M, block_rows)
    n_tiles = M // TM
    y1_flat = y1.reshape(M, Cp)

    y2, stats2 = pl.pallas_call(
        functools.partial(_bn_relu_conv1x1_kernel, compute_dtype=compute_dtype),
        grid=(n_tiles,),
        in_specs=[pl.BlockSpec((TM, Cp), lambda i: (i, 0)),
                  pl.BlockSpec((1, Cp), lambda i: (0, 0)),
                  pl.BlockSpec((1, Cp), lambda i: (0, 0)),
                  pl.BlockSpec((Cp, Cp), lambda i: (0, 0))],
        out_specs=[pl.BlockSpec((TM, Cp), lambda i: (i, 0)),
                   pl.BlockSpec((1, 2, Cp), lambda i: (i, 0, 0))],
        out_shape=[jax.ShapeDtypeStruct((M, Cp), jnp.float32),
                   jax.ShapeDtypeStruct((n_tiles, 2, Cp), jnp.float32)],
        compiler_params=pltpu.CompilerParams(
            dimension_semantics=("parallel",),
            vmem_limit_bytes=64 * 1024 * 1024),
        cost_estimate=pl.CostEstimate(
            flops=2 * M * Cp * Cp, transcendentals=0,
            bytes_accessed=(2 * M * Cp + n_tiles * 2 * Cp + 2 * Cp) * 4
                           + Cp * Cp * itemsize),
    )(y1_flat, scale1, shift1, w2_m)

    scale2, shift2 = finalize(stats2[:, 0, :].sum(0), stats2[:, 1, :].sum(0), g2p, bt2p)

    # ---------------- pass 3: BN2 + residual add + ReLU ----------------
    out_flat = pl.pallas_call(
        _bn_residual_relu_kernel,
        grid=(n_tiles,),
        in_specs=[pl.BlockSpec((TM, Cp), lambda i: (i, 0)),
                  pl.BlockSpec((TM, Cp), lambda i: (i, 0)),
                  pl.BlockSpec((1, Cp), lambda i: (0, 0)),
                  pl.BlockSpec((1, Cp), lambda i: (0, 0))],
        out_specs=pl.BlockSpec((TM, Cp), lambda i: (i, 0)),
        out_shape=jax.ShapeDtypeStruct((M, Cp), jnp.float32),
        compiler_params=pltpu.CompilerParams(
            dimension_semantics=("parallel",),
            vmem_limit_bytes=64 * 1024 * 1024),
    )(y2, xres, scale2, shift2)

    out = out_flat.reshape(N, H, W, Cp)[..., :C]
    return jnp.transpose(out, (0, 3, 1, 2))                  # back to NCHW


# --------------------------------------------------------------------------------------
# Pure-JAX reference (mirrors PyTorch Res_block.forward with training-mode BN, incl. biases)
# --------------------------------------------------------------------------------------
def _reference(x, w1, b1, g1, bt1, w2, b2, g2, bt2):
    def bn(y, g, b):
        m = y.mean(axis=(0, 2, 3), keepdims=True)
        v = ((y - m) ** 2).mean(axis=(0, 2, 3), keepdims=True)
        return (y - m) * jax.lax.rsqrt(v + _EPS) * g[None, :, None, None] + b[None, :, None, None]

    y = jax.lax.conv_general_dilated(x, w1, (1, 1), ((1, 1), (1, 1)),
                                     dimension_numbers=("NCHW", "OIHW", "NCHW"))
    y = y + b1[None, :, None, None]
    y = jnp.maximum(bn(y, g1, bt1), 0.0)
    y = jax.lax.conv_general_dilated(y, w2, (1, 1), ((0, 0), (0, 0)),
                                     dimension_numbers=("NCHW", "OIHW", "NCHW"))
    y = y + b2[None, :, None, None]
    y = bn(y, g2, bt2)
    return jnp.maximum(x + y, 0.0)


if __name__ == "__main__":
    key = jax.random.PRNGKey(0)

    def make_params(k, C):
        ks = jax.random.split(k, 4)
        w1 = jax.random.normal(ks[0], (C, C, 3, 3), jnp.float32) * 0.2
        b1 = jax.random.normal(ks[1], (C,), jnp.float32) * 0.1
        w2 = jax.random.normal(ks[2], (C, C, 1, 1), jnp.float32) * 0.2
        b2 = jax.random.normal(ks[3], (C,), jnp.float32) * 0.1
        g1 = jnp.ones((C,), jnp.float32); bt1 = jnp.zeros((C,), jnp.float32)
        g2 = jnp.ones((C,), jnp.float32); bt2 = jnp.zeros((C,), jnp.float32)
        return w1, b1, g1, bt1, w2, b2, g2, bt2

    k1, k2, k3, k4 = jax.random.split(key, 4)

    # ---- test 1: primary shape, f32 compute path ----
    N, C, H, W = 2, 4, 16, 16
    x = jax.random.normal(k1, (N, C, H, W), jnp.float32)
    params = make_params(k2, C)
    out = jax.block_until_ready(res_block(x, *params))
    ref = _reference(x, *params)
    assert out.shape == (N, C, H, W)
    assert jnp.allclose(out, ref, atol=2e-3, rtol=2e-3), "f32 Pallas output mismatch vs reference"

    # ---- test 2: multi-tile M path (M=1024 -> 2 row tiles) + odd channel count (padding) ----
    N2, C2, H2, W2 = 1, 3, 32, 32
    x2 = jax.random.normal(k3, (N2, C2, H2, W2), jnp.float32)
    params2 = make_params(k4, C2)
    out2 = jax.block_until_ready(res_block(x2, *params2))
    ref2 = _reference(x2, *params2)
    assert jnp.allclose(out2, ref2, atol=2e-3, rtol=2e-3), "multi-tile Pallas output mismatch"

    # ---- test 3: bf16 MXU operands (v6e/v7x recommendation); loose tolerance for bf16 rounding --
    out_bf16 = jax.block_until_ready(res_block(x, *params, compute_dtype=jnp.bfloat16))
    assert jnp.allclose(out_bf16, ref, atol=5e-2, rtol=5e-2), "bf16 Pallas output mismatch"

    print("KERNEL_OK")
</pallas_src>

<mosaic_0001>
module attributes {stable_mosaic.version = 11 : i64} {
  func.func @_bn_relu_conv1x1_kernel(%arg0: i32, %arg1: memref<512x128xf32, #tpu.memory_space<vmem>>, %arg2: memref<1x128xf32, #tpu.memory_space<vmem>>, %arg3: memref<1x128xf32, #tpu.memory_space<vmem>>, %arg4: memref<128x128xf32, #tpu.memory_space<vmem>>, %arg5: memref<512x128xf32, #tpu.memory_space<vmem>>, %arg6: memref<1x2x128xf32, #tpu.memory_space<vmem>>) attributes {dimension_semantics = [#tpu.dimension_semantics<parallel>], iteration_bounds = array<i64: 1>, scalar_prefetch = 0 : i64, scratch_operands = 0 : i64, tpu.core_type = #tpu.core_type<tc>, window_params = [{transform_indices = @transform_0, window_bounds = array<i64: 512, 128>}, {pipeline_mode = #tpu.pipeline_mode<synchronous>, transform_indices = @transform_1, window_bounds = array<i64: 1, 128>}, {pipeline_mode = #tpu.pipeline_mode<synchronous>, transform_indices = @transform_2, window_bounds = array<i64: 1, 128>}, {pipeline_mode = #tpu.pipeline_mode<synchronous>, transform_indices = @transform_3, window_bounds = array<i64: 128, 128>}, {transform_indices = @transform_4, window_bounds = array<i64: 512, 128>}, {transform_indices = @transform_5, window_bounds = array<i64: 1, 2, 128>}]} {
    %c0 = arith.constant 0 : index
    %c0_0 = arith.constant 0 : index
    %0 = vector.load %arg1[%c0, %c0_0] : memref<512x128xf32, #tpu.memory_space<vmem>>, vector<512x128xf32>
    %c0_1 = arith.constant 0 : index
    %c0_2 = arith.constant 0 : index
    %1 = vector.load %arg2[%c0_1, %c0_2] : memref<1x128xf32, #tpu.memory_space<vmem>>, vector<1x128xf32>
    %2 = vector.broadcast %1 : vector<1x128xf32> to vector<512x128xf32>
    %3 = arith.mulf %0, %2 : vector<512x128xf32>
    %c0_3 = arith.constant 0 : index
    %c0_4 = arith.constant 0 : index
    %4 = vector.load %arg3[%c0_3, %c0_4] : memref<1x128xf32, #tpu.memory_space<vmem>>, vector<1x128xf32>
    %5 = vector.broadcast %4 : vector<1x128xf32> to vector<512x128xf32>
    %6 = arith.addf %3, %5 : vector<512x128xf32>
    %cst = arith.constant 0.000000e+00 : f32
    %7 = vector.broadcast %cst : f32 to vector<512x128xf32>
    %8 = arith.maximumf %6, %7 : vector<512x128xf32>
    %c0_5 = arith.constant 0 : index
    %c0_6 = arith.constant 0 : index
    %9 = vector.load %arg4[%c0_5, %c0_6] : memref<128x128xf32, #tpu.memory_space<vmem>>, vector<128x128xf32>
    %cst_7 = arith.constant dense<0.000000e+00> : vector<512x128xf32>
    %10 = tpu.matmul %8, %9, %cst_7 {dimension_numbers = #tpu.dot_dimension_numbers<[1], [0], [0], [1], [0, 0, 1, 1], [], []>} : vector<512x128xf32>, vector<128x128xf32>, vector<512x128xf32> -> vector<512x128xf32>
    %c0_8 = arith.constant 0 : index
    %c0_9 = arith.constant 0 : index
    %11 = vector.load %arg5[%c0_8, %c0_9] : memref<512x128xf32, #tpu.memory_space<vmem>>, vector<512x128xf32>
    tpu.vector_store %arg5[%c0_8, %c0_9], %10 {strides = array<i32>} : memref<512x128xf32, #tpu.memory_space<vmem>>, vector<512x128xf32>,
    %cst_10 = arith.constant dense<0.000000e+00> : vector<128xf32>
    %12 = vector.multi_reduction <add>, %10, %cst_10 [0] : vector<512x128xf32> to vector<128xf32>
    %13 = vector.shape_cast %12 : vector<128xf32> to vector<1x128xf32>
    %14 = arith.mulf %10, %10 : vector<512x128xf32>
    %cst_11 = arith.constant dense<0.000000e+00> : vector<128xf32>
    %15 = vector.multi_reduction <add>, %14, %cst_11 [0] : vector<512x128xf32> to vector<128xf32>
    %16 = vector.shape_cast %15 : vector<128xf32> to vector<1x128xf32>
    %17 = tpu.concatenate %13, %16 in 0 : vector<1x128xf32>, vector<1x128xf32> -> vector<2x128xf32>
    %18 = vector.shape_cast %17 : vector<2x128xf32> to vector<1x2x128xf32>
    %c0_12 = arith.constant 0 : index
    %c0_13 = arith.constant 0 : index
    %c0_14 = arith.constant 0 : index
    %19 = vector.load %arg6[%c0_12, %c0_13, %c0_14] : memref<1x2x128xf32, #tpu.memory_space<vmem>>, vector<1x2x128xf32>
    tpu.vector_store %arg6[%c0_12, %c0_13, %c0_14], %18 {strides = array<i32>} : memref<1x2x128xf32, #tpu.memory_space<vmem>>, vector<1x2x128xf32>,
    return
  }
  func.func @transform_0(%arg0: i32) -> (i32, i32) {
    %c0_i32 = arith.constant 0 : i32
    %c0_i32_0 = arith.constant 0 : i32
    return %arg0, %c0_i32 : i32, i32
  }
  func.func @transform_1(%arg0: i32) -> (i32, i32) {
    %c0_i32 = arith.constant 0 : i32
    %c0_i32_0 = arith.constant 0 : i32
    %c0_i32_1 = arith.constant 0 : i32
    return %c0_i32, %c0_i32_0 : i32, i32
  }
  func.func @transform_2(%arg0: i32) -> (i32, i32) {
    %c0_i32 = arith.constant 0 : i32
    %c0_i32_0 = arith.constant 0 : i32
    %c0_i32_1 = arith.constant 0 : i32
    return %c0_i32, %c0_i32_0 : i32, i32
  }
  func.func @transform_3(%arg0: i32) -> (i32, i32) {
    %c0_i32 = arith.constant 0 : i32
    %c0_i32_0 = arith.constant 0 : i32
    %c0_i32_1 = arith.constant 0 : i32
    return %c0_i32, %c0_i32_0 : i32, i32
  }
  func.func @transform_4(%arg0: i32) -> (i32, i32) {
    %c0_i32 = arith.constant 0 : i32
    %c0_i32_0 = arith.constant 0 : i32
    return %arg0, %c0_i32 : i32, i32
  }
  func.func @transform_5(%arg0: i32) -> (i32, i32, i32) {
    %c0_i32 = arith.constant 0 : i32
    %c0_i32_0 = arith.constant 0 : i32
    %c0_i32_1 = arith.constant 0 : i32
    return %arg0, %c0_i32, %c0_i32_0 : i32, i32, i32
  }
}

module attributes {stable_mosaic.version = 11 : i64} {
  func.func @_conv3x3_stats_kernel(%arg0: i32, %arg1: memref<1x18x18x128xf32, #tpu.memory_space<vmem>>, %arg2: memref<3x3x128x128xf32, #tpu.memory_space<vmem>>, %arg3: memref<1x16x16x128xf32, #tpu.memory_space<vmem>>, %arg4: memref<1x2x128xf32, #tpu.memory_space<vmem>>) attributes {dimension_semantics = [#tpu.dimension_semantics<parallel>], iteration_bounds = array<i64: 2>, scalar_prefetch = 0 : i64, scratch_operands = 0 : i64, tpu.core_type = #tpu.core_type<tc>, window_params = [{transform_indices = @transform_0, window_bounds = array<i64: 1, 18, 18, 128>}, {pipeline_mode = #tpu.pipeline_mode<synchronous>, transform_indices = @transform_1, window_bounds = array<i64: 3, 3, 128, 128>}, {transform_indices = @transform_2, window_bounds = array<i64: 1, 16, 16, 128>}, {transform_indices = @transform_3, window_bounds = array<i64: 1, 2, 128>}]} {
    %cst = arith.constant 0.000000e+00 : f32
    %0 = vector.broadcast %cst : f32 to vector<2x128xf32>
    %c0_i32 = arith.constant 0 : i32
    %c16_i32 = arith.constant 16 : i32
    %1 = arith.addi %c0_i32, %c16_i32 : i32
    %c1_i32 = arith.constant 1 : i32
    %2 = scf.for %arg5 = %c0_i32 to %1 step %c1_i32 iter_args(%arg6 = %0) -> (vector<2x128xf32>)  : i32 {
      %c0_3 = arith.constant 0 : index
      %5 = arith.index_cast %arg5 : i32 to index
      %c0_4 = arith.constant 0 : index
      %c0_5 = arith.constant 0 : index
      %6 = vector.load %arg1[%c0_3, %5, %c0_4, %c0_5] : memref<1x18x18x128xf32, #tpu.memory_space<vmem>>, vector<1x3x18x128xf32>
      %7 = vector.shape_cast %6 : vector<1x3x18x128xf32> to vector<3x18x128xf32>
      %cst_6 = arith.constant 0.000000e+00 : f32
      %8 = vector.broadcast %cst_6 : f32 to vector<16x128xf32>
      %9 = vector.extract_strided_slice %7 {offsets = [0, 0, 0], sizes = [1, 18, 128], strides = [1, 1, 1]} : vector<3x18x128xf32> to vector<1x18x128xf32>
      %10 = vector.shape_cast %9 : vector<1x18x128xf32> to vector<18x128xf32>
      %11 = vector.extract_strided_slice %10 {offsets = [0, 0], sizes = [16, 128], strides = [1, 1]} : vector<18x128xf32> to vector<16x128xf32>
      %c0_7 = arith.constant 0 : index
      %c0_8 = arith.constant 0 : index
      %c0_9 = arith.constant 0 : index
      %c0_10 = arith.constant 0 : index
      %12 = vector.load %arg2[%c0_7, %c0_8, %c0_9, %c0_10] : memref<3x3x128x128xf32, #tpu.memory_space<vmem>>, vector<1x1x128x128xf32>
      %13 = vector.shape_cast %12 : vector<1x1x128x128xf32> to vector<128x128xf32>
      %cst_11 = arith.constant dense<0.000000e+00> : vector<16x128xf32>
      %14 = tpu.matmul %11, %13, %cst_11 {dimension_numbers = #tpu.dot_dimension_numbers<[1], [0], [0], [1], [0, 0, 1, 1], [], []>} : vector<16x128xf32>, vector<128x128xf32>, vector<16x128xf32> -> vector<16x128xf32>
      %15 = arith.addf %8, %14 : vector<16x128xf32>
      %16 = vector.extract_strided_slice %10 {offsets = [1, 0], sizes = [16, 128], strides = [1, 1]} : vector<18x128xf32> to vector<16x128xf32>
      %c0_12 = arith.constant 0 : index
      %c1 = arith.constant 1 : index
      %c0_13 = arith.constant 0 : index
      %c0_14 = arith.constant 0 : index
      %17 = vector.load %arg2[%c0_12, %c1, %c0_13, %c0_14] : memref<3x3x128x128xf32, #tpu.memory_space<vmem>>, vector<1x1x128x128xf32>
      %18 = vector.shape_cast %17 : vector<1x1x128x128xf32> to vector<128x128xf32>
      %cst_15 = arith.constant dense<0.000000e+00> : vector<16x128xf32>
      %19 = tpu.matmul %16, %18, %cst_15 {dimension_numbers = #tpu.dot_dimension_numbers<[1], [0], [0], [1], [0, 0, 1, 1], [], []>} : vector<16x128xf32>, vector<128x128xf32>, vector<16x128xf32> -> vector<16x128xf32>
      %20 = arith.addf %15, %19 : vector<16x128xf32>
      %21 = vector.extract_strided_slice %10 {offsets = [2, 0], sizes = [16, 128], strides = [1, 1]} : vector<18x128xf32> to vector<16x128xf32>
      %c0_16 = arith.constant 0 : index
      %c2 = arith.constant 2 : index
      %c0_17 = arith.constant 0 : index
      %c0_18 = arith.constant 0 : index
      %22 = vector.load %arg2[%c0_16, %c2, %c0_17, %c0_18] : memref<3x3x128x128xf32, #tpu.memory_space<vmem>>, vector<1x1x128x128xf32>
      %23 = vector.shape_cast %22 : vector<1x1x128x128xf32> to vector<128x128xf32>
      %cst_19 = arith.constant dense<0.000000e+00> : vector<16x128xf32>
      %24 = tpu.matmul %21, %23, %cst_19 {dimension_numbers = #tpu.dot_dimension_numbers<[1], [0], [0], [1], [0, 0, 1, 1], [], []>} : vector<16x128xf32>, vector<128x128xf32>, vector<16x128xf32> -> vector<16x128xf32>
      %25 = arith.addf %20, %24 : vector<16x128xf32>
      %26 = vector.extract_strided_slice %7 {offsets = [1, 0, 0], sizes = [1, 18, 128], strides = [1, 1, 1]} : vector<3x18x128xf32> to vector<1x18x128xf32>
      %27 = vector.shape_cast %26 : vector<1x18x128xf32> to vector<18x128xf32>
      %28 = vector.extract_strided_slice %27 {offsets = [0, 0], sizes = [16, 128], strides = [1, 1]} : vector<18x128xf32> to vector<16x128xf32>
      %c1_20 = arith.constant 1 : index
      %c0_21 = arith.constant 0 : index
      %c0_22 = arith.constant 0 : index
      %c0_23 = arith.constant 0 : index
      %29 = vector.load %arg2[%c1_20, %c0_21, %c0_22, %c0_23] : memref<3x3x128x128xf32, #tpu.memory_space<vmem>>, vector<1x1x128x128xf32>
      %30 = vector.shape_cast %29 : vector<1x1x128x128xf32> to vector<128x128xf32>
      %cst_24 = arith.constant dense<0.000000e+00> : vector<16x128xf32>
      %31 = tpu.matmul %28, %30, %cst_24 {dimension_numbers = #tpu.dot_dimension_numbers<[1], [0], [0], [1], [0, 0, 1, 1], [], []>} : vector<16x128xf32>, vector<128x128xf32>, vector<16x128xf32> -> vector<16x128xf32>
      %32 = arith.addf %25, %31 : vector<16x128xf32>
      %33 = vector.extract_strided_slice %27 {offsets = [1, 0], sizes = [16, 128], strides = [1, 1]} : vector<18x128xf32> to vector<16x128xf32>
      %c1_25 = arith.constant 1 : index
      %c1_26 = arith.constant 1 : index
      %c0_27 = arith.constant 0 : index
      %c0_28 = arith.constant 0 : index
      %34 = vector.load %arg2[%c1_25, %c1_26, %c0_27, %c0_28] : memref<3x3x128x128xf32, #tpu.memory_space<vmem>>, vector<1x1x128x128xf32>
      %35 = vector.shape_cast %34 : vector<1x1x128x128xf32> to vector<128x128xf32>
      %cst_29 = arith.constant dense<0.000000e+00> : vector<16x128xf32>
      %36 = tpu.matmul %33, %35, %cst_29 {dimension_numbers = #tpu.dot_dimension_numbers<[1], [0], [0], [1], [0, 0, 1, 1], [], []>} : vector<16x128xf32>, vector<128x128xf32>, vector<16x128xf32> -> vector<16x128xf32>
      %37 = arith.addf %32, %36 : vector<16x128xf32>
      %38 = vector.extract_strided_slice %27 {offsets = [2, 0], sizes = [16, 128], strides = [1, 1]} : vector<18x128xf32> to vector<16x128xf32>
      %c1_30 = arith.constant 1 : index
      %c2_31 = arith.constant 2 : index
      %c0_32 = arith.constant 0 : index
      %c0_33 = arith.constant 0 : index
      %39 = vector.load %arg2[%c1_30, %c2_31, %c0_32, %c0_33] : memref<3x3x128x128xf32, #tpu.memory_space<vmem>>, vector<1x1x128x128xf32>
      %40 = vector.shape_cast %39 : vector<1x1x128x128xf32> to vector<128x128xf32>
      %cst_34 = arith.constant dense<0.000000e+00> : vector<16x128xf32>
      %41 = tpu.matmul %38, %40, %cst_34 {dimension_numbers = #tpu.dot_dimension_numbers<[1], [0], [0], [1], [0, 0, 1, 1], [], []>} : vector<16x128xf32>, vector<128x128xf32>, vector<16x128xf32> -> vector<16x128xf32>
      %42 = arith.addf %37, %41 : vector<16x128xf32>
      %43 = vector.extract_strided_slice %7 {offsets = [2, 0, 0], sizes = [1, 18, 128], strides = [1, 1, 1]} : vector<3x18x128xf32> to vector<1x18x128xf32>
      %44 = vector.shape_cast %43 : vector<1x18x128xf32> to vector<18x128xf32>
      %45 = vector.extract_strided_slice %44 {offsets = [0, 0], sizes = [16, 128], strides = [1, 1]} : vector<18x128xf32> to vector<16x128xf32>
      %c2_35 = arith.constant 2 : index
      %c0_36 = arith.constant 0 : index
      %c0_37 = arith.constant 0 : index
      %c0_38 = arith.constant 0 : index
      %46 = vector.load %arg2[%c2_35, %c0_36, %c0_37, %c0_38] : memref<3x3x128x128xf32, #tpu.memory_space<vmem>>, vector<1x1x128x128xf32>
      %47 = vector.shape_cast %46 : vector<1x1x128x128xf32> to vector<128x128xf32>
      %cst_39 = arith.constant dense<0.000000e+00> : vector<16x128xf32>
      %48 = tpu.matmul %45, %47, %cst_39 {dimension_numbers = #tpu.dot_dimension_numbers<[1], [0], [0], [1], [0, 0, 1, 1], [], []>} : vector<16x128xf32>, vector<128x128xf32>, vector<16x128xf32> -> vector<16x128xf32>
      %49 = arith.addf %42, %48 : vector<16x128xf32>
      %50 = vector.extract_strided_slice %44 {offsets = [1, 0], sizes = [16, 128], strides = [1, 1]} : vector<18x128xf32> to vector<16x128xf32>
      %c2_40 = arith.constant 2 : index
      %c1_41 = arith.constant 1 : index
      %c0_42 = arith.constant 0 : index
      %c0_43 = arith.constant 0 : index
      %51 = vector.load %arg2[%c2_40, %c1_41, %c0_42, %c0_43] : memref<3x3x128x128xf32, #tpu.memory_space<vmem>>, vector<1x1x128x128xf32>
      %52 = vector.shape_cast %51 : vector<1x1x128x128xf32> to vector<128x128xf32>
      %cst_44 = arith.constant dense<0.000000e+00> : vector<16x128xf32>
      %53 = tpu.matmul %50, %52, %cst_44 {dimension_numbers = #tpu.dot_dimension_numbers<[1], [0], [0], [1], [0, 0, 1, 1], [], []>} : vector<16x128xf32>, vector<128x128xf32>, vector<16x128xf32> -> vector<16x128xf32>
      %54 = arith.addf %49, %53 : vector<16x128xf32>
      %55 = vector.extract_strided_slice %44 {offsets = [2, 0], sizes = [16, 128], strides = [1, 1]} : vector<18x128xf32> to vector<16x128xf32>
      %c2_45 = arith.constant 2 : index
      %c2_46 = arith.constant 2 : index
      %c0_47 = arith.constant 0 : index
      %c0_48 = arith.constant 0 : index
      %56 = vector.load %arg2[%c2_45, %c2_46, %c0_47, %c0_48] : memref<3x3x128x128xf32, #tpu.memory_space<vmem>>, vector<1x1x128x128xf32>
      %57 = vector.shape_cast %56 : vector<1x1x128x128xf32> to vector<128x128xf32>
      %cst_49 = arith.constant dense<0.000000e+00> : vector<16x128xf32>
      %58 = tpu.matmul %55, %57, %cst_49 {dimension_numbers = #tpu.dot_dimension_numbers<[1], [0], [0], [1], [0, 0, 1, 1], [], []>} : vector<16x128xf32>, vector<128x128xf32>, vector<16x128xf32> -> vector<16x128xf32>
      %59 = arith.addf %54, %58 : vector<16x128xf32>
      %60 = vector.shape_cast %59 : vector<16x128xf32> to vector<1x16x128xf32>
      %c0_50 = arith.constant 0 : index
      %61 = arith.index_cast %arg5 : i32 to index
      %c0_51 = arith.constant 0 : index
      %c0_52 = arith.constant 0 : index
      %62 = vector.load %arg3[%c0_50, %61, %c0_51, %c0_52] : memref<1x16x16x128xf32, #tpu.memory_space<vmem>>, vector<1x1x16x128xf32>
      %63 = vector.shape_cast %62 : vector<1x1x16x128xf32> to vector<1x16x128xf32>
      %64 = vector.shape_cast %60 : vector<1x16x128xf32> to vector<1x1x16x128xf32>
      tpu.vector_store %arg3[%c0_50, %61, %c0_51, %c0_52], %64 {strides = array<i32>} : memref<1x16x16x128xf32, #tpu.memory_space<vmem>>, vector<1x1x16x128xf32>,
      %cst_53 = arith.constant dense<0.000000e+00> : vector<128xf32>
      %65 = vector.multi_reduction <add>, %59, %cst_53 [0] : vector<16x128xf32> to vector<128xf32>
      %66 = vector.shape_cast %65 : vector<128xf32> to vector<1x128xf32>
      %67 = arith.mulf %59, %59 : vector<16x128xf32>
      %cst_54 = arith.constant dense<0.000000e+00> : vector<128xf32>
      %68 = vector.multi_reduction <add>, %67, %cst_54 [0] : vector<16x128xf32> to vector<128xf32>
      %69 = vector.shape_cast %68 : vector<128xf32> to vector<1x128xf32>
      %70 = tpu.concatenate %66, %69 in 0 : vector<1x128xf32>, vector<1x128xf32> -> vector<2x128xf32>
      %71 = arith.addf %arg6, %70 : vector<2x128xf32>
      scf.yield %71 : vector<2x128xf32>
    }
    %c16_i32_0 = arith.constant 16 : i32
    %3 = vector.shape_cast %2 : vector<2x128xf32> to vector<1x2x128xf32>
    %c0 = arith.constant 0 : index
    %c0_1 = arith.constant 0 : index
    %c0_2 = arith.constant 0 : index
    %4 = vector.load %arg4[%c0, %c0_1, %c0_2] : memref<1x2x128xf32, #tpu.memory_space<vmem>>, vector<1x2x128xf32>
    tpu.vector_store %arg4[%c0, %c0_1, %c0_2], %3 {strides = array<i32>} : memref<1x2x128xf32, #tpu.memory_space<vmem>>, vector<1x2x128xf32>,
    return
  }
  func.func @transform_0(%arg0: i32) -> (i32, i32, i32, i32) {
    %c0_i32 = arith.constant 0 : i32
    %c0_i32_0 = arith.constant 0 : i32
    %c0_i32_1 = arith.constant 0 : i32
    %c0_i32_2 = arith.constant 0 : i32
    return %arg0, %c0_i32, %c0_i32_0, %c0_i32_1 : i32, i32, i32, i32
  }
  func.func @transform_1(%arg0: i32) -> (i32, i32, i32, i32) {
    %c0_i32 = arith.constant 0 : i32
    %c0_i32_0 = arith.constant 0 : i32
    %c0_i32_1 = arith.constant 0 : i32
    %c0_i32_2 = arith.constant 0 : i32
    %c0_i32_3 = arith.constant 0 : i32
    return %c0_i32, %c0_i32_0, %c0_i32_1, %c0_i32_2 : i32, i32, i32, i32
  }
  func.func @transform_2(%arg0: i32) -> (i32, i32, i32, i32) {
    %c0_i32 = arith.constant 0 : i32
    %c0_i32_0 = arith.constant 0 : i32
    %c0_i32_1 = arith.constant 0 : i32
    %c0_i32_2 = arith.constant 0 : i32
    return %arg0, %c0_i32, %c0_i32_0, %c0_i32_1 : i32, i32, i32, i32
  }
  func.func @transform_3(%arg0: i32) -> (i32, i32, i32) {
    %c0_i32 = arith.constant 0 : i32
    %c0_i32_0 = arith.constant 0 : i32
    %c0_i32_1 = arith.constant 0 : i32
    return %arg0, %c0_i32, %c0_i32_0 : i32, i32, i32
  }
}

module attributes {stable_mosaic.version = 11 : i64} {
  func.func @_bn_residual_relu_kernel(%arg0: i32, %arg1: memref<512x128xf32, #tpu.memory_space<vmem>>, %arg2: memref<512x128xf32, #tpu.memory_space<vmem>>, %arg3: memref<1x128xf32, #tpu.memory_space<vmem>>, %arg4: memref<1x128xf32, #tpu.memory_space<vmem>>, %arg5: memref<512x128xf32, #tpu.memory_space<vmem>>) attributes {dimension_semantics = [#tpu.dimension_semantics<parallel>], iteration_bounds = array<i64: 1>, scalar_prefetch = 0 : i64, scratch_operands = 0 : i64, tpu.core_type = #tpu.core_type<tc>, window_params = [{transform_indices = @transform_0, window_bounds = array<i64: 512, 128>}, {transform_indices = @transform_1, window_bounds = array<i64: 512, 128>}, {pipeline_mode = #tpu.pipeline_mode<synchronous>, transform_indices = @transform_2, window_bounds = array<i64: 1, 128>}, {pipeline_mode = #tpu.pipeline_mode<synchronous>, transform_indices = @transform_3, window_bounds = array<i64: 1, 128>}, {transform_indices = @transform_4, window_bounds = array<i64: 512, 128>}]} {
    %c0 = arith.constant 0 : index
    %c0_0 = arith.constant 0 : index
    %0 = vector.load %arg2[%c0, %c0_0] : memref<512x128xf32, #tpu.memory_space<vmem>>, vector<512x128xf32>
    %c0_1 = arith.constant 0 : index
    %c0_2 = arith.constant 0 : index
    %1 = vector.load %arg1[%c0_1, %c0_2] : memref<512x128xf32, #tpu.memory_space<vmem>>, vector<512x128xf32>
    %c0_3 = arith.constant 0 : index
    %c0_4 = arith.constant 0 : index
    %2 = vector.load %arg3[%c0_3, %c0_4] : memref<1x128xf32, #tpu.memory_space<vmem>>, vector<1x128xf32>
    %3 = vector.broadcast %2 : vector<1x128xf32> to vector<512x128xf32>
    %4 = arith.mulf %1, %3 : vector<512x128xf32>
    %5 = arith.addf %0, %4 : vector<512x128xf32>
    %c0_5 = arith.constant 0 : index
    %c0_6 = arith.constant 0 : index
    %6 = vector.load %arg4[%c0_5, %c0_6] : memref<1x128xf32, #tpu.memory_space<vmem>>, vector<1x128xf32>
    %7 = vector.broadcast %6 : vector<1x128xf32> to vector<512x128xf32>
    %8 = arith.addf %5, %7 : vector<512x128xf32>
    %cst = arith.constant 0.000000e+00 : f32
    %9 = vector.broadcast %cst : f32 to vector<512x128xf32>
    %10 = arith.maximumf %8, %9 : vector<512x128xf32>
    %c0_7 = arith.constant 0 : index
    %c0_8 = arith.constant 0 : index
    %11 = vector.load %arg5[%c0_7, %c0_8] : memref<512x128xf32, #tpu.memory_space<vmem>>, vector<512x128xf32>
    tpu.vector_store %arg5[%c0_7, %c0_8], %10 {strides = array<i32>} : memref<512x128xf32, #tpu.memory_space<vmem>>, vector<512x128xf32>,
    return
  }
  func.func @transform_0(%arg0: i32) -> (i32, i32) {
    %c0_i32 = arith.constant 0 : i32
    %c0_i32_0 = arith.constant 0 : i32
    return %arg0, %c0_i32 : i32, i32
  }
  func.func @transform_1(%arg0: i32) -> (i32, i32) {
    %c0_i32 = arith.constant 0 : i32
    %c0_i32_0 = arith.constant 0 : i32
    return %arg0, %c0_i32 : i32, i32
  }
  func.func @transform_2(%arg0: i32) -> (i32, i32) {
    %c0_i32 = arith.constant 0 : i32
    %c0_i32_0 = arith.constant 0 : i32
    %c0_i32_1 = arith.constant 0 : i32
    return %c0_i32, %c0_i32_0 : i32, i32
  }
  func.func @transform_3(%arg0: i32) -> (i32, i32) {
    %c0_i32 = arith.constant 0 : i32
    %c0_i32_0 = arith.constant 0 : i32
    %c0_i32_1 = arith.constant 0 : i32
    return %c0_i32, %c0_i32_0 : i32, i32
  }
  func.func @transform_4(%arg0: i32) -> (i32, i32) {
    %c0_i32 = arith.constant 0 : i32
    %c0_i32_0 = arith.constant 0 : i32
    return %arg0, %c0_i32 : i32, i32
  }
}

</mosaic_0001>

<llo_original>
// kernel: res_block.5
$region0: #{res_block.5}
  #allocation0 [shape = 'u32[]', space=smem, size = 0x4, offset = 0x4, fixed_abs, tag = 'smem constant byte address 0x4 - core index']
  #allocation1 [shape = 'u32[144,128]{1,0:T(1,128)}', space=vmem, size = 0x12000, scoped, tag = 'internal scratch']
  %s0 = inlined_call_operand.hbm [shape: f32[512,128], index: 0, kind: input, shape index: {}]
  %s1 = inlined_call_operand.hbm [shape: f32[512,128], index: 1, kind: input, shape index: {}]
  %s2 = inlined_call_operand.hbm [shape: f32[1,128], index: 2, kind: input, shape index: {}]
  %s3 = inlined_call_operand.hbm [shape: f32[1,128], index: 3, kind: input, shape index: {}]
  %s4 = inlined_call_operand.hbm [shape: f32[512,128], index: 4, kind: output, shape index: {}]
  %s5 = sld [smem:[#allocation0]]
  $region42: #{res_block.5} parent=0
    _
  %s7 = ssub.s32 1, %s5
  %s8 = scalar_select 0, %s7, %s5
  $region1: #{res_block.5} parent=0
    #allocation2 [shape = 'u8[262144]{0}', space=vmem, size = 0x40000, scoped, tag = 'input window, operand 0, single buffered']
    #allocation3 [shape = 's32[1]{0}', space=sflag, size = 0x4, scoped, tag = 'scoped memory for res_block.5']
    #allocation4 [shape = 's32[1]{0}', space=sflag, size = 0x4, scoped, tag = 'scoped memory for res_block.5']
    #allocation5 [shape = 'u8[262144]{0}', space=vmem, size = 0x40000, scoped, tag = 'input window, operand 1, single buffered']
    #allocation6 [shape = 's32[1]{0}', space=sflag, size = 0x4, scoped, tag = 'scoped memory for res_block.5']
    #allocation7 [shape = 'u8[512]{0}', space=vmem, size = 0x400, scoped, tag = 'input window, operand 2, single buffered']
    #allocation8 [shape = 'u8[512]{0}', space=vmem, size = 0x400, scoped, tag = 'input window, operand 3, single buffered']
    #allocation9 [shape = 's32[1]{0}', space=sflag, size = 0x4, scoped, tag = 'scoped memory for res_block.5']
    #allocation10 [shape = 'u8[262144]{0}', space=vmem, size = 0x40000, scoped, tag = 'output window, operand 0, single buffered']
    %9 = vsyncpa [#allocation3], 0
    %10 = vsyncpa [#allocation6], 0
    %11 = vsyncpa [#allocation9], 0
    %12 = vsyncpa [#allocation4], 0
    // Predicated region
    $region2: #{res_block.5} parent=1 // pred_check
      _
    $region3: #{res_block.5} parent=1 // pred_check_branch
      %14 = sbr.rel (0) target = $region5
    $region4: #{res_block.5} parent=1 // pred_region
      %s16 = ssub.s32 8192, 8192
      %17 = vsyncadd [#allocation3], %s16
      %s18 = sshll.u32 [#allocation2], 4
      %s19 = int_to_ptr.vmem [resolvable:$true] %s18
      %24 = dma.hbm_to_vmem [thread:$0]  %s0, 8192, %s19, [#allocation3], 128, 128, 8
    $region5: #{res_block.5} parent=1 // pred_fallthru
      _
    // Predicated region
    $region6: #{res_block.5} parent=1 // pred_check
      _
    $region7: #{res_block.5} parent=1 // pred_check_branch
      %26 = sbr.rel (0) target = $region9
    $region8: #{res_block.5} parent=1 // pred_region
      %s28 = ssub.s32 8192, 8192
      %29 = vsyncadd [#allocation6], %s28
      %s30 = sshll.u32 [#allocation5], 4
      %s31 = int_to_ptr.vmem [resolvable:$true] %s30
      %36 = dma.hbm_to_vmem [thread:$0]  %s1, 8192, %s31, [#allocation6], 128, 128, 8
    $region9: #{res_block.5} parent=1 // pred_fallthru
      _
    // Predicated region
    $region10: #{res_block.5} parent=1 // pred_check
      _
    $region11: #{res_block.5} parent=1 // pred_check_branch
      %38 = sbr.rel (0) target = $region13
    $region12: #{res_block.5} parent=1 // pred_region
      %s40 = ssub.s32 16, 16
      %41 = vsyncadd [#allocation6], %s40
      %s43 = sshll.u32 [#allocation7], 4
      %s44 = int_to_ptr.vmem [resolvable:$true] %s43
      %46 = dma.hbm_to_vmem [thread:$0]  %s2, 16, %s44, [#allocation6]
    $region13: #{res_block.5} parent=1 // pred_fallthru
      _
    // Predicated region
    $region14: #{res_block.5} parent=1 // pred_check
      _
    $region15: #{res_block.5} parent=1 // pred_check_branch
      %48 = sbr.rel (0) target = $region17
    $region16: #{res_block.5} parent=1 // pred_region
      %s50 = ssub.s32 16, 16
      %51 = vsyncadd [#allocation9], %s50
      %s53 = sshll.u32 [#allocation8], 4
      %s54 = int_to_ptr.vmem [resolvable:$true] %s53
      %56 = dma.hbm_to_vmem [thread:$0]  %s3, 16, %s54, [#allocation9]
    $region17: #{res_block.5} parent=1 // pred_fallthru
      _
    // Predicated region
    $region18: #{res_block.5} parent=1 // pred_check
      _
    $region19: #{res_block.5} parent=1 // pred_check_branch
      %58 = sbr.rel (0) target = $region21
    $region20: #{res_block.5} parent=1 // pred_region
      %59 = dma.done [#allocation3], 8192
    $region21: #{res_block.5} parent=1 // pred_fallthru
      _
    // Predicated region
    $region22: #{res_block.5} parent=1 // pred_check
      _
    $region23: #{res_block.5} parent=1 // pred_check_branch
      %61 = sbr.rel (0) target = $region25
    $region24: #{res_block.5} parent=1 // pred_region
      %62 = dma.done [#allocation6], 8192
    $region25: #{res_block.5} parent=1 // pred_fallthru
      _
    // Predicated region
    $region26: #{res_block.5} parent=1 // pred_check
      _
    $region27: #{res_block.5} parent=1 // pred_check_branch
      %64 = sbr.rel (0) target = $region29
    $region28: #{res_block.5} parent=1 // pred_region
      %65 = dma.done [#allocation6], 16
    $region29: #{res_block.5} parent=1 // pred_fallthru
      _
    // Predicated region
    $region30: #{res_block.5} parent=1 // pred_check
      _
    $region31: #{res_block.5} parent=1 // pred_check_branch
      %67 = sbr.rel (0) target = $region33
    $region32: #{res_block.5} parent=1 // pred_region
      %68 = dma.done [#allocation9], 16
    $region33: #{res_block.5} parent=1 // pred_fallthru
      _
    %v69 = vld [vmem:[#allocation5] sm:$0xff]
    %v70 = vld [vmem:[#allocation5 + $0x8] sm:$0xff]
    %v71 = vld [vmem:[#allocation5 + $0x10] sm:$0xff]
    %v72 = vld [vmem:[#allocation5 + $0x18] sm:$0xff]
    %v73 = vld [vmem:[#allocation5 + $0x20] sm:$0xff]
    %v74 = vld [vmem:[#allocation5 + $0x28] sm:$0xff]
    %v75 = vld [vmem:[#allocation5 + $0x30] sm:$0xff]
    %v76 = vld [vmem:[#allocation5 + $0x38] sm:$0xff]
    %v77 = vld [vmem:[#allocation5 + $0x40] sm:$0xff]
    %v78 = vld [vmem:[#allocation5 + $0x48] sm:$0xff]
    %v79 = vld [vmem:[#allocation5 + $0x50] sm:$0xff]
    %v80 = vld [vmem:[#allocation5 + $0x58] sm:$0xff]
    %v81 = vld [vmem:[#allocation5 + $0x60] sm:$0xff]
    %v82 = vld [vmem:[#allocation5 + $0x68] sm:$0xff]
    %v83 = vld [vmem:[#allocation5 + $0x70] sm:$0xff]
    %v84 = vld [vmem:[#allocation5 + $0x78] sm:$0xff]
    %v85 = vld [vmem:[#allocation5 + $0x80] sm:$0xff]
    %v86 = vld [vmem:[#allocation5 + $0x88] sm:$0xff]
    %v87 = vld [vmem:[#allocation5 + $0x90] sm:$0xff]
    %v88 = vld [vmem:[#allocation5 + $0x98] sm:$0xff]
    %v89 = vld [vmem:[#allocation5 + $0xa0] sm:$0xff]
    %v90 = vld [vmem:[#allocation5 + $0xa8] sm:$0xff]
    %v91 = vld [vmem:[#allocation5 + $0xb0] sm:$0xff]
    %v92 = vld [vmem:[#allocation5 + $0xb8] sm:$0xff]
    %v93 = vld [vmem:[#allocation5 + $0xc0] sm:$0xff]
    %v94 = vld [vmem:[#allocation5 + $0xc8] sm:$0xff]
    %v95 = vld [vmem:[#allocation5 + $0xd0] sm:$0xff]
    %v96 = vld [vmem:[#allocation5 + $0xd8] sm:$0xff]
    %v97 = vld [vmem:[#allocation5 + $0xe0] sm:$0xff]
    %v98 = vld [vmem:[#allocation5 + $0xe8] sm:$0xff]
    %v99 = vld [vmem:[#allocation5 + $0xf0] sm:$0xff]
    %v100 = vld [vmem:[#allocation5 + $0xf8] sm:$0xff]
    %v101 = vld [vmem:[#allocation5 + $0x100] sm:$0xff]
    %v102 = vld [vmem:[#allocation5 + $0x108] sm:$0xff]
    %v103 = vld [vmem:[#allocation5 + $0x110] sm:$0xff]
    %v104 = vld [vmem:[#allocation5 + $0x118] sm:$0xff]
    %v105 = vld [vmem:[#allocation5 + $0x120] sm:$0xff]
    %v106 = vld [vmem:[#allocation5 + $0x128] sm:$0xff]
    %v107 = vld [vmem:[#allocation5 + $0x130] sm:$0xff]
    %v108 = vld [vmem:[#allocation5 + $0x138] sm:$0xff]
    %v109 = vld [vmem:[#allocation5 + $0x140] sm:$0xff]
    %v110 = vld [vmem:[#allocation5 + $0x148] sm:$0xff]
    %v111 = vld [vmem:[#allocation5 + $0x150] sm:$0xff]
    %v112 = vld [vmem:[#allocation5 + $0x158] sm:$0xff]
    %v113 = vld [vmem:[#allocation5 + $0x160] sm:$0xff]
    %v114 = vld [vmem:[#allocation5 + $0x168] sm:$0xff]
    %v115 = vld [vmem:[#allocation5 + $0x170] sm:$0xff]
    %v116 = vld [vmem:[#allocation5 + $0x178] sm:$0xff]
    %v117 = vld [vmem:[#allocation5 + $0x180] sm:$0xff]
    %v118 = vld [vmem:[#allocation5 + $0x188] sm:$0xff]
    %v119 = vld [vmem:[#allocation5 + $0x190] sm:$0xff]
    %v120 = vld [vmem:[#allocation5 + $0x198] sm:$0xff]
    %v121 = vld [vmem:[#allocation5 + $0x1a0] sm:$0xff]
    %v122 = vld [vmem:[#allocation5 + $0x1a8] sm:$0xff]
    %v123 = vld [vmem:[#allocation5 + $0x1b0] sm:$0xff]
    %v124 = vld [vmem:[#allocation5 + $0x1b8] sm:$0xff]
    %v125 = vld [vmem:[#allocation5 + $0x1c0] sm:$0xff]
    %v126 = vld [vmem:[#allocation5 + $0x1c8] sm:$0xff]
    %v127 = vld [vmem:[#allocation5 + $0x1d0] sm:$0xff]
    %v128 = vld [vmem:[#allocation5 + $0x1d8] sm:$0xff]
    %v129 = vld [vmem:[#allocation5 + $0x1e0] sm:$0xff]
    %v130 = vld [vmem:[#allocation5 + $0x1e8] sm:$0xff]
    %v131 = vld [vmem:[#allocation5 + $0x1f0] sm:$0xff]
    %v132 = vld [vmem:[#allocation5 + $0x1f8] sm:$0xff]
    %v133 = vld [vmem:[#allocation2] sm:$0xff]
    %v134 = vld [vmem:[#allocation2 + $0x8] sm:$0xff]
    %v135 = vld [vmem:[#allocation2 + $0x10] sm:$0xff]
    %v136 = vld [vmem:[#allocation2 + $0x18] sm:$0xff]
    %v137 = vld [vmem:[#allocation2 + $0x20] sm:$0xff]
    %v138 = vld [vmem:[#allocation2 + $0x28] sm:$0xff]
    %v139 = vld [vmem:[#allocation2 + $0x30] sm:$0xff]
    %v140 = vld [vmem:[#allocation2 + $0x38] sm:$0xff]
    %v141 = vld [vmem:[#allocation2 + $0x40] sm:$0xff]
    %v142 = vld [vmem:[#allocation2 + $0x48] sm:$0xff]
    %v143 = vld [vmem:[#allocation2 + $0x50] sm:$0xff]
    %v144 = vld [vmem:[#allocation2 + $0x58] sm:$0xff]
    %v145 = vld [vmem:[#allocation2 + $0x60] sm:$0xff]
    %v146 = vld [vmem:[#allocation2 + $0x68] sm:$0xff]
    %v147 = vld [vmem:[#allocation2 + $0x70] sm:$0xff]
    %v148 = vld [vmem:[#allocation2 + $0x78] sm:$0xff]
    %v149 = vld [vmem:[#allocation2 + $0x80] sm:$0xff]
    %v150 = vld [vmem:[#allocation2 + $0x88] sm:$0xff]
    %v151 = vld [vmem:[#allocation2 + $0x90] sm:$0xff]
    %v152 = vld [vmem:[#allocation2 + $0x98] sm:$0xff]
    %v153 = vld [vmem:[#allocation2 + $0xa0] sm:$0xff]
    %v154 = vld [vmem:[#allocation2 + $0xa8] sm:$0xff]
    %v155 = vld [vmem:[#allocation2 + $0xb0] sm:$0xff]
    %v156 = vld [vmem:[#allocation2 + $0xb8] sm:$0xff]
    %v157 = vld [vmem:[#allocation2 + $0xc0] sm:$0xff]
    %v158 = vld [vmem:[#allocation2 + $0xc8] sm:$0xff]
    %v159 = vld [vmem:[#allocation2 + $0xd0] sm:$0xff]
    %v160 = vld [vmem:[#allocation2 + $0xd8] sm:$0xff]
    %v161 = vld [vmem:[#allocation2 + $0xe0] sm:$0xff]
    %v162 = vld [vmem:[#allocation2 + $0xe8] sm:$0xff]
    %v163 = vld [vmem:[#allocation2 + $0xf0] sm:$0xff]
    %v164 = vld [vmem:[#allocation2 + $0xf8] sm:$0xff]
    %v165 = vld [vmem:[#allocation2 + $0x100] sm:$0xff]
    %v166 = vld [vmem:[#allocation2 + $0x108] sm:$0xff]
    %v167 = vld [vmem:[#allocation2 + $0x110] sm:$0xff]
    %v168 = vld [vmem:[#allocation2 + $0x118] sm:$0xff]
    %v169 = vld [vmem:[#allocation2 + $0x120] sm:$0xff]
    %v170 = vld [vmem:[#allocation2 + $0x128] sm:$0xff]
    %v171 = vld [vmem:[#allocation2 + $0x130] sm:$0xff]
    %v172 = vld [vmem:[#allocation2 + $0x138] sm:$0xff]
    %v173 = vld [vmem:[#allocation2 + $0x140] sm:$0xff]
    %v174 = vld [vmem:[#allocation2 + $0x148] sm:$0xff]
    %v175 = vld [vmem:[#allocation2 + $0x150] sm:$0xff]
    %v176 = vld [vmem:[#allocation2 + $0x158] sm:$0xff]
    %v177 = vld [vmem:[#allocation2 + $0x160] sm:$0xff]
    %v178 = vld [vmem:[#allocation2 + $0x168] sm:$0xff]
    %v179 = vld [vmem:[#allocation2 + $0x170] sm:$0xff]
    %v180 = vld [vmem:[#allocation2 + $0x178] sm:$0xff]
    %v181 = vld [vmem:[#allocation2 + $0x180] sm:$0xff]
    %v182 = vld [vmem:[#allocation2 + $0x188] sm:$0xff]
    %v183 = vld [vmem:[#allocation2 + $0x190] sm:$0xff]
    %v184 = vld [vmem:[#allocation2 + $0x198] sm:$0xff]
    %v185 = vld [vmem:[#allocation2 + $0x1a0] sm:$0xff]
    %v186 = vld [vmem:[#allocation2 + $0x1a8] sm:$0xff]
    %v187 = vld [vmem:[#allocation2 + $0x1b0] sm:$0xff]
    %v188 = vld [vmem:[#allocation2 + $0x1b8] sm:$0xff]
    %v189 = vld [vmem:[#allocation2 + $0x1c0] sm:$0xff]
    %v190 = vld [vmem:[#allocation2 + $0x1c8] sm:$0xff]
    %v191 = vld [vmem:[#allocation2 + $0x1d0] sm:$0xff]
    %v192 = vld [vmem:[#allocation2 + $0x1d8] sm:$0xff]
    %v193 = vld [vmem:[#allocation2 + $0x1e0] sm:$0xff]
    %v194 = vld [vmem:[#allocation2 + $0x1e8] sm:$0xff]
    %v195 = vld [vmem:[#allocation2 + $0x1f0] sm:$0xff]
    %v196 = vld [vmem:[#allocation2 + $0x1f8] sm:$0xff]
    %v197 = vld [vmem:[#allocation7] sm:$0x1]
    %v199 = vlaneseq
    %v200 = vshrl.u32 %v199, 7
    %v201 = vsub.s32 0, %v200
    %v202 = vrot.slane %v197, %v201
    %v204 = vmul.f32 %v133, %v202
    %v205 = vmul.f32 %v134, %v202
    %v206 = vmul.f32 %v135, %v202
    %v207 = vmul.f32 %v136, %v202
    %v208 = vmul.f32 %v137, %v202
    %v209 = vmul.f32 %v138, %v202
    %v210 = vmul.f32 %v139, %v202
    %v211 = vmul.f32 %v140, %v202
    %v212 = vmul.f32 %v141, %v202
    %v213 = vmul.f32 %v142, %v202
    %v214 = vmul.f32 %v143, %v202
    %v215 = vmul.f32 %v144, %v202
    %v216 = vmul.f32 %v145, %v202
    %v217 = vmul.f32 %v146, %v202
    %v218 = vmul.f32 %v147, %v202
    %v219 = vmul.f32 %v148, %v202
    %v220 = vmul.f32 %v149, %v202
    %v221 = vmul.f32 %v150, %v202
    %v222 = vmul.f32 %v151, %v202
    %v223 = vmul.f32 %v152, %v202
    %v224 = vmul.f32 %v153, %v202
    %v225 = vmul.f32 %v154, %v202
    %v226 = vmul.f32 %v155, %v202
    %v227 = vmul.f32 %v156, %v202
    %v228 = vmul.f32 %v157, %v202
    %v229 = vmul.f32 %v158, %v202
    %v230 = vmul.f32 %v159, %v202
    %v231 = vmul.f32 %v160, %v202
    %v232 = vmul.f32 %v161, %v202
    %v233 = vmul.f32 %v162, %v202
    %v234 = vmul.f32 %v163, %v202
    %v235 = vmul.f32 %v164, %v202
    %v236 = vmul.f32 %v165, %v202
    %v237 = vmul.f32 %v166, %v202
    %v238 = vmul.f32 %v167, %v202
    %v239 = vmul.f32 %v168, %v202
    %v240 = vmul.f32 %v169, %v202
    %v241 = vmul.f32 %v170, %v202
    %v242 = vmul.f32 %v171, %v202
    %v243 = vmul.f32 %v172, %v202
    %v244 = vmul.f32 %v173, %v202
    %v245 = vmul.f32 %v174, %v202
    %v246 = vmul.f32 %v175, %v202
    %v247 = vmul.f32 %v176, %v202
    %v248 = vmul.f32 %v177, %v202
    %v249 = vmul.f32 %v178, %v202
    %v250 = vmul.f32 %v179, %v202
    %v251 = vmul.f32 %v180, %v202
    %v252 = vmul.f32 %v181, %v202
    %v253 = vmul.f32 %v182, %v202
    %v254 = vmul.f32 %v183, %v202
    %v255 = vmul.f32 %v184, %v202
    %v256 = vmul.f32 %v185, %v202
    %v257 = vmul.f32 %v186, %v202
    %v258 = vmul.f32 %v187, %v202
    %v259 = vmul.f32 %v188, %v202
    %v260 = vmul.f32 %v189, %v202
    %v261 = vmul.f32 %v190, %v202
    %v262 = vmul.f32 %v191, %v202
    %v263 = vmul.f32 %v192, %v202
    %v264 = vmul.f32 %v193, %v202
    %v265 = vmul.f32 %v194, %v202
    %v266 = vmul.f32 %v195, %v202
    %v267 = vmul.f32 %v196, %v202
    %v268 = vadd.f32 %v69, %v204
    %v269 = vadd.f32 %v70, %v205
    %v270 = vadd.f32 %v71, %v206
    %v271 = vadd.f32 %v72, %v207
    %v272 = vadd.f32 %v73, %v208
    %v273 = vadd.f32 %v74, %v209
    %v274 = vadd.f32 %v75, %v210
    %v275 = vadd.f32 %v76, %v211
    %v276 = vadd.f32 %v77, %v212
    %v277 = vadd.f32 %v78, %v213
    %v278 = vadd.f32 %v79, %v214
    %v279 = vadd.f32 %v80, %v215
    %v280 = vadd.f32 %v81, %v216
    %v281 = vadd.f32 %v82, %v217
    %v282 = vadd.f32 %v83, %v218
    %v283 = vadd.f32 %v84, %v219
    %v284 = vadd.f32 %v85, %v220
    %v285 = vadd.f32 %v86, %v221
    %v286 = vadd.f32 %v87, %v222
    %v287 = vadd.f32 %v88, %v223
    %v288 = vadd.f32 %v89, %v224
    %v289 = vadd.f32 %v90, %v225
    %v290 = vadd.f32 %v91, %v226
    %v291 = vadd.f32 %v92, %v227
    %v292 = vadd.f32 %v93, %v228
    %v293 = vadd.f32 %v94, %v229
    %v294 = vadd.f32 %v95, %v230
    %v295 = vadd.f32 %v96, %v231
    %v296 = vadd.f32 %v97, %v232
    %v297 = vadd.f32 %v98, %v233
    %v298 = vadd.f32 %v99, %v234
    %v299 = vadd.f32 %v100, %v235
    %v300 = vadd.f32 %v101, %v236
    %v301 = vadd.f32 %v102, %v237
    %v302 = vadd.f32 %v103, %v238
    %v303 = vadd.f32 %v104, %v239
    %v304 = vadd.f32 %v105, %v240
    %v305 = vadd.f32 %v106, %v241
    %v306 = vadd.f32 %v107, %v242
    %v307 = vadd.f32 %v108, %v243
    %v308 = vadd.f32 %v109, %v244
    %v309 = vadd.f32 %v110, %v245
    %v310 = vadd.f32 %v111, %v246
    %v311 = vadd.f32 %v112, %v247
    %v312 = vadd.f32 %v113, %v248
    %v313 = vadd.f32 %v114, %v249
    %v314 = vadd.f32 %v115, %v250
    %v315 = vadd.f32 %v116, %v251
    %v316 = vadd.f32 %v117, %v252
    %v317 = vadd.f32 %v118, %v253
    %v318 = vadd.f32 %v119, %v254
    %v319 = vadd.f32 %v120, %v255
    %v320 = vadd.f32 %v121, %v256
    %v321 = vadd.f32 %v122, %v257
    %v322 = vadd.f32 %v123, %v258
    %v323 = vadd.f32 %v124, %v259
    %v324 = vadd.f32 %v125, %v260
    %v325 = vadd.f32 %v126, %v261
    %v326 = vadd.f32 %v127, %v262
    %v327 = vadd.f32 %v128, %v263
    %v328 = vadd.f32 %v129, %v264
    %v329 = vadd.f32 %v130, %v265
    %v330 = vadd.f32 %v131, %v266
    %v331 = vadd.f32 %v132, %v267
    %v332 = vld [vmem:[#allocation8] sm:$0x1]
    %v334 = vlaneseq
    %v335 = vshrl.u32 %v334, 7
    %v336 = vsub.s32 0, %v335
    %v337 = vrot.slane %v332, %v336
    %v339 = vadd.f32 %v268, %v337
    %v340 = vadd.f32 %v269, %v337
    %v341 = vadd.f32 %v270, %v337
    %v342 = vadd.f32 %v271, %v337
    %v343 = vadd.f32 %v272, %v337
    %v344 = vadd.f32 %v273, %v337
    %v345 = vadd.f32 %v274, %v337
    %v346 = vadd.f32 %v275, %v337
    %v347 = vadd.f32 %v276, %v337
    %v348 = vadd.f32 %v277, %v337
    %v349 = vadd.f32 %v278, %v337
    %v350 = vadd.f32 %v279, %v337
    %v351 = vadd.f32 %v280, %v337
    %v352 = vadd.f32 %v281, %v337
    %v353 = vadd.f32 %v282, %v337
    %v354 = vadd.f32 %v283, %v337
    %v355 = vadd.f32 %v284, %v337
    %v356 = vadd.f32 %v285, %v337
    %v357 = vadd.f32 %v286, %v337
    %v358 = vadd.f32 %v287, %v337
    %v359 = vadd.f32 %v288, %v337
    %v360 = vadd.f32 %v289, %v337
    %v361 = vadd.f32 %v290, %v337
    %v362 = vadd.f32 %v291, %v337
    %v363 = vadd.f32 %v292, %v337
    %v364 = vadd.f32 %v293, %v337
    %v365 = vadd.f32 %v294, %v337
    %v366 = vadd.f32 %v295, %v337
    %v367 = vadd.f32 %v296, %v337
    %v368 = vadd.f32 %v297, %v337
    %v369 = vadd.f32 %v298, %v337
    %v370 = vadd.f32 %v299, %v337
    %v371 = vadd.f32 %v300, %v337
    %v372 = vadd.f32 %v301, %v337
    %v373 = vadd.f32 %v302, %v337
    %v374 = vadd.f32 %v303, %v337
    %v375 = vadd.f32 %v304, %v337
    %v376 = vadd.f32 %v305, %v337
    %v377 = vadd.f32 %v306, %v337
    %v378 = vadd.f32 %v307, %v337
    %v379 = vadd.f32 %v308, %v337
    %v380 = vadd.f32 %v309, %v337
    %v381 = vadd.f32 %v310, %v337
    %v382 = vadd.f32 %v311, %v337
    %v383 = vadd.f32 %v312, %v337
    %v384 = vadd.f32 %v313, %v337
    %v385 = vadd.f32 %v314, %v337
    %v386 = vadd.f32 %v315, %v337
    %v387 = vadd.f32 %v316, %v337
    %v388 = vadd.f32 %v317, %v337
    %v389 = vadd.f32 %v318, %v337
    %v390 = vadd.f32 %v319, %v337
    %v391 = vadd.f32 %v320, %v337
    %v392 = vadd.f32 %v321, %v337
    %v393 = vadd.f32 %v322, %v337
    %v394 = vadd.f32 %v323, %v337
    %v395 = vadd.f32 %v324, %v337
    %v396 = vadd.f32 %v325, %v337
    %v397 = vadd.f32 %v326, %v337
    %v398 = vadd.f32 %v327, %v337
    %v399 = vadd.f32 %v328, %v337
    %v400 = vadd.f32 %v329, %v337
    %v401 = vadd.f32 %v330, %v337
    %v402 = vadd.f32 %v331, %v337
    %v403 = vmax.f32 %v339, 0.0
    %v404 = vmax.f32 %v340, 0.0
    %v405 = vmax.f32 %v341, 0.0
    %v406 = vmax.f32 %v342, 0.0
    %v407 = vmax.f32 %v343, 0.0
    %v408 = vmax.f32 %v344, 0.0
    %v409 = vmax.f32 %v345, 0.0
    %v410 = vmax.f32 %v346, 0.0
    %v411 = vmax.f32 %v347, 0.0
    %v412 = vmax.f32 %v348, 0.0
    %v413 = vmax.f32 %v349, 0.0
    %v414 = vmax.f32 %v350, 0.0
    %v415 = vmax.f32 %v351, 0.0
    %v416 = vmax.f32 %v352, 0.0
    %v417 = vmax.f32 %v353, 0.0
    %v418 = vmax.f32 %v354, 0.0
    %v419 = vmax.f32 %v355, 0.0
    %v420 = vmax.f32 %v356, 0.0
    %v421 = vmax.f32 %v357, 0.0
    %v422 = vmax.f32 %v358, 0.0
    %v423 = vmax.f32 %v359, 0.0
    %v424 = vmax.f32 %v360, 0.0
    %v425 = vmax.f32 %v361, 0.0
    %v426 = vmax.f32 %v362, 0.0
    %v427 = vmax.f32 %v363, 0.0
    %v428 = vmax.f32 %v364, 0.0
    %v429 = vmax.f32 %v365, 0.0
    %v430 = vmax.f32 %v366, 0.0
    %v431 = vmax.f32 %v367, 0.0
    %v432 = vmax.f32 %v368, 0.0
    %v433 = vmax.f32 %v369, 0.0
    %v434 = vmax.f32 %v370, 0.0
    %v435 = vmax.f32 %v371, 0.0
    %v436 = vmax.f32 %v372, 0.0
    %v437 = vmax.f32 %v373, 0.0
    %v438 = vmax.f32 %v374, 0.0
    %v439 = vmax.f32 %v375, 0.0
    %v440 = vmax.f32 %v376, 0.0
    %v441 = vmax.f32 %v377, 0.0
    %v442 = vmax.f32 %v378, 0.0
    %v443 = vmax.f32 %v379, 0.0
    %v444 = vmax.f32 %v380, 0.0
    %v445 = vmax.f32 %v381, 0.0
    %v446 = vmax.f32 %v382, 0.0
    %v447 = vmax.f32 %v383, 0.0
    %v448 = vmax.f32 %v384, 0.0
    %v449 = vmax.f32 %v385, 0.0
    %v450 = vmax.f32 %v386, 0.0
    %v451 = vmax.f32 %v387, 0.0
    %v452 = vmax.f32 %v388, 0.0
    %v453 = vmax.f32 %v389, 0.0
    %v454 = vmax.f32 %v390, 0.0
    %v455 = vmax.f32 %v391, 0.0
    %v456 = vmax.f32 %v392, 0.0
    %v457 = vmax.f32 %v393, 0.0
    %v458 = vmax.f32 %v394, 0.0
    %v459 = vmax.f32 %v395, 0.0
    %v460 = vmax.f32 %v396, 0.0
    %v461 = vmax.f32 %v397, 0.0
    %v462 = vmax.f32 %v398, 0.0
    %v463 = vmax.f32 %v399, 0.0
    %v464 = vmax.f32 %v400, 0.0
    %v465 = vmax.f32 %v401, 0.0
    %v466 = vmax.f32 %v402, 0.0
    %467 = vst [vmem:[#allocation10] sm:$0xff] %v403
    %468 = vst [vmem:[#allocation10 + $0x8] sm:$0xff] %v404
    %469 = vst [vmem:[#allocation10 + $0x10] sm:$0xff] %v405
    %470 = vst [vmem:[#allocation10 + $0x18] sm:$0xff] %v406
    %471 = vst [vmem:[#allocation10 + $0x20] sm:$0xff] %v407
    %472 = vst [vmem:[#allocation10 + $0x28] sm:$0xff] %v408
    %473 = vst [vmem:[#allocation10 + $0x30] sm:$0xff] %v409
    %474 = vst [vmem:[#allocation10 + $0x38] sm:$0xff] %v410
    %475 = vst [vmem:[#allocation10 + $0x40] sm:$0xff] %v411
    %476 = vst [vmem:[#allocation10 + $0x48] sm:$0xff] %v412
    %477 = vst [vmem:[#allocation10 + $0x50] sm:$0xff] %v413
    %478 = vst [vmem:[#allocation10 + $0x58] sm:$0xff] %v414
    %479 = vst [vmem:[#allocation10 + $0x60] sm:$0xff] %v415
    %480 = vst [vmem:[#allocation10 + $0x68] sm:$0xff] %v416
    %481 = vst [vmem:[#allocation10 + $0x70] sm:$0xff] %v417
    %482 = vst [vmem:[#allocation10 + $0x78] sm:$0xff] %v418
    %483 = vst [vmem:[#allocation10 + $0x80] sm:$0xff] %v419
    %484 = vst [vmem:[#allocation10 + $0x88] sm:$0xff] %v420
    %485 = vst [vmem:[#allocation10 + $0x90] sm:$0xff] %v421
    %486 = vst [vmem:[#allocation10 + $0x98] sm:$0xff] %v422
    %487 = vst [vmem:[#allocation10 + $0xa0] sm:$0xff] %v423
    %488 = vst [vmem:[#allocation10 + $0xa8] sm:$0xff] %v424
    %489 = vst [vmem:[#allocation10 + $0xb0] sm:$0xff] %v425
    %490 = vst [vmem:[#allocation10 + $0xb8] sm:$0xff] %v426
    %491 = vst [vmem:[#allocation10 + $0xc0] sm:$0xff] %v427
    %492 = vst [vmem:[#allocation10 + $0xc8] sm:$0xff] %v428
    %493 = vst [vmem:[#allocation10 + $0xd0] sm:$0xff] %v429
    %494 = vst [vmem:[#allocation10 + $0xd8] sm:$0xff] %v430
    %495 = vst [vmem:[#allocation10 + $0xe0] sm:$0xff] %v431
    %496 = vst [vmem:[#allocation10 + $0xe8] sm:$0xff] %v432
    %497 = vst [vmem:[#allocation10 + $0xf0] sm:$0xff] %v433
    %498 = vst [vmem:[#allocation10 + $0xf8] sm:$0xff] %v434
    %499 = vst [vmem:[#allocation10 + $0x100] sm:$0xff] %v435
    %500 = vst [vmem:[#allocation10 + $0x108] sm:$0xff] %v436
    %501 = vst [vmem:[#allocation10 + $0x110] sm:$0xff] %v437
    %502 = vst [vmem:[#allocation10 + $0x118] sm:$0xff] %v438
    %503 = vst [vmem:[#allocation10 + $0x120] sm:$0xff] %v439
    %504 = vst [vmem:[#allocation10 + $0x128] sm:$0xff] %v440
    %505 = vst [vmem:[#allocation10 + $0x130] sm:$0xff] %v441
    %506 = vst [vmem:[#allocation10 + $0x138] sm:$0xff] %v442
    %507 = vst [vmem:[#allocation10 + $0x140] sm:$0xff] %v443
    %508 = vst [vmem:[#allocation10 + $0x148] sm:$0xff] %v444
    %509 = vst [vmem:[#allocation10 + $0x150] sm:$0xff] %v445
    %510 = vst [vmem:[#allocation10 + $0x158] sm:$0xff] %v446
    %511 = vst [vmem:[#allocation10 + $0x160] sm:$0xff] %v447
    %512 = vst [vmem:[#allocation10 + $0x168] sm:$0xff] %v448
    %513 = vst [vmem:[#allocation10 + $0x170] sm:$0xff] %v449
    %514 = vst [vmem:[#allocation10 + $0x178] sm:$0xff] %v450
    %515 = vst [vmem:[#allocation10 + $0x180] sm:$0xff] %v451
    %516 = vst [vmem:[#allocation10 + $0x188] sm:$0xff] %v452
    %517 = vst [vmem:[#allocation10 + $0x190] sm:$0xff] %v453
    %518 = vst [vmem:[#allocation10 + $0x198] sm:$0xff] %v454
    %519 = vst [vmem:[#allocation10 + $0x1a0] sm:$0xff] %v455
    %520 = vst [vmem:[#allocation10 + $0x1a8] sm:$0xff] %v456
    %521 = vst [vmem:[#allocation10 + $0x1b0] sm:$0xff] %v457
    %522 = vst [vmem:[#allocation10 + $0x1b8] sm:$0xff] %v458
    %523 = vst [vmem:[#allocation10 + $0x1c0] sm:$0xff] %v459
    %524 = vst [vmem:[#allocation10 + $0x1c8] sm:$0xff] %v460
    %525 = vst [vmem:[#allocation10 + $0x1d0] sm:$0xff] %v461
    %526 = vst [vmem:[#allocation10 + $0x1d8] sm:$0xff] %v462
    %527 = vst [vmem:[#allocation10 + $0x1e0] sm:$0xff] %v463
    %528 = vst [vmem:[#allocation10 + $0x1e8] sm:$0xff] %v464
    %529 = vst [vmem:[#allocation10 + $0x1f0] sm:$0xff] %v465
    %530 = vst [vmem:[#allocation10 + $0x1f8] sm:$0xff] %v466
    // Predicated region
    $region34: #{res_block.5} parent=1 // pred_check
      _
    $region35: #{res_block.5} parent=1 // pred_check_branch
      %532 = sbr.rel (0) target = $region37
    $region36: #{res_block.5} parent=1 // pred_region
      %s534 = ssub.s32 8192, 8192
      %535 = vsyncadd [#allocation4], %s534
      %s536 = sshll.u32 [#allocation10], 4
      %s537 = int_to_ptr.vmem [resolvable:$true] %s536
      %542 = dma.vmem_to_hbm [thread:$0]  %s537, 8192, %s4, [#allocation4], 128, 128, 8
    $region37: #{res_block.5} parent=1 // pred_fallthru
      _
    // Predicated region
    $region38: #{res_block.5} parent=1 // pred_check
      _
    $region39: #{res_block.5} parent=1 // pred_check_branch
      %544 = sbr.rel (0) target = $region41
    $region40: #{res_block.5} parent=1 // pred_region
      %545 = dma.done [#allocation4], 8192
    $region41: #{res_block.5} parent=1 // pred_fallthru
      _
    %546 = vsyncpa [#allocation3], 1
    %547 = vsyncpa [#allocation6], 1
    %548 = vsyncpa [#allocation9], 1
    %549 = vsyncpa [#allocation4], 1

// kernel: res_block.4
$region0: #{res_block.4}
  #allocation0 [shape = 'u32[]', space=smem, size = 0x4, offset = 0x4, fixed_abs, tag = 'smem constant byte address 0x4 - core index']
  #allocation1 [shape = 'u32[144,128]{1,0:T(1,128)}', space=vmem, size = 0x12000, scoped, tag = 'internal scratch']
  %s0 = inlined_call_operand.hbm [shape: f32[512,128], index: 0, kind: input, shape index: {}]
  %s1 = inlined_call_operand.hbm [shape: f32[1,128], index: 1, kind: input, shape index: {}]
  %s2 = inlined_call_operand.hbm [shape: f32[1,128], index: 2, kind: input, shape index: {}]
  %s3 = inlined_call_operand.hbm [shape: f32[128,128], index: 3, kind: input, shape index: {}]
  %s4 = inlined_call_operand.hbm [shape: f32[512,128], index: 4, kind: output, shape index: {0}]
  %s5 = inlined_call_operand.hbm [shape: f32[1,2,128], index: 5, kind: output, shape index: {1}]
  %6 = xla_tuple %s4, %s5
  %s7 = sld [smem:[#allocation0]]
  $region50: #{res_block.4} parent=0
    _
  %s9 = ssub.s32 1, %s7
  %s10 = scalar_select 0, %s9, %s7
  $region1: #{res_block.4} parent=0
    #allocation2 [shape = 'u8[262144]{0}', space=vmem, size = 0x40000, scoped, tag = 'input window, operand 0, single buffered']
    #allocation3 [shape = 's32[1]{0}', space=sflag, size = 0x4, scoped, tag = 'scoped memory for res_block.4']
    #allocation4 [shape = 's32[1]{0}', space=sflag, size = 0x4, scoped, tag = 'scoped memory for res_block.4']
    #allocation5 [shape = 'u8[512]{0}', space=vmem, size = 0x400, scoped, tag = 'input window, operand 1, single buffered']
    #allocation6 [shape = 's32[1]{0}', space=sflag, size = 0x4, scoped, tag = 'scoped memory for res_block.4']
    #allocation7 [shape = 'u8[512]{0}', space=vmem, size = 0x400, scoped, tag = 'input window, operand 2, single buffered']
    #allocation8 [shape = 'u8[65536]{0}', space=vmem, size = 0x10000, scoped, tag = 'input window, operand 3, single buffered']
    #allocation9 [shape = 's32[1]{0}', space=sflag, size = 0x4, scoped, tag = 'scoped memory for res_block.4']
    #allocation10 [shape = 'u8[262144]{0}', space=vmem, size = 0x40000, scoped, tag = 'output window, operand 0, single buffered']
    #allocation11 [shape = 'u8[1024]{0}', space=vmem, size = 0x400, scoped, tag = 'output window, operand 1, single buffered']
    #allocation12 [shape = 's32[1]{0}', space=sflag, size = 0x4, scoped, tag = 'scoped memory for res_block.4']
    %11 = vsyncpa [#allocation3], 0
    %12 = vsyncpa [#allocation6], 0
    %13 = vsyncpa [#allocation9], 0
    %14 = vsyncpa [#allocation4], 0
    %15 = vsyncpa [#allocation12], 0
    // Predicated region
    $region2: #{res_block.4} parent=1 // pred_check
      _
    $region3: #{res_block.4} parent=1 // pred_check_branch
      %17 = sbr.rel (0) target = $region5
    $region4: #{res_block.4} parent=1 // pred_region
      %s19 = ssub.s32 8192, 8192
      %20 = vsyncadd [#allocation3], %s19
      %s21 = sshll.u32 [#allocation2], 4
      %s22 = int_to_ptr.vmem [resolvable:$true] %s21
      %27 = dma.hbm_to_vmem [thread:$0]  %s0, 8192, %s22, [#allocation3], 128, 128, 8
    $region5: #{res_block.4} parent=1 // pred_fallthru
      _
    // Predicated region
    $region6: #{res_block.4} parent=1 // pred_check
      _
    $region7: #{res_block.4} parent=1 // pred_check_branch
      %29 = sbr.rel (0) target = $region9
    $region8: #{res_block.4} parent=1 // pred_region
      %s31 = ssub.s32 16, 16
      %32 = vsyncadd [#allocation6], %s31
      %s34 = sshll.u32 [#allocation5], 4
      %s35 = int_to_ptr.vmem [resolvable:$true] %s34
      %37 = dma.hbm_to_vmem [thread:$0]  %s1, 16, %s35, [#allocation6]
    $region9: #{res_block.4} parent=1 // pred_fallthru
      _
    // Predicated region
    $region10: #{res_block.4} parent=1 // pred_check
      _
    $region11: #{res_block.4} parent=1 // pred_check_branch
      %39 = sbr.rel (0) target = $region13
    $region12: #{res_block.4} parent=1 // pred_region
      %s41 = ssub.s32 16, 16
      %42 = vsyncadd [#allocation6], %s41
      %s44 = sshll.u32 [#allocation7], 4
      %s45 = int_to_ptr.vmem [resolvable:$true] %s44
      %47 = dma.hbm_to_vmem [thread:$0]  %s2, 16, %s45, [#allocation6]
    $region13: #{res_block.4} parent=1 // pred_fallthru
      _
    // Predicated region
    $region14: #{res_block.4} parent=1 // pred_check
      _
    $region15: #{res_block.4} parent=1 // pred_check_branch
      %49 = sbr.rel (0) target = $region17
    $region16: #{res_block.4} parent=1 // pred_region
      %s51 = ssub.s32 2048, 2048
      %52 = vsyncadd [#allocation9], %s51
      %s53 = sshll.u32 [#allocation8], 4
      %s54 = int_to_ptr.vmem [resolvable:$true] %s53
      %59 = dma.hbm_to_vmem [thread:$0]  %s3, 2048, %s54, [#allocation9], 128, 128, 8
    $region17: #{res_block.4} parent=1 // pred_fallthru
      _
    // Predicated region
    $region18: #{res_block.4} parent=1 // pred_check
      _
    $region19: #{res_block.4} parent=1 // pred_check_branch
      %61 = sbr.rel (0) target = $region21
    $region20: #{res_block.4} parent=1 // pred_region
      %62 = dma.done [#allocation3], 8192
    $region21: #{res_block.4} parent=1 // pred_fallthru
      _
    // Predicated region
    $region22: #{res_block.4} parent=1 // pred_check
      _
    $region23: #{res_block.4} parent=1 // pred_check_branch
      %64 = sbr.rel (0) target = $region25
    $region24: #{res_block.4} parent=1 // pred_region
      %65 = dma.done [#allocation6], 16
    $region25: #{res_block.4} parent=1 // pred_fallthru
      _
    // Predicated region
    $region26: #{res_block.4} parent=1 // pred_check
      _
    $region27: #{res_block.4} parent=1 // pred_check_branch
      %67 = sbr.rel (0) target = $region29
    $region28: #{res_block.4} parent=1 // pred_region
      %68 = dma.done [#allocation6], 16
    $region29: #{res_block.4} parent=1 // pred_fallthru
      _
    // Predicated region
    $region30: #{res_block.4} parent=1 // pred_check
      _
    $region31: #{res_block.4} parent=1 // pred_check_branch
      %70 = sbr.rel (0) target = $region33
    $region32: #{res_block.4} parent=1 // pred_region
      %71 = dma.done [#allocation9], 2048
    $region33: #{res_block.4} parent=1 // pred_fallthru
      _
    %v72 = vld [vmem:[#allocation2] sm:$0xff]
    %v73 = vld [vmem:[#allocation2 + $0x8] sm:$0xff]
    %v74 = vld [vmem:[#allocation2 + $0x10] sm:$0xff]
    %v75 = vld [vmem:[#allocation2 + $0x18] sm:$0xff]
    %v76 = vld [vmem:[#allocation2 + $0x20] sm:$0xff]
    %v77 = vld [vmem:[#allocation2 + $0x28] sm:$0xff]
    %v78 = vld [vmem:[#allocation2 + $0x30] sm:$0xff]
    %v79 = vld [vmem:[#allocation2 + $0x38] sm:$0xff]
    %v80 = vld [vmem:[#allocation2 + $0x40] sm:$0xff]
    %v81 = vld [vmem:[#allocation2 + $0x48] sm:$0xff]
    %v82 = vld [vmem:[#allocation2 + $0x50] sm:$0xff]
    %v83 = vld [vmem:[#allocation2 + $0x58] sm:$0xff]
    %v84 = vld [vmem:[#allocation2 + $0x60] sm:$0xff]
    %v85 = vld [vmem:[#allocation2 + $0x68] sm:$0xff]
    %v86 = vld [vmem:[#allocation2 + $0x70] sm:$0xff]
    %v87 = vld [vmem:[#allocation2 + $0x78] sm:$0xff]
    %v88 = vld [vmem:[#allocation2 + $0x80] sm:$0xff]
    %v89 = vld [vmem:[#allocation2 + $0x88] sm:$0xff]
    %v90 = vld [vmem:[#allocation2 + $0x90] sm:$0xff]
    %v91 = vld [vmem:[#allocation2 + $0x98] sm:$0xff]
    %v92 = vld [vmem:[#allocation2 + $0xa0] sm:$0xff]
    %v93 = vld [vmem:[#allocation2 + $0xa8] sm:$0xff]
    %v94 = vld [vmem:[#allocation2 + $0xb0] sm:$0xff]
    %v95 = vld [vmem:[#allocation2 + $0xb8] sm:$0xff]
    %v96 = vld [vmem:[#allocation2 + $0xc0] sm:$0xff]
    %v97 = vld [vmem:[#allocation2 + $0xc8] sm:$0xff]
    %v98 = vld [vmem:[#allocation2 + $0xd0] sm:$0xff]
    %v99 = vld [vmem:[#allocation2 + $0xd8] sm:$0xff]
    %v100 = vld [vmem:[#allocation2 + $0xe0] sm:$0xff]
    %v101 = vld [vmem:[#allocation2 + $0xe8] sm:$0xff]
    %v102 = vld [vmem:[#allocation2 + $0xf0] sm:$0xff]
    %v103 = vld [vmem:[#allocation2 + $0xf8] sm:$0xff]
    %v104 = vld [vmem:[#allocation2 + $0x100] sm:$0xff]
    %v105 = vld [vmem:[#allocation2 + $0x108] sm:$0xff]
    %v106 = vld [vmem:[#allocation2 + $0x110] sm:$0xff]
    %v107 = vld [vmem:[#allocation2 + $0x118] sm:$0xff]
    %v108 = vld [vmem:[#allocation2 + $0x120] sm:$0xff]
    %v109 = vld [vmem:[#allocation2 + $0x128] sm:$0xff]
    %v110 = vld [vmem:[#allocation2 + $0x130] sm:$0xff]
    %v111 = vld [vmem:[#allocation2 + $0x138] sm:$0xff]
    %v112 = vld [vmem:[#allocation2 + $0x140] sm:$0xff]
    %v113 = vld [vmem:[#allocation2 + $0x148] sm:$0xff]
    %v114 = vld [vmem:[#allocation2 + $0x150] sm:$0xff]
    %v115 = vld [vmem:[#allocation2 + $0x158] sm:$0xff]
    %v116 = vld [vmem:[#allocation2 + $0x160] sm:$0xff]
    %v117 = vld [vmem:[#allocation2 + $0x168] sm:$0xff]
    %v118 = vld [vmem:[#allocation2 + $0x170] sm:$0xff]
    %v119 = vld [vmem:[#allocation2 + $0x178] sm:$0xff]
    %v120 = vld [vmem:[#allocation2 + $0x180] sm:$0xff]
    %v121 = vld [vmem:[#allocation2 + $0x188] sm:$0xff]
    %v122 = vld [vmem:[#allocation2 + $0x190] sm:$0xff]
    %v123 = vld [vmem:[#allocation2 + $0x198] sm:$0xff]
    %v124 = vld [vmem:[#allocation2 + $0x1a0] sm:$0xff]
    %v125 = vld [vmem:[#allocation2 + $0x1a8] sm:$0xff]
    %v126 = vld [vmem:[#allocation2 + $0x1b0] sm:$0xff]
    %v127 = vld [vmem:[#allocation2 + $0x1b8] sm:$0xff]
    %v128 = vld [vmem:[#allocation2 + $0x1c0] sm:$0xff]
    %v129 = vld [vmem:[#allocation2 + $0x1c8] sm:$0xff]
    %v130 = vld [vmem:[#allocation2 + $0x1d0] sm:$0xff]
    %v131 = vld [vmem:[#allocation2 + $0x1d8] sm:$0xff]
    %v132 = vld [vmem:[#allocation2 + $0x1e0] sm:$0xff]
    %v133 = vld [vmem:[#allocation2 + $0x1e8] sm:$0xff]
    %v134 = vld [vmem:[#allocation2 + $0x1f0] sm:$0xff]
    %v135 = vld [vmem:[#allocation2 + $0x1f8] sm:$0xff]
    %v136 = vld [vmem:[#allocation5] sm:$0x1]
    %v138 = vlaneseq
    %v139 = vshrl.u32 %v138, 7
    %v140 = vsub.s32 0, %v139
    %v141 = vrot.slane %v136, %v140
    %v143 = vmul.f32 %v72, %v141
    %v144 = vmul.f32 %v73, %v141
    %v145 = vmul.f32 %v74, %v141
    %v146 = vmul.f32 %v75, %v141
    %v147 = vmul.f32 %v76, %v141
    %v148 = vmul.f32 %v77, %v141
    %v149 = vmul.f32 %v78, %v141
    %v150 = vmul.f32 %v79, %v141
    %v151 = vmul.f32 %v80, %v141
    %v152 = vmul.f32 %v81, %v141
    %v153 = vmul.f32 %v82, %v141
    %v154 = vmul.f32 %v83, %v141
    %v155 = vmul.f32 %v84, %v141
    %v156 = vmul.f32 %v85, %v141
    %v157 = vmul.f32 %v86, %v141
    %v158 = vmul.f32 %v87, %v141
    %v159 = vmul.f32 %v88, %v141
    %v160 = vmul.f32 %v89, %v141
    %v161 = vmul.f32 %v90, %v141
    %v162 = vmul.f32 %v91, %v141
    %v163 = vmul.f32 %v92, %v141
    %v164 = vmul.f32 %v93, %v141
    %v165 = vmul.f32 %v94, %v141
    %v166 = vmul.f32 %v95, %v141
    %v167 = vmul.f32 %v96, %v141
    %v168 = vmul.f32 %v97, %v141
    %v169 = vmul.f32 %v98, %v141
    %v170 = vmul.f32 %v99, %v141
    %v171 = vmul.f32 %v100, %v141
    %v172 = vmul.f32 %v101, %v141
    %v173 = vmul.f32 %v102, %v141
    %v174 = vmul.f32 %v103, %v141
    %v175 = vmul.f32 %v104, %v141
    %v176 = vmul.f32 %v105, %v141
    %v177 = vmul.f32 %v106, %v141
    %v178 = vmul.f32 %v107, %v141
    %v179 = vmul.f32 %v108, %v141
    %v180 = vmul.f32 %v109, %v141
    %v181 = vmul.f32 %v110, %v141
    %v182 = vmul.f32 %v111, %v141
    %v183 = vmul.f32 %v112, %v141
    %v184 = vmul.f32 %v113, %v141
    %v185 = vmul.f32 %v114, %v141
    %v186 = vmul.f32 %v115, %v141
    %v187 = vmul.f32 %v116, %v141
    %v188 = vmul.f32 %v117, %v141
    %v189 = vmul.f32 %v118, %v141
    %v190 = vmul.f32 %v119, %v141
    %v191 = vmul.f32 %v120, %v141
    %v192 = vmul.f32 %v121, %v141
    %v193 = vmul.f32 %v122, %v141
    %v194 = vmul.f32 %v123, %v141
    %v195 = vmul.f32 %v124, %v141
    %v196 = vmul.f32 %v125, %v141
    %v197 = vmul.f32 %v126, %v141
    %v198 = vmul.f32 %v127, %v141
    %v199 = vmul.f32 %v128, %v141
    %v200 = vmul.f32 %v129, %v141
    %v201 = vmul.f32 %v130, %v141
    %v202 = vmul.f32 %v131, %v141
    %v203 = vmul.f32 %v132, %v141
    %v204 = vmul.f32 %v133, %v141
    %v205 = vmul.f32 %v134, %v141
    %v206 = vmul.f32 %v135, %v141
    %v207 = vld [vmem:[#allocation7] sm:$0x1]
    %v209 = vlaneseq
    %v210 = vshrl.u32 %v209, 7
    %v211 = vsub.s32 0, %v210
    %v212 = vrot.slane %v207, %v211
    %v214 = vadd.f32 %v143, %v212
    %v215 = vadd.f32 %v144, %v212
    %v216 = vadd.f32 %v145, %v212
    %v217 = vadd.f32 %v146, %v212
    %v218 = vadd.f32 %v147, %v212
    %v219 = vadd.f32 %v148, %v212
    %v220 = vadd.f32 %v149, %v212
    %v221 = vadd.f32 %v150, %v212
    %v222 = vadd.f32 %v151, %v212
    %v223 = vadd.f32 %v152, %v212
    %v224 = vadd.f32 %v153, %v212
    %v225 = vadd.f32 %v154, %v212
    %v226 = vadd.f32 %v155, %v212
    %v227 = vadd.f32 %v156, %v212
    %v228 = vadd.f32 %v157, %v212
    %v229 = vadd.f32 %v158, %v212
    %v230 = vadd.f32 %v159, %v212
    %v231 = vadd.f32 %v160, %v212
    %v232 = vadd.f32 %v161, %v212
    %v233 = vadd.f32 %v162, %v212
    %v234 = vadd.f32 %v163, %v212
    %v235 = vadd.f32 %v164, %v212
    %v236 = vadd.f32 %v165, %v212
    %v237 = vadd.f32 %v166, %v212
    %v238 = vadd.f32 %v167, %v212
    %v239 = vadd.f32 %v168, %v212
    %v240 = vadd.f32 %v169, %v212
    %v241 = vadd.f32 %v170, %v212
    %v242 = vadd.f32 %v171, %v212
    %v243 = vadd.f32 %v172, %v212
    %v244 = vadd.f32 %v173, %v212
    %v245 = vadd.f32 %v174, %v212
    %v246 = vadd.f32 %v175, %v212
    %v247 = vadd.f32 %v176, %v212
    %v248 = vadd.f32 %v177, %v212
    %v249 = vadd.f32 %v178, %v212
    %v250 = vadd.f32 %v179, %v212
    %v251 = vadd.f32 %v180, %v212
    %v252 = vadd.f32 %v181, %v212
    %v253 = vadd.f32 %v182, %v212
    %v254 = vadd.f32 %v183, %v212
    %v255 = vadd.f32 %v184, %v212
    %v256 = vadd.f32 %v185, %v212
    %v257 = vadd.f32 %v186, %v212
    %v258 = vadd.f32 %v187, %v212
    %v259 = vadd.f32 %v188, %v212
    %v260 = vadd.f32 %v189, %v212
    %v261 = vadd.f32 %v190, %v212
    %v262 = vadd.f32 %v191, %v212
    %v263 = vadd.f32 %v192, %v212
    %v264 = vadd.f32 %v193, %v212
    %v265 = vadd.f32 %v194, %v212
    %v266 = vadd.f32 %v195, %v212
    %v267 = vadd.f32 %v196, %v212
    %v268 = vadd.f32 %v197, %v212
    %v269 = vadd.f32 %v198, %v212
    %v270 = vadd.f32 %v199, %v212
    %v271 = vadd.f32 %v200, %v212
    %v272 = vadd.f32 %v201, %v212
    %v273 = vadd.f32 %v202, %v212
    %v274 = vadd.f32 %v203, %v212
    %v275 = vadd.f32 %v204, %v212
    %v276 = vadd.f32 %v205, %v212
    %v277 = vadd.f32 %v206, %v212
    %v278 = vmax.f32 %v214, 0.0
    %v279 = vmax.f32 %v215, 0.0
    %v280 = vmax.f32 %v216, 0.0
    %v281 = vmax.f32 %v217, 0.0
    %v282 = vmax.f32 %v218, 0.0
    %v283 = vmax.f32 %v219, 0.0
    %v284 = vmax.f32 %v220, 0.0
    %v285 = vmax.f32 %v221, 0.0
    %v286 = vmax.f32 %v222, 0.0
    %v287 = vmax.f32 %v223, 0.0
    %v288 = vmax.f32 %v224, 0.0
    %v289 = vmax.f32 %v225, 0.0
    %v290 = vmax.f32 %v226, 0.0
    %v291 = vmax.f32 %v227, 0.0
    %v292 = vmax.f32 %v228, 0.0
    %v293 = vmax.f32 %v229, 0.0
    %v294 = vmax.f32 %v230, 0.0
    %v295 = vmax.f32 %v231, 0.0
    %v296 = vmax.f32 %v232, 0.0
    %v297 = vmax.f32 %v233, 0.0
    %v298 = vmax.f32 %v234, 0.0
    %v299 = vmax.f32 %v235, 0.0
    %v300 = vmax.f32 %v236, 0.0
    %v301 = vmax.f32 %v237, 0.0
    %v302 = vmax.f32 %v238, 0.0
    %v303 = vmax.f32 %v239, 0.0
    %v304 = vmax.f32 %v240, 0.0
    %v305 = vmax.f32 %v241, 0.0
    %v306 = vmax.f32 %v242, 0.0
    %v307 = vmax.f32 %v243, 0.0
    %v308 = vmax.f32 %v244, 0.0
    %v309 = vmax.f32 %v245, 0.0
    %v310 = vmax.f32 %v246, 0.0
    %v311 = vmax.f32 %v247, 0.0
    %v312 = vmax.f32 %v248, 0.0
    %v313 = vmax.f32 %v249, 0.0
    %v314 = vmax.f32 %v250, 0.0
    %v315 = vmax.f32 %v251, 0.0
    %v316 = vmax.f32 %v252, 0.0
    %v317 = vmax.f32 %v253, 0.0
    %v318 = vmax.f32 %v254, 0.0
    %v319 = vmax.f32 %v255, 0.0
    %v320 = vmax.f32 %v256, 0.0
    %v321 = vmax.f32 %v257, 0.0
    %v322 = vmax.f32 %v258, 0.0
    %v323 = vmax.f32 %v259, 0.0
    %v324 = vmax.f32 %v260, 0.0
    %v325 = vmax.f32 %v261, 0.0
    %v326 = vmax.f32 %v262, 0.0
    %v327 = vmax.f32 %v263, 0.0
    %v328 = vmax.f32 %v264, 0.0
    %v329 = vmax.f32 %v265, 0.0
    %v330 = vmax.f32 %v266, 0.0
    %v331 = vmax.f32 %v267, 0.0
    %v332 = vmax.f32 %v268, 0.0
    %v333 = vmax.f32 %v269, 0.0
    %v334 = vmax.f32 %v270, 0.0
    %v335 = vmax.f32 %v271, 0.0
    %v336 = vmax.f32 %v272, 0.0
    %v337 = vmax.f32 %v273, 0.0
    %v338 = vmax.f32 %v274, 0.0
    %v339 = vmax.f32 %v275, 0.0
    %v340 = vmax.f32 %v276, 0.0
    %v341 = vmax.f32 %v277, 0.0
    %v342 = vld [vmem:[#allocation8] sm:$0xff]
    %v343 = vld [vmem:[#allocation8 + $0x8] sm:$0xff]
    %v344 = vld [vmem:[#allocation8 + $0x10] sm:$0xff]
    %v345 = vld [vmem:[#allocation8 + $0x18] sm:$0xff]
    %v346 = vld [vmem:[#allocation8 + $0x20] sm:$0xff]
    %v347 = vld [vmem:[#allocation8 + $0x28] sm:$0xff]
    %v348 = vld [vmem:[#allocation8 + $0x30] sm:$0xff]
    %v349 = vld [vmem:[#allocation8 + $0x38] sm:$0xff]
    %v350 = vld [vmem:[#allocation8 + $0x40] sm:$0xff]
    %v351 = vld [vmem:[#allocation8 + $0x48] sm:$0xff]
    %v352 = vld [vmem:[#allocation8 + $0x50] sm:$0xff]
    %v353 = vld [vmem:[#allocation8 + $0x58] sm:$0xff]
    %v354 = vld [vmem:[#allocation8 + $0x60] sm:$0xff]
    %v355 = vld [vmem:[#allocation8 + $0x68] sm:$0xff]
    %v356 = vld [vmem:[#allocation8 + $0x70] sm:$0xff]
    %v357 = vld [vmem:[#allocation8 + $0x78] sm:$0xff]
    %358 = vmatprep.subr.mxu0 0.0
    %359 = vmatpush1.msra.mxu0 %v342
    %360 = vmatprep.subr.mxu0 0.0
    %361 = vmatpush1.msra.mxu0 %v343
    %362 = vmatprep.subr.mxu0 0.0
    %363 = vmatpush1.msra.mxu0 %v344
    %364 = vmatprep.subr.mxu0 0.0
    %365 = vmatpush1.msra.mxu0 %v345
    %366 = vmatprep.subr.mxu0 0.0
    %367 = vmatpush1.msra.mxu0 %v346
    %368 = vmatprep.subr.mxu0 0.0
    %369 = vmatpush1.msra.mxu0 %v347
    %370 = vmatprep.subr.mxu0 0.0
    %371 = vmatpush1.msra.mxu0 %v348
    %372 = vmatprep.subr.mxu0 0.0
    %373 = vmatpush1.msra.mxu0 %v349
    %374 = vmatprep.subr.mxu0 0.0
    %375 = vmatpush1.msra.mxu0 %v350
    %376 = vmatprep.subr.mxu0 0.0
    %377 = vmatpush1.msra.mxu0 %v351
    %378 = vmatprep.subr.mxu0 0.0
    %379 = vmatpush1.msra.mxu0 %v352
    %380 = vmatprep.subr.mxu0 0.0
    %381 = vmatpush1.msra.mxu0 %v353
    %382 = vmatprep.subr.mxu0 0.0
    %383 = vmatpush1.msra.mxu0 %v354
    %384 = vmatprep.subr.mxu0 0.0
    %385 = vmatpush1.msra.mxu0 %v355
    %386 = vmatprep.subr.mxu0 0.0
    %387 = vmatpush1.msra.mxu0 %v356
    %388 = vmatprep.subr.mxu0 0.0
    %389 = vmatpush1.msra.mxu0 %v357
    %390 = vmatprep.subr.mxu0 0.0
    %391 = vmatpush1.msra.mxu0 0.0
    %392 = vmatprep.subr.mxu0 0.0
    %393 = vmatpush1.msra.mxu0 0.0
    %394 = vmatprep.subr.mxu0 0.0
    %395 = vmatpush1.msra.mxu0 0.0
    %396 = vmatprep.subr.mxu0 0.0
    %397 = vmatpush1.msra.mxu0 0.0
    %398 = vmatprep.subr.mxu0 0.0
    %399 = vmatpush1.msra.mxu0 0.0
    %400 = vmatprep.subr.mxu0 0.0
    %401 = vmatpush1.msra.mxu0 0.0
    %402 = vmatprep.subr.mxu0 0.0
    %403 = vmatpush1.msra.mxu0 0.0
    %404 = vmatprep.subr.mxu0 0.0
    %405 = vmatpush1.msra.mxu0 0.0
    %406 = vmatprep.subr.mxu0 0.0
    %407 = vmatpush1.msra.mxu0 0.0
    %408 = vmatprep.subr.mxu0 0.0
    %409 = vmatpush1.msra.mxu0 0.0
    %410 = vmatprep.subr.mxu0 0.0
    %411 = vmatpush1.msra.mxu0 0.0
    %412 = vmatprep.subr.mxu0 0.0
    %413 = vmatpush1.msra.mxu0 0.0
    %414 = vmatprep.subr.mxu0 0.0
    %415 = vmatpush1.msra.mxu0 0.0
    %416 = vmatprep.subr.mxu0 0.0
    %417 = vmatpush1.msra.mxu0 0.0
    %418 = vmatprep.subr.mxu0 0.0
    %419 = vmatpush1.msra.mxu0 0.0
    %420 = vmatprep.subr.mxu0 0.0
    %421 = vmatpush1.msra.mxu0 0.0
    %422 = vmatprep.mubr.f32.mxu0 0.0
    %423 = vmatmul.mubr.f32.gmra.mrb[0].mxu0 %v278
    %v424 = vpop.f32.mrb[0].mxu0
    %v425 = vadd.f32 0.0, %v424
    %v426 = vpop.f32.mrb[0].mxu0
    %427 = vmatprep.mubr.f32.mxu0 0.0
    %428 = vmatmul.mubr.f32.gmra.mrb[0].mxu0 %v279
    %v429 = vpop.f32.mrb[0].mxu0
    %v430 = vadd.f32 0.0, %v429
    %v431 = vpop.f32.mrb[0].mxu0
    %432 = vmatprep.mubr.f32.mxu0 0.0
    %433 = vmatmul.mubr.f32.gmra.mrb[0].mxu0 %v280
    %v434 = vpop.f32.mrb[0].mxu0
    %v435 = vadd.f32 0.0, %v434
    %v436 = vpop.f32.mrb[0].mxu0
    %437 = vmatprep.mubr.f32.mxu0 0.0
    %438 = vmatmul.mubr.f32.gmra.mrb[0].mxu0 %v281
    %v439 = vpop.f32.mrb[0].mxu0
    %v440 = vadd.f32 0.0, %v439
    %v441 = vpop.f32.mrb[0].mxu0
    %442 = vmatprep.mubr.f32.mxu0 0.0
    %443 = vmatmul.mubr.f32.gmra.mrb[0].mxu0 %v282
    %v444 = vpop.f32.mrb[0].mxu0
    %v445 = vadd.f32 0.0, %v444
    %v446 = vpop.f32.mrb[0].mxu0
    %447 = vmatprep.mubr.f32.mxu0 0.0
    %448 = vmatmul.mubr.f32.gmra.mrb[0].mxu0 %v283
    %v449 = vpop.f32.mrb[0].mxu0
    %v450 = vadd.f32 0.0, %v449
    %v451 = vpop.f32.mrb[0].mxu0
    %452 = vmatprep.mubr.f32.mxu0 0.0
    %453 = vmatmul.mubr.f32.gmra.mrb[0].mxu0 %v284
    %v454 = vpop.f32.mrb[0].mxu0
    %v455 = vadd.f32 0.0, %v454
    %v456 = vpop.f32.mrb[0].mxu0
    %457 = vmatprep.mubr.f32.mxu0 0.0
    %458 = vmatmul.mubr.f32.gmra.mrb[0].mxu0 %v285
    %v459 = vpop.f32.mrb[0].mxu0
    %v460 = vadd.f32 0.0, %v459
    %v461 = vpop.f32.mrb[0].mxu0
    %462 = vmatprep.mubr.f32.mxu0 0.0
    %463 = vmatmul.mubr.f32.gmra.mrb[0].mxu0 %v286
    %v464 = vpop.f32.mrb[0].mxu0
    %v465 = vadd.f32 0.0, %v464
    %v466 = vpop.f32.mrb[0].mxu0
    %467 = vmatprep.mubr.f32.mxu0 0.0
    %468 = vmatmul.mubr.f32.gmra.mrb[0].mxu0 %v287
    %v469 = vpop.f32.mrb[0].mxu0
    %v470 = vadd.f32 0.0, %v469
    %v471 = vpop.f32.mrb[0].mxu0
    %472 = vmatprep.mubr.f32.mxu0 0.0
    %473 = vmatmul.mubr.f32.gmra.mrb[0].mxu0 %v288
    %v474 = vpop.f32.mrb[0].mxu0
    %v475 = vadd.f32 0.0, %v474
    %v476 = vpop.f32.mrb[0].mxu0
    %477 = vmatprep.mubr.f32.mxu0 0.0
    %478 = vmatmul.mubr.f32.gmra.mrb[0].mxu0 %v289
    %v479 = vpop.f32.mrb[0].mxu0
    %v480 = vadd.f32 0.0, %v479
    %v481 = vpop.f32.mrb[0].mxu0
    %482 = vmatprep.mubr.f32.mxu0 0.0
    %483 = vmatmul.mubr.f32.gmra.mrb[0].mxu0 %v290
    %v484 = vpop.f32.mrb[0].mxu0
    %v485 = vadd.f32 0.0, %v484
    %v486 = vpop.f32.mrb[0].mxu0
    %487 = vmatprep.mubr.f32.mxu0 0.0
    %488 = vmatmul.mubr.f32.gmra.mrb[0].mxu0 %v291
    %v489 = vpop.f32.mrb[0].mxu0
    %v490 = vadd.f32 0.0, %v489
    %v491 = vpop.f32.mrb[0].mxu0
    %492 = vmatprep.mubr.f32.mxu0 0.0
    %493 = vmatmul.mubr.f32.gmra.mrb[0].mxu0 %v292
    %v494 = vpop.f32.mrb[0].mxu0
    %v495 = vadd.f32 0.0, %v494
    %v496 = vpop.f32.mrb[0].mxu0
    %497 = vmatprep.mubr.f32.mxu0 0.0
    %498 = vmatmul.mubr.f32.gmra.mrb[0].mxu0 %v293
    %v499 = vpop.f32.mrb[0].mxu0
    %v500 = vadd.f32 0.0, %v499
    %v501 = vpop.f32.mrb[0].mxu0
    %502 = vmatprep.mubr.f32.mxu0 0.0
    %503 = vmatmul.mubr.f32.gmra.mrb[0].mxu0 %v294
    %v504 = vpop.f32.mrb[0].mxu0
    %v505 = vadd.f32 0.0, %v504
    %v506 = vpop.f32.mrb[0].mxu0
    %507 = vmatprep.mubr.f32.mxu0 0.0
    %508 = vmatmul.mubr.f32.gmra.mrb[0].mxu0 %v295
    %v509 = vpop.f32.mrb[0].mxu0
    %v510 = vadd.f32 0.0, %v509
    %v511 = vpop.f32.mrb[0].mxu0
    %512 = vmatprep.mubr.f32.mxu0 0.0
    %513 = vmatmul.mubr.f32.gmra.mrb[0].mxu0 %v296
    %v514 = vpop.f32.mrb[0].mxu0
    %v515 = vadd.f32 0.0, %v514
    %v516 = vpop.f32.mrb[0].mxu0
    %517 = vmatprep.mubr.f32.mxu0 0.0
    %518 = vmatmul.mubr.f32.gmra.mrb[0].mxu0 %v297
    %v519 = vpop.f32.mrb[0].mxu0
    %v520 = vadd.f32 0.0, %v519
    %v521 = vpop.f32.mrb[0].mxu0
    %522 = vmatprep.mubr.f32.mxu0 0.0
    %523 = vmatmul.mubr.f32.gmra.mrb[0].mxu0 %v298
    %v524 = vpop.f32.mrb[0].mxu0
    %v525 = vadd.f32 0.0, %v524
    %v526 = vpop.f32.mrb[0].mxu0
    %527 = vmatprep.mubr.f32.mxu0 0.0
    %528 = vmatmul.mubr.f32.gmra.mrb[0].mxu0 %v299
    %v529 = vpop.f32.mrb[0].mxu0
    %v530 = vadd.f32 0.0, %v529
    %v531 = vpop.f32.mrb[0].mxu0
    %532 = vmatprep.mubr.f32.mxu0 0.0
    %533 = vmatmul.mubr.f32.gmra.mrb[0].mxu0 %v300
    %v534 = vpop.f32.mrb[0].mxu0
    %v535 = vadd.f32 0.0, %v534
    %v536 = vpop.f32.mrb[0].mxu0
    %537 = vmatprep.mubr.f32.mxu0 0.0
    %538 = vmatmul.mubr.f32.gmra.mrb[0].mxu0 %v301
    %v539 = vpop.f32.mrb[0].mxu0
    %v540 = vadd.f32 0.0, %v539
    %v541 = vpop.f32.mrb[0].mxu0
    %542 = vmatprep.mubr.f32.mxu0 0.0
    %543 = vmatmul.mubr.f32.gmra.mrb[0].mxu0 %v302
    %v544 = vpop.f32.mrb[0].mxu0
    %v545 = vadd.f32 0.0, %v544
    %v546 = vpop.f32.mrb[0].mxu0
    %547 = vmatprep.mubr.f32.mxu0 0.0
    %548 = vmatmul.mubr.f32.gmra.mrb[0].mxu0 %v303
    %v549 = vpop.f32.mrb[0].mxu0
    %v550 = vadd.f32 0.0, %v549
    %v551 = vpop.f32.mrb[0].mxu0
    %552 = vmatprep.mubr.f32.mxu0 0.0
    %553 = vmatmul.mubr.f32.gmra.mrb[0].mxu0 %v304
    %v554 = vpop.f32.mrb[0].mxu0
    %v555 = vadd.f32 0.0, %v554
    %v556 = vpop.f32.mrb[0].mxu0
    %557 = vmatprep.mubr.f32.mxu0 0.0
    %558 = vmatmul.mubr.f32.gmra.mrb[0].mxu0 %v305
    %v559 = vpop.f32.mrb[0].mxu0
    %v560 = vadd.f32 0.0, %v559
    %v561 = vpop.f32.mrb[0].mxu0
    %562 = vmatprep.mubr.f32.mxu0 0.0
    %563 = vmatmul.mubr.f32.gmra.mrb[0].mxu0 %v306
    %v564 = vpop.f32.mrb[0].mxu0
    %v565 = vadd.f32 0.0, %v564
    %v566 = vpop.f32.mrb[0].mxu0
    %567 = vmatprep.mubr.f32.mxu0 0.0
    %568 = vmatmul.mubr.f32.gmra.mrb[0].mxu0 %v307
    %v569 = vpop.f32.mrb[0].mxu0
    %v570 = vadd.f32 0.0, %v569
    %v571 = vpop.f32.mrb[0].mxu0
    %572 = vmatprep.mubr.f32.mxu0 0.0
    %573 = vmatmul.mubr.f32.gmra.mrb[0].mxu0 %v308
    %v574 = vpop.f32.mrb[0].mxu0
    %v575 = vadd.f32 0.0, %v574
    %v576 = vpop.f32.mrb[0].mxu0
    %577 = vmatprep.mubr.f32.mxu0 0.0
    %578 = vmatmul.mubr.f32.gmra.mrb[0].mxu0 %v309
    %v579 = vpop.f32.mrb[0].mxu0
    %v580 = vadd.f32 0.0, %v579
    %v581 = vpop.f32.mrb[0].mxu0
    %582 = vmatprep.mubr.f32.mxu0 0.0
    %583 = vmatmul.mubr.f32.gmra.mrb[0].mxu0 %v310
    %v584 = vpop.f32.mrb[0].mxu0
    %v585 = vadd.f32 0.0, %v584
    %v586 = vpop.f32.mrb[0].mxu0
    %587 = vmatprep.mubr.f32.mxu0 0.0
    %588 = vmatmul.mubr.f32.gmra.mrb[0].mxu0 %v311
    %v589 = vpop.f32.mrb[0].mxu0
    %v590 = vadd.f32 0.0, %v589
    %v591 = vpop.f32.mrb[0].mxu0
    %592 = vmatprep.mubr.f32.mxu0 0.0
    %593 = vmatmul.mubr.f32.gmra.mrb[0].mxu0 %v312
    %v594 = vpop.f32.mrb[0].mxu0
    %v595 = vadd.f32 0.0, %v594
    %v596 = vpop.f32.mrb[0].mxu0
    %597 = vmatprep.mubr.f32.mxu0 0.0
    %598 = vmatmul.mubr.f32.gmra.mrb[0].mxu0 %v313
    %v599 = vpop.f32.mrb[0].mxu0
    %v600 = vadd.f32 0.0, %v599
    %v601 = vpop.f32.mrb[0].mxu0
    %602 = vmatprep.mubr.f32.mxu0 0.0
    %603 = vmatmul.mubr.f32.gmra.mrb[0].mxu0 %v314
    %v604 = vpop.f32.mrb[0].mxu0
    %v605 = vadd.f32 0.0, %v604
    %v606 = vpop.f32.mrb[0].mxu0
    %607 = vmatprep.mubr.f32.mxu0 0.0
    %608 = vmatmul.mubr.f32.gmra.mrb[0].mxu0 %v315
    %v609 = vpop.f32.mrb[0].mxu0
    %v610 = vadd.f32 0.0, %v609
    %v611 = vpop.f32.mrb[0].mxu0
    %612 = vmatprep.mubr.f32.mxu0 0.0
    %613 = vmatmul.mubr.f32.gmra.mrb[0].mxu0 %v316
    %v614 = vpop.f32.mrb[0].mxu0
    %v615 = vadd.f32 0.0, %v614
    %v616 = vpop.f32.mrb[0].mxu0
    %617 = vmatprep.mubr.f32.mxu0 0.0
    %618 = vmatmul.mubr.f32.gmra.mrb[0].mxu0 %v317
    %v619 = vpop.f32.mrb[0].mxu0
    %v620 = vadd.f32 0.0, %v619
    %v621 = vpop.f32.mrb[0].mxu0
    %622 = vmatprep.mubr.f32.mxu0 0.0
    %623 = vmatmul.mubr.f32.gmra.mrb[0].mxu0 %v318
    %v624 = vpop.f32.mrb[0].mxu0
    %v625 = vadd.f32 0.0, %v624
    %v626 = vpop.f32.mrb[0].mxu0
    %627 = vmatprep.mubr.f32.mxu0 0.0
    %628 = vmatmul.mubr.f32.gmra.mrb[0].mxu0 %v319
    %v629 = vpop.f32.mrb[0].mxu0
    %v630 = vadd.f32 0.0, %v629
    %v631 = vpop.f32.mrb[0].mxu0
    %632 = vmatprep.mubr.f32.mxu0 0.0
    %633 = vmatmul.mubr.f32.gmra.mrb[0].mxu0 %v320
    %v634 = vpop.f32.mrb[0].mxu0
    %v635 = vadd.f32 0.0, %v634
    %v636 = vpop.f32.mrb[0].mxu0
    %637 = vmatprep.mubr.f32.mxu0 0.0
    %638 = vmatmul.mubr.f32.gmra.mrb[0].mxu0 %v321
    %v639 = vpop.f32.mrb[0].mxu0
    %v640 = vadd.f32 0.0, %v639
    %v641 = vpop.f32.mrb[0].mxu0
    %642 = vmatprep.mubr.f32.mxu0 0.0
    %643 = vmatmul.mubr.f32.gmra.mrb[0].mxu0 %v322
    %v644 = vpop.f32.mrb[0].mxu0
    %v645 = vadd.f32 0.0, %v644
    %v646 = vpop.f32.mrb[0].mxu0
    %647 = vmatprep.mubr.f32.mxu0 0.0
    %648 = vmatmul.mubr.f32.gmra.mrb[0].mxu0 %v323
    %v649 = vpop.f32.mrb[0].mxu0
    %v650 = vadd.f32 0.0, %v649
    %v651 = vpop.f32.mrb[0].mxu0
    %652 = vmatprep.mubr.f32.mxu0 0.0
    %653 = vmatmul.mubr.f32.gmra.mrb[0].mxu0 %v324
    %v654 = vpop.f32.mrb[0].mxu0
    %v655 = vadd.f32 0.0, %v654
    %v656 = vpop.f32.mrb[0].mxu0
    %657 = vmatprep.mubr.f32.mxu0 0.0
    %658 = vmatmul.mubr.f32.gmra.mrb[0].mxu0 %v325
    %v659 = vpop.f32.mrb[0].mxu0
    %v660 = vadd.f32 0.0, %v659
    %v661 = vpop.f32.mrb[0].mxu0
    %662 = vmatprep.mubr.f32.mxu0 0.0
    %663 = vmatmul.mubr.f32.gmra.mrb[0].mxu0 %v326
    %v664 = vpop.f32.mrb[0].mxu0
    %v665 = vadd.f32 0.0, %v664
    %v666 = vpop.f32.mrb[0].mxu0
    %667 = vmatprep.mubr.f32.mxu0 0.0
    %668 = vmatmul.mubr.f32.gmra.mrb[0].mxu0 %v327
    %v669 = vpop.f32.mrb[0].mxu0
    %v670 = vadd.f32 0.0, %v669
    %v671 = vpop.f32.mrb[0].mxu0
    %672 = vmatprep.mubr.f32.mxu0 0.0
    %673 = vmatmul.mubr.f32.gmra.mrb[0].mxu0 %v328
    %v674 = vpop.f32.mrb[0].mxu0
    %v675 = vadd.f32 0.0, %v674
    %v676 = vpop.f32.mrb[0].mxu0
    %677 = vmatprep.mubr.f32.mxu0 0.0
    %678 = vmatmul.mubr.f32.gmra.mrb[0].mxu0 %v329
    %v679 = vpop.f32.mrb[0].mxu0
    %v680 = vadd.f32 0.0, %v679
    %v681 = vpop.f32.mrb[0].mxu0
    %682 = vmatprep.mubr.f32.mxu0 0.0
    %683 = vmatmul.mubr.f32.gmra.mrb[0].mxu0 %v330
    %v684 = vpop.f32.mrb[0].mxu0
    %v685 = vadd.f32 0.0, %v684
    %v686 = vpop.f32.mrb[0].mxu0
    %687 = vmatprep.mubr.f32.mxu0 0.0
    %688 = vmatmul.mubr.f32.gmra.mrb[0].mxu0 %v331
    %v689 = vpop.f32.mrb[0].mxu0
    %v690 = vadd.f32 0.0, %v689
    %v691 = vpop.f32.mrb[0].mxu0
    %692 = vmatprep.mubr.f32.mxu0 0.0
    %693 = vmatmul.mubr.f32.gmra.mrb[0].mxu0 %v332
    %v694 = vpop.f32.mrb[0].mxu0
    %v695 = vadd.f32 0.0, %v694
    %v696 = vpop.f32.mrb[0].mxu0
    %697 = vmatprep.mubr.f32.mxu0 0.0
    %698 = vmatmul.mubr.f32.gmra.mrb[0].mxu0 %v333
    %v699 = vpop.f32.mrb[0].mxu0
    %v700 = vadd.f32 0.0, %v699
    %v701 = vpop.f32.mrb[0].mxu0
    %702 = vmatprep.mubr.f32.mxu0 0.0
    %703 = vmatmul.mubr.f32.gmra.mrb[0].mxu0 %v334
    %v704 = vpop.f32.mrb[0].mxu0
    %v705 = vadd.f32 0.0, %v704
    %v706 = vpop.f32.mrb[0].mxu0
    %707 = vmatprep.mubr.f32.mxu0 0.0
    %708 = vmatmul.mubr.f32.gmra.mrb[0].mxu0 %v335
    %v709 = vpop.f32.mrb[0].mxu0
    %v710 = vadd.f32 0.0, %v709
    %v711 = vpop.f32.mrb[0].mxu0
    %712 = vmatprep.mubr.f32.mxu0 0.0
    %713 = vmatmul.mubr.f32.gmra.mrb[0].mxu0 %v336
    %v714 = vpop.f32.mrb[0].mxu0
    %v715 = vadd.f32 0.0, %v714
    %v716 = vpop.f32.mrb[0].mxu0
    %717 = vmatprep.mubr.f32.mxu0 0.0
    %718 = vmatmul.mubr.f32.gmra.mrb[0].mxu0 %v337
    %v719 = vpop.f32.mrb[0].mxu0
    %v720 = vadd.f32 0.0, %v719
    %v721 = vpop.f32.mrb[0].mxu0
    %722 = vmatprep.mubr.f32.mxu0 0.0
    %723 = vmatmul.mubr.f32.gmra.mrb[0].mxu0 %v338
    %v724 = vpop.f32.mrb[0].mxu0
    %v725 = vadd.f32 0.0, %v724
    %v726 = vpop.f32.mrb[0].mxu0
    %727 = vmatprep.mubr.f32.mxu0 0.0
    %728 = vmatmul.mubr.f32.gmra.mrb[0].mxu0 %v339
    %v729 = vpop.f32.mrb[0].mxu0
    %v730 = vadd.f32 0.0, %v729
    %v731 = vpop.f32.mrb[0].mxu0
    %732 = vmatprep.mubr.f32.mxu0 0.0
    %733 = vmatmul.mubr.f32.gmra.mrb[0].mxu0 %v340
    %v734 = vpop.f32.mrb[0].mxu0
    %v735 = vadd.f32 0.0, %v734
    %v736 = vpop.f32.mrb[0].mxu0
    %737 = vmatprep.mubr.f32.mxu0 0.0
    %738 = vmatmul.mubr.f32.gmra.mrb[0].mxu0 %v341
    %v739 = vpop.f32.mrb[0].mxu0
    %v740 = vadd.f32 0.0, %v739
    %v741 = vpop.f32.mrb[0].mxu0
    %742 = vdwg.mxu0
    %743 = vst [vmem:[#allocation10] sm:$0xff] %v425
    %744 = vst [vmem:[#allocation10 + $0x8] sm:$0xff] %v430
    %745 = vst [vmem:[#allocation10 + $0x10] sm:$0xff] %v435
    %746 = vst [vmem:[#allocation10 + $0x18] sm:$0xff] %v440
    %747 = vst [vmem:[#allocation10 + $0x20] sm:$0xff] %v445
    %748 = vst [vmem:[#allocation10 + $0x28] sm:$0xff] %v450
    %749 = vst [vmem:[#allocation10 + $0x30] sm:$0xff] %v455
    %750 = vst [vmem:[#allocation10 + $0x38] sm:$0xff] %v460
    %751 = vst [vmem:[#allocation10 + $0x40] sm:$0xff] %v465
    %752 = vst [vmem:[#allocation10 + $0x48] sm:$0xff] %v470
    %753 = vst [vmem:[#allocation10 + $0x50] sm:$0xff] %v475
    %754 = vst [vmem:[#allocation10 + $0x58] sm:$0xff] %v480
    %755 = vst [vmem:[#allocation10 + $0x60] sm:$0xff] %v485
    %756 = vst [vmem:[#allocation10 + $0x68] sm:$0xff] %v490
    %757 = vst [vmem:[#allocation10 + $0x70] sm:$0xff] %v495
    %758 = vst [vmem:[#allocation10 + $0x78] sm:$0xff] %v500
    %759 = vst [vmem:[#allocation10 + $0x80] sm:$0xff] %v505
    %760 = vst [vmem:[#allocation10 + $0x88] sm:$0xff] %v510
    %761 = vst [vmem:[#allocation10 + $0x90] sm:$0xff] %v515
    %762 = vst [vmem:[#allocation10 + $0x98] sm:$0xff] %v520
    %763 = vst [vmem:[#allocation10 + $0xa0] sm:$0xff] %v525
    %764 = vst [vmem:[#allocation10 + $0xa8] sm:$0xff] %v530
    %765 = vst [vmem:[#allocation10 + $0xb0] sm:$0xff] %v535
    %766 = vst [vmem:[#allocation10 + $0xb8] sm:$0xff] %v540
    %767 = vst [vmem:[#allocation10 + $0xc0] sm:$0xff] %v545
    %768 = vst [vmem:[#allocation10 + $0xc8] sm:$0xff] %v550
    %769 = vst [vmem:[#allocation10 + $0xd0] sm:$0xff] %v555
    %770 = vst [vmem:[#allocation10 + $0xd8] sm:$0xff] %v560
    %771 = vst [vmem:[#allocation10 + $0xe0] sm:$0xff] %v565
    %772 = vst [vmem:[#allocation10 + $0xe8] sm:$0xff] %v570
    %773 = vst [vmem:[#allocation10 + $0xf0] sm:$0xff] %v575
    %774 = vst [vmem:[#allocation10 + $0xf8] sm:$0xff] %v580
    %775 = vst [vmem:[#allocation10 + $0x100] sm:$0xff] %v585
    %776 = vst [vmem:[#allocation10 + $0x108] sm:$0xff] %v590
    %777 = vst [vmem:[#allocation10 + $0x110] sm:$0xff] %v595
    %778 = vst [vmem:[#allocation10 + $0x118] sm:$0xff] %v600
    %779 = vst [vmem:[#allocation10 + $0x120] sm:$0xff] %v605
    %780 = vst [vmem:[#allocation10 + $0x128] sm:$0xff] %v610
    %781 = vst [vmem:[#allocation10 + $0x130] sm:$0xff] %v615
    %782 = vst [vmem:[#allocation10 + $0x138] sm:$0xff] %v620
    %783 = vst [vmem:[#allocation10 + $0x140] sm:$0xff] %v625
    %784 = vst [vmem:[#allocation10 + $0x148] sm:$0xff] %v630
    %785 = vst [vmem:[#allocation10 + $0x150] sm:$0xff] %v635
    %786 = vst [vmem:[#allocation10 + $0x158] sm:$0xff] %v640
    %787 = vst [vmem:[#allocation10 + $0x160] sm:$0xff] %v645
    %788 = vst [vmem:[#allocation10 + $0x168] sm:$0xff] %v650
    %789 = vst [vmem:[#allocation10 + $0x170] sm:$0xff] %v655
    %790 = vst [vmem:[#allocation10 + $0x178] sm:$0xff] %v660
    %791 = vst [vmem:[#allocation10 + $0x180] sm:$0xff] %v665
    %792 = vst [vmem:[#allocation10 + $0x188] sm:$0xff] %v670
    %793 = vst [vmem:[#allocation10 + $0x190] sm:$0xff] %v675
    %794 = vst [vmem:[#allocation10 + $0x198] sm:$0xff] %v680
    %795 = vst [vmem:[#allocation10 + $0x1a0] sm:$0xff] %v685
    %796 = vst [vmem:[#allocation10 + $0x1a8] sm:$0xff] %v690
    %797 = vst [vmem:[#allocation10 + $0x1b0] sm:$0xff] %v695
    %798 = vst [vmem:[#allocation10 + $0x1b8] sm:$0xff] %v700
    %799 = vst [vmem:[#allocation10 + $0x1c0] sm:$0xff] %v705
    %800 = vst [vmem:[#allocation10 + $0x1c8] sm:$0xff] %v710
    %801 = vst [vmem:[#allocation10 + $0x1d0] sm:$0xff] %v715
    %802 = vst [vmem:[#allocation10 + $0x1d8] sm:$0xff] %v720
    %803 = vst [vmem:[#allocation10 + $0x1e0] sm:$0xff] %v725
    %804 = vst [vmem:[#allocation10 + $0x1e8] sm:$0xff] %v730
    %805 = vst [vmem:[#allocation10 + $0x1f0] sm:$0xff] %v735
    %806 = vst [vmem:[#allocation10 + $0x1f8] sm:$0xff] %v740
    %v807 = vadd.f32 %v425, %v430
    %v808 = vadd.f32 %v807, %v435
    %v809 = vadd.f32 %v808, %v440
    %v810 = vadd.f32 %v809, %v445
    %v811 = vadd.f32 %v810, %v450
    %v812 = vadd.f32 %v811, %v455
    %v813 = vadd.f32 %v812, %v460
    %v814 = vadd.f32 %v813, %v465
    %v815 = vadd.f32 %v814, %v470
    %v816 = vadd.f32 %v815, %v475
    %v817 = vadd.f32 %v816, %v480
    %v818 = vadd.f32 %v817, %v485
    %v819 = vadd.f32 %v818, %v490
    %v820 = vadd.f32 %v819, %v495
    %v821 = vadd.f32 %v820, %v500
    %v822 = vadd.f32 %v821, %v505
    %v823 = vadd.f32 %v822, %v510
    %v824 = vadd.f32 %v823, %v515
    %v825 = vadd.f32 %v824, %v520
    %v826 = vadd.f32 %v825, %v525
    %v827 = vadd.f32 %v826, %v530
    %v828 = vadd.f32 %v827, %v535
    %v829 = vadd.f32 %v828, %v540
    %v830 = vadd.f32 %v829, %v545
    %v831 = vadd.f32 %v830, %v550
    %v832 = vadd.f32 %v831, %v555
    %v833 = vadd.f32 %v832, %v560
    %v834 = vadd.f32 %v833, %v565
    %v835 = vadd.f32 %v834, %v570
    %v836 = vadd.f32 %v835, %v575
    %v837 = vadd.f32 %v836, %v580
    %v838 = vadd.f32 %v837, %v585
    %v839 = vadd.f32 %v838, %v590
    %v840 = vadd.f32 %v839, %v595
    %v841 = vadd.f32 %v840, %v600
    %v842 = vadd.f32 %v841, %v605
    %v843 = vadd.f32 %v842, %v610
    %v844 = vadd.f32 %v843, %v615
    %v845 = vadd.f32 %v844, %v620
    %v846 = vadd.f32 %v845, %v625
    %v847 = vadd.f32 %v846, %v630
    %v848 = vadd.f32 %v847, %v635
    %v849 = vadd.f32 %v848, %v640
    %v850 = vadd.f32 %v849, %v645
    %v851 = vadd.f32 %v850, %v650
    %v852 = vadd.f32 %v851, %v655
    %v853 = vadd.f32 %v852, %v660
    %v854 = vadd.f32 %v853, %v665
    %v855 = vadd.f32 %v854, %v670
    %v856 = vadd.f32 %v855, %v675
    %v857 = vadd.f32 %v856, %v680
    %v858 = vadd.f32 %v857, %v685
    %v859 = vadd.f32 %v858, %v690
    %v860 = vadd.f32 %v859, %v695
    %v861 = vadd.f32 %v860, %v700
    %v862 = vadd.f32 %v861, %v705
    %v863 = vadd.f32 %v862, %v710
    %v864 = vadd.f32 %v863, %v715
    %v865 = vadd.f32 %v864, %v720
    %v866 = vadd.f32 %v865, %v725
    %v867 = vadd.f32 %v866, %v730
    %v868 = vadd.f32 %v867, %v735
    %v869 = vadd.f32 %v868, %v740
    %v870 = vrot.slane %v869, 4
    %v871 = vadd.f32 %v869, %v870
    %v872 = vrot.slane %v871, 2
    %v873 = vadd.f32 %v871, %v872
    %v874 = vrot.slane %v873, 1
    %v875 = vadd.f32 %v873, %v874
    %v876 = vmul.f32 %v425, %v425
    %v877 = vmul.f32 %v430, %v430
    %v878 = vmul.f32 %v435, %v435
    %v879 = vmul.f32 %v440, %v440
    %v880 = vmul.f32 %v445, %v445
    %v881 = vmul.f32 %v450, %v450
    %v882 = vmul.f32 %v455, %v455
    %v883 = vmul.f32 %v460, %v460
    %v884 = vmul.f32 %v465, %v465
    %v885 = vmul.f32 %v470, %v470
    %v886 = vmul.f32 %v475, %v475
    %v887 = vmul.f32 %v480, %v480
    %v888 = vmul.f32 %v485, %v485
    %v889 = vmul.f32 %v490, %v490
    %v890 = vmul.f32 %v495, %v495
    %v891 = vmul.f32 %v500, %v500
    %v892 = vmul.f32 %v505, %v505
    %v893 = vmul.f32 %v510, %v510
    %v894 = vmul.f32 %v515, %v515
    %v895 = vmul.f32 %v520, %v520
    %v896 = vmul.f32 %v525, %v525
    %v897 = vmul.f32 %v530, %v530
    %v898 = vmul.f32 %v535, %v535
    %v899 = vmul.f32 %v540, %v540
    %v900 = vmul.f32 %v545, %v545
    %v901 = vmul.f32 %v550, %v550
    %v902 = vmul.f32 %v555, %v555
    %v903 = vmul.f32 %v560, %v560
    %v904 = vmul.f32 %v565, %v565
    %v905 = vmul.f32 %v570, %v570
    %v906 = vmul.f32 %v575, %v575
    %v907 = vmul.f32 %v580, %v580
    %v908 = vmul.f32 %v585, %v585
    %v909 = vmul.f32 %v590, %v590
    %v910 = vmul.f32 %v595, %v595
    %v911 = vmul.f32 %v600, %v600
    %v912 = vmul.f32 %v605, %v605
    %v913 = vmul.f32 %v610, %v610
    %v914 = vmul.f32 %v615, %v615
    %v915 = vmul.f32 %v620, %v620
    %v916 = vmul.f32 %v625, %v625
    %v917 = vmul.f32 %v630, %v630
    %v918 = vmul.f32 %v635, %v635
    %v919 = vmul.f32 %v640, %v640
    %v920 = vmul.f32 %v645, %v645
    %v921 = vmul.f32 %v650, %v650
    %v922 = vmul.f32 %v655, %v655
    %v923 = vmul.f32 %v660, %v660
    %v924 = vmul.f32 %v665, %v665
    %v925 = vmul.f32 %v670, %v670
    %v926 = vmul.f32 %v675, %v675
    %v927 = vmul.f32 %v680, %v680
    %v928 = vmul.f32 %v685, %v685
    %v929 = vmul.f32 %v690, %v690
    %v930 = vmul.f32 %v695, %v695
    %v931 = vmul.f32 %v700, %v700
    %v932 = vmul.f32 %v705, %v705
    %v933 = vmul.f32 %v710, %v710
    %v934 = vmul.f32 %v715, %v715
    %v935 = vmul.f32 %v720, %v720
    %v936 = vmul.f32 %v725, %v725
    %v937 = vmul.f32 %v730, %v730
    %v938 = vmul.f32 %v735, %v735
    %v939 = vmul.f32 %v740, %v740
    %v940 = vadd.f32 %v876, %v877
    %v941 = vadd.f32 %v940, %v878
    %v942 = vadd.f32 %v941, %v879
    %v943 = vadd.f32 %v942, %v880
    %v944 = vadd.f32 %v943, %v881
    %v945 = vadd.f32 %v944, %v882
    %v946 = vadd.f32 %v945, %v883
    %v947 = vadd.f32 %v946, %v884
    %v948 = vadd.f32 %v947, %v885
    %v949 = vadd.f32 %v948, %v886
    %v950 = vadd.f32 %v949, %v887
    %v951 = vadd.f32 %v950, %v888
    %v952 = vadd.f32 %v951, %v889
    %v953 = vadd.f32 %v952, %v890
    %v954 = vadd.f32 %v953, %v891
    %v955 = vadd.f32 %v954, %v892
    %v956 = vadd.f32 %v955, %v893
    %v957 = vadd.f32 %v956, %v894
    %v958 = vadd.f32 %v957, %v895
    %v959 = vadd.f32 %v958, %v896
    %v960 = vadd.f32 %v959, %v897
    %v961 = vadd.f32 %v960, %v898
    %v962 = vadd.f32 %v961, %v899
    %v963 = vadd.f32 %v962, %v900
    %v964 = vadd.f32 %v963, %v901
    %v965 = vadd.f32 %v964, %v902
    %v966 = vadd.f32 %v965, %v903
    %v967 = vadd.f32 %v966, %v904
    %v968 = vadd.f32 %v967, %v905
    %v969 = vadd.f32 %v968, %v906
    %v970 = vadd.f32 %v969, %v907
    %v971 = vadd.f32 %v970, %v908
    %v972 = vadd.f32 %v971, %v909
    %v973 = vadd.f32 %v972, %v910
    %v974 = vadd.f32 %v973, %v911
    %v975 = vadd.f32 %v974, %v912
    %v976 = vadd.f32 %v975, %v913
    %v977 = vadd.f32 %v976, %v914
    %v978 = vadd.f32 %v977, %v915
    %v979 = vadd.f32 %v978, %v916
    %v980 = vadd.f32 %v979, %v917
    %v981 = vadd.f32 %v980, %v918
    %v982 = vadd.f32 %v981, %v919
    %v983 = vadd.f32 %v982, %v920
    %v984 = vadd.f32 %v983, %v921
    %v985 = vadd.f32 %v984, %v922
    %v986 = vadd.f32 %v985, %v923
    %v987 = vadd.f32 %v986, %v924
    %v988 = vadd.f32 %v987, %v925
    %v989 = vadd.f32 %v988, %v926
    %v990 = vadd.f32 %v989, %v927
    %v991 = vadd.f32 %v990, %v928
    %v992 = vadd.f32 %v991, %v929
    %v993 = vadd.f32 %v992, %v930
    %v994 = vadd.f32 %v993, %v931
    %v995 = vadd.f32 %v994, %v932
    %v996 = vadd.f32 %v995, %v933
    %v997 = vadd.f32 %v996, %v934
    %v998 = vadd.f32 %v997, %v935
    %v999 = vadd.f32 %v998, %v936
    %v1000 = vadd.f32 %v999, %v937
    %v1001 = vadd.f32 %v1000, %v938
    %v1002 = vadd.f32 %v1001, %v939
    %v1003 = vrot.slane %v1002, 4
    %v1004 = vadd.f32 %v1002, %v1003
    %v1005 = vrot.slane %v1004, 2
    %v1006 = vadd.f32 %v1004, %v1005
    %v1007 = vrot.slane %v1006, 1
    %v1008 = vadd.f32 %v1006, %v1007
    %vm1009 = vcmask 1040384
    %v1010 = vsel %vm1009, %v875, %v1008
    %1011 = vst [vmem:[#allocation11] sm:$0x3] %v1010
    // Predicated region
    $region34: #{res_block.4} parent=1 // pred_check
      _
    $region35: #{res_block.4} parent=1 // pred_check_branch
      %1013 = sbr.rel (0) target = $region37
    $region36: #{res_block.4} parent=1 // pred_region
      %s1015 = ssub.s32 8192, 8192
      %1016 = vsyncadd [#allocation4], %s1015
      %s1017 = sshll.u32 [#allocation10], 4
      %s1018 = int_to_ptr.vmem [resolvable:$true] %s1017
      %1023 = dma.vmem_to_hbm [thread:$0]  %s1018, 8192, %s4, [#allocation4], 128, 128, 8
    $region37: #{res_block.4} parent=1 // pred_fallthru
      _
    // Predicated region
    $region38: #{res_block.4} parent=1 // pred_check
      _
    $region39: #{res_block.4} parent=1 // pred_check_branch
      %1025 = sbr.rel (0) target = $region41
    $region40: #{res_block.4} parent=1 // pred_region
      %s1027 = ssub.s32 32, 32
      %1028 = vsyncadd [#allocation12], %s1027
      %s1030 = sshll.u32 [#allocation11], 4
      %s1031 = int_to_ptr.vmem [resolvable:$true] %s1030
      %1033 = dma.vmem_to_hbm [thread:$0]  %s1031, 32, %s5, [#allocation12]
    $region41: #{res_block.4} parent=1 // pred_fallthru
      _
    // Predicated region
    $region42: #{res_block.4} parent=1 // pred_check
      _
    $region43: #{res_block.4} parent=1 // pred_check_branch
      %1035 = sbr.rel (0) target = $region45
    $region44: #{res_block.4} parent=1 // pred_region
      %1036 = dma.done [#allocation4], 8192
    $region45: #{res_block.4} parent=1 // pred_fallthru
      _
    // Predicated region
    $region46: #{res_block.4} parent=1 // pred_check
      _
    $region47: #{res_block.4} parent=1 // pred_check_branch
      %1038 = sbr.rel (0) target = $region49
    $region48: #{res_block.4} parent=1 // pred_region
      %1039 = dma.done [#allocation12], 32
    $region49: #{res_block.4} parent=1 // pred_fallthru
      _
    %1040 = vsyncpa [#allocation3], 1
    %1041 = vsyncpa [#allocation6], 1
    %1042 = vsyncpa [#allocation9], 1
    %1043 = vsyncpa [#allocation4], 1
    %1044 = vsyncpa [#allocation12], 1

// kernel: res_block.3
$region0: #{res_block.3}
  #allocation0 [shape = 'u32[]', space=smem, size = 0x4, offset = 0x4, fixed_abs, tag = 'smem constant byte address 0x4 - core index']
  #allocation1 [shape = 'u32[144,128]{1,0:T(1,128)}', space=vmem, size = 0x12000, scoped, tag = 'internal scratch']
  %s0 = inlined_call_operand.hbm [shape: f32[2,18,18,128], index: 0, kind: input, shape index: {}]
  %s1 = inlined_call_operand.hbm [shape: f32[3,3,128,128], index: 1, kind: input, shape index: {}]
  %s2 = inlined_call_operand.hbm [shape: f32[2,16,16,128], index: 2, kind: output, shape index: {0}]
  %s3 = inlined_call_operand.hbm [shape: f32[2,2,128], index: 3, kind: output, shape index: {1}]
  %4 = xla_tuple %s2, %s3
  %s5 = sld [smem:[#allocation0]]
  $region64: #{res_block.3} parent=0
    _
  %s7 = ssub.s32 1, %s5
  %s8 = scalar_select 0, %s7, %s5
  $region1: #{res_block.3} parent=0
    #allocation2 [shape = 'u8[442368]{0}', space=vmem, size = 0x6c000, scoped, tag = 'input window, operand 0']
    #allocation3 [shape = 's32[2]{0}', space=sflag, size = 0x8, scoped, tag = 'scoped memory for res_block.3']
    #allocation4 [shape = 's32[2]{0}', space=sflag, size = 0x8, scoped, tag = 'scoped memory for res_block.3']
    #allocation5 [shape = 'u8[589824]{0}', space=vmem, size = 0x90000, scoped, tag = 'input window, operand 1, single buffered']
    #allocation6 [shape = 's32[1]{0}', space=sflag, size = 0x4, scoped, tag = 'scoped memory for res_block.3']
    #allocation7 [shape = 'u8[262144]{0}', space=vmem, size = 0x40000, scoped, tag = 'output window, operand 0']
    #allocation8 [shape = 'u8[2048]{0}', space=vmem, size = 0x800, scoped, tag = 'output window, operand 1']
    #allocation9 [shape = 's32[2]{0}', space=sflag, size = 0x8, scoped, tag = 'scoped memory for res_block.3']
    %9 = vsyncpa [#allocation3], 0
    %s10 = scalar_lea.sflag [#allocation3], 1
    %11 = vsyncpa %s10, 0
    %12 = vsyncpa [#allocation6], 0
    %13 = vsyncpa [#allocation4], 0
    %s14 = scalar_lea.sflag [#allocation4], 1
    %15 = vsyncpa %s14, 0
    %16 = vsyncpa [#allocation9], 0
    %s17 = scalar_lea.sflag [#allocation9], 1
    %18 = vsyncpa %s17, 0
    loop: start=0, step=1, limit=4
    $region2: #{res_block.3} parent=1 // loop_pre_header
      _
    $region3: #{res_block.3} parent=1 // loop_header
      %s20 = sphi 0, %s24
      %p21 = scmp.ge.s32.totalorder %s20, 4
      %s30 = sphi 0, %s32
      %s33 = sphi 0, %s30
      %s34 = sphi 0, %s33
      %s50 = sphi 0, %s34
      %s54 = sphi 0, %s54
      %s56 = sphi 0, %s54
      %s57 = sphi 0, %s56
      %s71 = sphi 0, %s57
      %s77 = sphi 0, %s79
      %s80 = sphi 0, %s77
      %s81 = sphi 0, %s80
      %s97 = sphi 0, %s81
      %s103 = sphi 0, %s105
      %s106 = sphi 0, %s103
      %s107 = sphi 0, %s106
      %s123 = sphi 0, %s107
    $region4: #{res_block.3} parent=1 // loop_header_branch
      %23 = sbr.rel (%p21) target = $region8
    $region5: #{res_block.3} parent=1 // loop_body
      %s25 = ssub.s32 %s20, 1
      %s26 = ssub.s32 %s20, 2
      %s27 = sadd.s32 %s20, 1
      %s28 = ssub.s32 %s20, %s27
      %p29 = scmp.eq.s32.totalorder %s28, 0
      %s31 = sadd.s32 %s30, 1
      %s32 = scalar_select %p29, %s30, %s31
      %p35 = pneg %p29
      %p36 = scmp.eq.s32.totalorder %s20, 1
      %p37 = por %p35, %p36
      %p38 = scmp.ne.s32.totalorder %s30, %s33
      %p39 = scmp.eq.s32.totalorder %s20, 0
      %p40 = por %p38, %p39
      %p41 = scmp.ne.s32.totalorder %s30, %s33
      %p42 = scmp.eq.s32.totalorder %s25, 1
      %p43 = por %p41, %p42
      %p44 = scmp.ne.s32.totalorder %s33, %s34
      %p45 = scmp.eq.s32.totalorder %s25, 0
      %p46 = por %p44, %p45
      %p47 = scmp.ne.s32.totalorder %s33, %s34
      %p48 = scmp.eq.s32.totalorder %s26, 1
      %p49 = por %p47, %p48
      %p51 = scmp.ne.s32.totalorder %s34, %s50
      %p52 = scmp.eq.s32.totalorder %s26, 0
      %p53 = por %p51, %p52
      %s55 = sadd.s32 %s54, 1
      %p58 = scmp.eq.s32.totalorder %s20, 1
      %p59 = scmp.ne.s32.totalorder %s54, %s56
      %p60 = scmp.eq.s32.totalorder %s20, 0
      %p61 = por %p59, %p60
      %p62 = scmp.ne.s32.totalorder %s54, %s56
      %p63 = scmp.eq.s32.totalorder %s25, 1
      %p64 = por %p62, %p63
      %p65 = scmp.ne.s32.totalorder %s56, %s57
      %p66 = scmp.eq.s32.totalorder %s25, 0
      %p67 = por %p65, %p66
      %p68 = scmp.ne.s32.totalorder %s56, %s57
      %p69 = scmp.eq.s32.totalorder %s26, 1
      %p70 = por %p68, %p69
      %p72 = scmp.ne.s32.totalorder %s57, %s71
      %p73 = scmp.eq.s32.totalorder %s26, 0
      %p74 = por %p72, %p73
      %s75 = ssub.s32 %s20, %s27
      %p76 = scmp.eq.s32.totalorder %s75, 0
      %s78 = sadd.s32 %s77, 1
      %s79 = scalar_select %p76, %s77, %s78
      %p82 = pneg %p76
      %p83 = scmp.eq.s32.totalorder %s20, 1
      %p84 = por %p82, %p83
      %p85 = scmp.ne.s32.totalorder %s77, %s80
      %p86 = scmp.eq.s32.totalorder %s20, 0
      %p87 = por %p85, %p86
      %p88 = scmp.ne.s32.totalorder %s77, %s80
      %p89 = scmp.eq.s32.totalorder %s25, 1
      %p90 = por %p88, %p89
      %p91 = scmp.ne.s32.totalorder %s80, %s81
      %p92 = scmp.eq.s32.totalorder %s25, 0
      %p93 = por %p91, %p92
      %p94 = scmp.ne.s32.totalorder %s80, %s81
      %p95 = scmp.eq.s32.totalorder %s26, 1
      %p96 = por %p94, %p95
      %p98 = scmp.ne.s32.totalorder %s81, %s97
      %p99 = scmp.eq.s32.totalorder %s26, 0
      %p100 = por %p98, %p99
      %s101 = ssub.s32 %s20, %s27
      %p102 = scmp.eq.s32.totalorder %s101, 0
      %s104 = sadd.s32 %s103, 1
      %s105 = scalar_select %p102, %s103, %s104
      %p108 = pneg %p102
      %p109 = scmp.eq.s32.totalorder %s20, 1
      %p110 = por %p108, %p109
      %p111 = scmp.ne.s32.totalorder %s103, %s106
      %p112 = scmp.eq.s32.totalorder %s20, 0
      %p113 = por %p111, %p112
      %p114 = scmp.ne.s32.totalorder %s103, %s106
      %p115 = scmp.eq.s32.totalorder %s25, 1
      %p116 = por %p114, %p115
      %p117 = scmp.ne.s32.totalorder %s106, %s107
      %p118 = scmp.eq.s32.totalorder %s25, 0
      %p119 = por %p117, %p118
      %p120 = scmp.ne.s32.totalorder %s106, %s107
      %p121 = scmp.eq.s32.totalorder %s26, 1
      %p122 = por %p120, %p121
      %p124 = scmp.ne.s32.totalorder %s107, %s123
      %p125 = scmp.eq.s32.totalorder %s26, 0
      %p126 = por %p124, %p125
      %p127 = scmp.le.s32.totalorder 1, %s20
      %p128 = scmp.lt.s32.totalorder %s20, 3
      %p129 = pnand %p127, %p128
      %p130 = pneg %p129
      // Predicated region
      $region9: #{res_block.3} parent=5 // pred_check
        _
      $region10: #{res_block.3} parent=5 // pred_check_branch
        %132 = sbr.rel (%p129) target = $region12
      $region11: #{res_block.3} parent=5 // pred_region
        %s133 = ssub.s32 %s20, 1
        // Predicated region
        $region13: #{res_block.3} parent=11 // pred_check
          %p134 = pneg %p67
        $region14: #{res_block.3} parent=11 // pred_check_branch
          %136 = sbr.rel (%p134) target = $region16
        $region15: #{res_block.3} parent=11 // pred_region
          %s138 = ssub.s32 18432, 18432
          %139 = vsyncadd [#allocation6], %s138
          %s140 = sshll.u32 [#allocation5], 4
          %s141 = int_to_ptr.vmem [resolvable:$true] %s140
          %146 = dma.hbm_to_vmem [thread:$0]  %s1, 18432, %s141, [#allocation6], 128, 128, 8
        $region16: #{res_block.3} parent=11 // pred_fallthru
          _
      $region12: #{res_block.3} parent=5 // pred_fallthru
        _
      %p147 = scmp.lt.s32.totalorder %s20, 2
      // Predicated region
      $region17: #{res_block.3} parent=5 // pred_check
        %p148 = pneg %p147
      $region18: #{res_block.3} parent=5 // pred_check_branch
        %150 = sbr.rel (%p148) target = $region20
      $region19: #{res_block.3} parent=5 // pred_region
        // Predicated region
        $region21: #{res_block.3} parent=19 // pred_check
          %p151 = pneg %p40
        $region22: #{res_block.3} parent=19 // pred_check_branch
          %153 = sbr.rel (%p151) target = $region24
        $region23: #{res_block.3} parent=19 // pred_region
          %s154 = sand.u32 %s30, 1
          %s155 = scalar_lea.sflag [#allocation3], %s154
          %s156 = sand.u32 %s30, 1
          %s157 = smul.addr %s156, 432
          %s158 = scalar_lea.vmem [#allocation2], %s157
          %s160 = ssub.s32 6912, 6912
          %161 = vsyncadd %s155, %s160
          %s162 = smul.addr %s20, 54
          %s163 = smul.addr %s162, 128
          %s164 = scalar_lea.hbm %s0, %s163
          %s165 = sshll.u32 %s158, 4
          %s166 = int_to_ptr.vmem [resolvable:$true] %s165
          %171 = dma.hbm_to_vmem [thread:$0]  %s164, 6912, %s166, %s155, 128, 128, 8
        $region24: #{res_block.3} parent=19 // pred_fallthru
          _
      $region20: #{res_block.3} parent=5 // pred_fallthru
        _
      %p172 = scmp.le.s32.totalorder 1, %s20
      %p173 = scmp.lt.s32.totalorder %s20, 3
      %p174 = pnand %p172, %p173
      %p175 = pneg %p174
      // Predicated region
      $region25: #{res_block.3} parent=5 // pred_check
        _
      $region26: #{res_block.3} parent=5 // pred_check_branch
        %177 = sbr.rel (%p174) target = $region28
      $region27: #{res_block.3} parent=5 // pred_region
        %s178 = ssub.s32 %s20, 1
        %s179 = sand.u32 %s33, 1
        %s180 = scalar_lea.sflag [#allocation3], %s179
        %s181 = sand.u32 %s33, 1
        %s182 = smul.addr %s181, 432
        %s183 = scalar_lea.vmem [#allocation2], %s182
        // Predicated region
        $region29: #{res_block.3} parent=27 // pred_check
          %p184 = pneg %p46
        $region30: #{res_block.3} parent=27 // pred_check_branch
          %186 = sbr.rel (%p184) target = $region32
        $region31: #{res_block.3} parent=27 // pred_region
          %187 = dma.done %s180, 6912
        $region32: #{res_block.3} parent=27 // pred_fallthru
          _
        // Predicated region
        $region33: #{res_block.3} parent=27 // pred_check
          %p188 = pneg %p67
        $region34: #{res_block.3} parent=27 // pred_check_branch
          %190 = sbr.rel (%p188) target = $region36
        $region35: #{res_block.3} parent=27 // pred_region
          %191 = dma.done [#allocation6], 18432
        $region36: #{res_block.3} parent=27 // pred_fallthru
          _
        %s192 = sand.u32 %s33, 1
        %s193 = scalar_lea.sflag [#allocation3], %s192
        %s194 = sand.u32 %s33, 1
        %s195 = smul.addr %s194, 432
        %s196 = scalar_lea.vmem [#allocation2], %s195
        %p197 = pneg %p46
        %p198 = pneg %p43
        %p199 = pneg %p67
        %p200 = pneg %p64
        %p201 = pneg %p93
        %p202 = pneg %p90
        %s203 = sand.u32 %s80, 1
        %s204 = scalar_lea.sflag [#allocation4], %s203
        %s205 = sand.u32 %s80, 1
        %s206 = smul.addr %s205, 256
        %s207 = scalar_lea.vmem [#allocation7], %s206
        %p208 = pneg %p119
        %p209 = pneg %p116
        %s210 = sand.u32 %s106, 1
        %s211 = scalar_lea.sflag [#allocation9], %s210
        %s212 = sand.u32 %s106, 1
        %s213 = smul.addr %s212, 2
        %s214 = scalar_lea.vmem [#allocation8], %s213
        loop: start=0, step=1, limit=16
        $region37: #{res_block.3} parent=27 // loop_pre_header
          _
        $region38: #{res_block.3} parent=27 // loop_header
          %s216 = sphi 0, %s220
          %p217 = scmp.ge.s32.totalorder %s216, 16
          %v221 = vphi 0.0, %v1149
        $region39: #{res_block.3} parent=27 // loop_header_branch
          %219 = sbr.rel (%p217) target = $region43
        $region40: #{res_block.3} parent=27 // loop_body
          %s222 = smul.u32 %s216, 24
          %s223 = scalar_lea.vmem %s183, %s222 [#allocation2]
          %v224 = vld [vmem:[%s223] sm:$0xff]
          %v225 = vld [vmem:[%s223 + $0x8] sm:$0xff]
          %v226 = vld [vmem:[%s223 + $0x10] sm:$0x3]
          %v227 = vld [vmem:[%s223 + $0x18] sm:$0xff]
          %v228 = vld [vmem:[%s223 + $0x20] sm:$0xff]
          %v229 = vld [vmem:[%s223 + $0x28] sm:$0x3]
          %v230 = vld [vmem:[%s223 + $0x30] sm:$0xff]
          %v231 = vld [vmem:[%s223 + $0x38] sm:$0xff]
          %v232 = vld [vmem:[%s223 + $0x40] sm:$0x3]
          %v233 = vld [vmem:[#allocation5] sm:$0xff]
          %v234 = vld [vmem:[#allocation5 + $0x8] sm:$0xff]
          %v235 = vld [vmem:[#allocation5 + $0x10] sm:$0xff]
          %v236 = vld [vmem:[#allocation5 + $0x18] sm:$0xff]
          %v237 = vld [vmem:[#allocation5 + $0x20] sm:$0xff]
          %v238 = vld [vmem:[#allocation5 + $0x28] sm:$0xff]
          %v239 = vld [vmem:[#allocation5 + $0x30] sm:$0xff]
          %v240 = vld [vmem:[#allocation5 + $0x38] sm:$0xff]
          %v241 = vld [vmem:[#allocation5 + $0x40] sm:$0xff]
          %v242 = vld [vmem:[#allocation5 + $0x48] sm:$0xff]
          %v243 = vld [vmem:[#allocation5 + $0x50] sm:$0xff]
          %v244 = vld [vmem:[#allocation5 + $0x58] sm:$0xff]
          %v245 = vld [vmem:[#allocation5 + $0x60] sm:$0xff]
          %v246 = vld [vmem:[#allocation5 + $0x68] sm:$0xff]
          %v247 = vld [vmem:[#allocation5 + $0x70] sm:$0xff]
          %v248 = vld [vmem:[#allocation5 + $0x78] sm:$0xff]
          %s249 = scalar_lea.vmem [#allocation5], 128
          %v250 = vld [vmem:[%s249] sm:$0xff]
          %v251 = vld [vmem:[%s249 + $0x8] sm:$0xff]
          %v252 = vld [vmem:[%s249 + $0x10] sm:$0xff]
          %v253 = vld [vmem:[%s249 + $0x18] sm:$0xff]
          %v254 = vld [vmem:[%s249 + $0x20] sm:$0xff]
          %v255 = vld [vmem:[%s249 + $0x28] sm:$0xff]
          %v256 = vld [vmem:[%s249 + $0x30] sm:$0xff]
          %v257 = vld [vmem:[%s249 + $0x38] sm:$0xff]
          %v258 = vld [vmem:[%s249 + $0x40] sm:$0xff]
          %v259 = vld [vmem:[%s249 + $0x48] sm:$0xff]
          %v260 = vld [vmem:[%s249 + $0x50] sm:$0xff]
          %v261 = vld [vmem:[%s249 + $0x58] sm:$0xff]
          %v262 = vld [vmem:[%s249 + $0x60] sm:$0xff]
          %v263 = vld [vmem:[%s249 + $0x68] sm:$0xff]
          %v264 = vld [vmem:[%s249 + $0x70] sm:$0xff]
          %v265 = vld [vmem:[%s249 + $0x78] sm:$0xff]
          %vm269 = vcmask 1046528
          %v270 = vrot.slane %v224, 1
          %v271 = vrot.slane %v225, 1
          %v272 = vsel %vm269, %v270, %v271
          %v273 = vrot.slane %v226, 1
          %v274 = vsel %vm269, %v271, %v273
          %277 = vmatprep.subr.mxu0 0.0
          %278 = vmatpush1.msra.mxu0 %v250
          %279 = vmatprep.subr.mxu0 0.0
          %280 = vmatpush1.msra.mxu0 %v251
          %281 = vmatprep.subr.mxu0 0.0
          %282 = vmatpush1.msra.mxu0 %v252
          %283 = vmatprep.subr.mxu0 0.0
          %284 = vmatpush1.msra.mxu0 %v253
          %285 = vmatprep.subr.mxu0 0.0
          %286 = vmatpush1.msra.mxu0 %v254
          %287 = vmatprep.subr.mxu0 0.0
          %288 = vmatpush1.msra.mxu0 %v255
          %289 = vmatprep.subr.mxu0 0.0
          %290 = vmatpush1.msra.mxu0 %v256
          %291 = vmatprep.subr.mxu0 0.0
          %292 = vmatpush1.msra.mxu0 %v257
          %293 = vmatprep.subr.mxu0 0.0
          %294 = vmatpush1.msra.mxu0 %v258
          %295 = vmatprep.subr.mxu0 0.0
          %296 = vmatpush1.msra.mxu0 %v259
          %297 = vmatprep.subr.mxu0 0.0
          %298 = vmatpush1.msra.mxu0 %v260
          %299 = vmatprep.subr.mxu0 0.0
          %300 = vmatpush1.msra.mxu0 %v261
          %301 = vmatprep.subr.mxu0 0.0
          %302 = vmatpush1.msra.mxu0 %v262
          %303 = vmatprep.subr.mxu0 0.0
          %304 = vmatpush1.msra.mxu0 %v263
          %305 = vmatprep.subr.mxu0 0.0
          %306 = vmatpush1.msra.mxu0 %v264
          %307 = vmatprep.subr.mxu0 0.0
          %308 = vmatpush1.msra.mxu0 %v265
          %309 = vmatprep.subr.mxu0 0.0
          %310 = vmatpush1.msra.mxu0 0.0
          %311 = vmatprep.subr.mxu0 0.0
          %312 = vmatpush1.msra.mxu0 0.0
          %313 = vmatprep.subr.mxu0 0.0
          %314 = vmatpush1.msra.mxu0 0.0
          %315 = vmatprep.subr.mxu0 0.0
          %316 = vmatpush1.msra.mxu0 0.0
          %317 = vmatprep.subr.mxu0 0.0
          %318 = vmatpush1.msra.mxu0 0.0
          %319 = vmatprep.subr.mxu0 0.0
          %320 = vmatpush1.msra.mxu0 0.0
          %321 = vmatprep.subr.mxu0 0.0
          %322 = vmatpush1.msra.mxu0 0.0
          %323 = vmatprep.subr.mxu0 0.0
          %324 = vmatpush1.msra.mxu0 0.0
          %325 = vmatprep.subr.mxu0 0.0
          %326 = vmatpush1.msra.mxu0 0.0
          %327 = vmatprep.subr.mxu0 0.0
          %328 = vmatpush1.msra.mxu0 0.0
          %329 = vmatprep.subr.mxu0 0.0
          %330 = vmatpush1.msra.mxu0 0.0
          %331 = vmatprep.subr.mxu0 0.0
          %332 = vmatpush1.msra.mxu0 0.0
          %333 = vmatprep.subr.mxu0 0.0
          %334 = vmatpush1.msra.mxu0 0.0
          %335 = vmatprep.subr.mxu0 0.0
          %336 = vmatpush1.msra.mxu0 0.0
          %337 = vmatprep.subr.mxu0 0.0
          %338 = vmatpush1.msra.mxu0 0.0
          %339 = vmatprep.subr.mxu0 0.0
          %340 = vmatpush1.msra.mxu0 0.0
          %341 = vmatprep.mubr.f32.mxu0 0.0
          %342 = vmatmul.mubr.f32.gmra.mrb[0].mxu0 %v272
          %v343 = vpop.f32.mrb[0].mxu0
          %v344 = vadd.f32 0.0, %v343
          %v345 = vpop.f32.mrb[0].mxu0
          %346 = vmatprep.mubr.f32.mxu0 0.0
          %347 = vmatmul.mubr.f32.gmra.mrb[0].mxu0 %v274
          %v348 = vpop.f32.mrb[0].mxu0
          %v349 = vadd.f32 0.0, %v348
          %v350 = vpop.f32.mrb[0].mxu0
          %351 = vdwg.mxu0
          %352 = vmatprep.subr.mxu0 0.0
          %353 = vmatpush1.msra.mxu0 %v233
          %354 = vmatprep.subr.mxu0 0.0
          %355 = vmatpush1.msra.mxu0 %v234
          %356 = vmatprep.subr.mxu0 0.0
          %357 = vmatpush1.msra.mxu0 %v235
          %358 = vmatprep.subr.mxu0 0.0
          %359 = vmatpush1.msra.mxu0 %v236
          %360 = vmatprep.subr.mxu0 0.0
          %361 = vmatpush1.msra.mxu0 %v237
          %362 = vmatprep.subr.mxu0 0.0
          %363 = vmatpush1.msra.mxu0 %v238
          %364 = vmatprep.subr.mxu0 0.0
          %365 = vmatpush1.msra.mxu0 %v239
          %366 = vmatprep.subr.mxu0 0.0
          %367 = vmatpush1.msra.mxu0 %v240
          %368 = vmatprep.subr.mxu0 0.0
          %369 = vmatpush1.msra.mxu0 %v241
          %370 = vmatprep.subr.mxu0 0.0
          %371 = vmatpush1.msra.mxu0 %v242
          %372 = vmatprep.subr.mxu0 0.0
          %373 = vmatpush1.msra.mxu0 %v243
          %374 = vmatprep.subr.mxu0 0.0
          %375 = vmatpush1.msra.mxu0 %v244
          %376 = vmatprep.subr.mxu0 0.0
          %377 = vmatpush1.msra.mxu0 %v245
          %378 = vmatprep.subr.mxu0 0.0
          %379 = vmatpush1.msra.mxu0 %v246
          %380 = vmatprep.subr.mxu0 0.0
          %381 = vmatpush1.msra.mxu0 %v247
          %382 = vmatprep.subr.mxu0 0.0
          %383 = vmatpush1.msra.mxu0 %v248
          %384 = vmatprep.subr.mxu0 0.0
          %385 = vmatpush1.msra.mxu0 0.0
          %386 = vmatprep.subr.mxu0 0.0
          %387 = vmatpush1.msra.mxu0 0.0
          %388 = vmatprep.subr.mxu0 0.0
          %389 = vmatpush1.msra.mxu0 0.0
          %390 = vmatprep.subr.mxu0 0.0
          %391 = vmatpush1.msra.mxu0 0.0
          %392 = vmatprep.subr.mxu0 0.0
          %393 = vmatpush1.msra.mxu0 0.0
          %394 = vmatprep.subr.mxu0 0.0
          %395 = vmatpush1.msra.mxu0 0.0
          %396 = vmatprep.subr.mxu0 0.0
          %397 = vmatpush1.msra.mxu0 0.0
          %398 = vmatprep.subr.mxu0 0.0
          %399 = vmatpush1.msra.mxu0 0.0
          %400 = vmatprep.subr.mxu0 0.0
          %401 = vmatpush1.msra.mxu0 0.0
          %402 = vmatprep.subr.mxu0 0.0
          %403 = vmatpush1.msra.mxu0 0.0
          %404 = vmatprep.subr.mxu0 0.0
          %405 = vmatpush1.msra.mxu0 0.0
          %406 = vmatprep.subr.mxu0 0.0
          %407 = vmatpush1.msra.mxu0 0.0
          %408 = vmatprep.subr.mxu0 0.0
          %409 = vmatpush1.msra.mxu0 0.0
          %410 = vmatprep.subr.mxu0 0.0
          %411 = vmatpush1.msra.mxu0 0.0
          %412 = vmatprep.subr.mxu0 0.0
          %413 = vmatpush1.msra.mxu0 0.0
          %414 = vmatprep.subr.mxu0 0.0
          %415 = vmatpush1.msra.mxu0 0.0
          %416 = vmatprep.mubr.f32.mxu0 0.0
          %417 = vmatmul.mubr.f32.gmra.mrb[0].mxu0 %v224
          %v418 = vpop.f32.mrb[0].mxu0
          %v419 = vadd.f32 %v344, %v418
          %v420 = vpop.f32.mrb[0].mxu0
          %421 = vmatprep.mubr.f32.mxu0 0.0
          %422 = vmatmul.mubr.f32.gmra.mrb[0].mxu0 %v225
          %v423 = vpop.f32.mrb[0].mxu0
          %v424 = vadd.f32 %v349, %v423
          %v425 = vpop.f32.mrb[0].mxu0
          %426 = vdwg.mxu0
          %s427 = scalar_lea.vmem [#allocation5], 256
          %v428 = vld [vmem:[%s427] sm:$0xff]
          %v429 = vld [vmem:[%s427 + $0x8] sm:$0xff]
          %v430 = vld [vmem:[%s427 + $0x10] sm:$0xff]
          %v431 = vld [vmem:[%s427 + $0x18] sm:$0xff]
          %v432 = vld [vmem:[%s427 + $0x20] sm:$0xff]
          %v433 = vld [vmem:[%s427 + $0x28] sm:$0xff]
          %v434 = vld [vmem:[%s427 + $0x30] sm:$0xff]
          %v435 = vld [vmem:[%s427 + $0x38] sm:$0xff]
          %v436 = vld [vmem:[%s427 + $0x40] sm:$0xff]
          %v437 = vld [vmem:[%s427 + $0x48] sm:$0xff]
          %v438 = vld [vmem:[%s427 + $0x50] sm:$0xff]
          %v439 = vld [vmem:[%s427 + $0x58] sm:$0xff]
          %v440 = vld [vmem:[%s427 + $0x60] sm:$0xff]
          %v441 = vld [vmem:[%s427 + $0x68] sm:$0xff]
          %v442 = vld [vmem:[%s427 + $0x70] sm:$0xff]
          %v443 = vld [vmem:[%s427 + $0x78] sm:$0xff]
          %vm444 = vcmask 1045504
          %v445 = vrot.slane %v224, 2
          %v446 = vrot.slane %v225, 2
          %v447 = vsel %vm444, %v445, %v446
          %v448 = vrot.slane %v226, 2
          %v449 = vsel %vm444, %v446, %v448
          %452 = vmatprep.subr.mxu0 0.0
          %453 = vmatpush1.msra.mxu0 %v428
          %454 = vmatprep.subr.mxu0 0.0
          %455 = vmatpush1.msra.mxu0 %v429
          %456 = vmatprep.subr.mxu0 0.0
          %457 = vmatpush1.msra.mxu0 %v430
          %458 = vmatprep.subr.mxu0 0.0
          %459 = vmatpush1.msra.mxu0 %v431
          %460 = vmatprep.subr.mxu0 0.0
          %461 = vmatpush1.msra.mxu0 %v432
          %462 = vmatprep.subr.mxu0 0.0
          %463 = vmatpush1.msra.mxu0 %v433
          %464 = vmatprep.subr.mxu0 0.0
          %465 = vmatpush1.msra.mxu0 %v434
          %466 = vmatprep.subr.mxu0 0.0
          %467 = vmatpush1.msra.mxu0 %v435
          %468 = vmatprep.subr.mxu0 0.0
          %469 = vmatpush1.msra.mxu0 %v436
          %470 = vmatprep.subr.mxu0 0.0
          %471 = vmatpush1.msra.mxu0 %v437
          %472 = vmatprep.subr.mxu0 0.0
          %473 = vmatpush1.msra.mxu0 %v438
          %474 = vmatprep.subr.mxu0 0.0
          %475 = vmatpush1.msra.mxu0 %v439
          %476 = vmatprep.subr.mxu0 0.0
          %477 = vmatpush1.msra.mxu0 %v440
          %478 = vmatprep.subr.mxu0 0.0
          %479 = vmatpush1.msra.mxu0 %v441
          %480 = vmatprep.subr.mxu0 0.0
          %481 = vmatpush1.msra.mxu0 %v442
          %482 = vmatprep.subr.mxu0 0.0
          %483 = vmatpush1.msra.mxu0 %v443
          %484 = vmatprep.subr.mxu0 0.0
          %485 = vmatpush1.msra.mxu0 0.0
          %486 = vmatprep.subr.mxu0 0.0
          %487 = vmatpush1.msra.mxu0 0.0
          %488 = vmatprep.subr.mxu0 0.0
          %489 = vmatpush1.msra.mxu0 0.0
          %490 = vmatprep.subr.mxu0 0.0
          %491 = vmatpush1.msra.mxu0 0.0
          %492 = vmatprep.subr.mxu0 0.0
          %493 = vmatpush1.msra.mxu0 0.0
          %494 = vmatprep.subr.mxu0 0.0
          %495 = vmatpush1.msra.mxu0 0.0
          %496 = vmatprep.subr.mxu0 0.0
          %497 = vmatpush1.msra.mxu0 0.0
          %498 = vmatprep.subr.mxu0 0.0
          %499 = vmatpush1.msra.mxu0 0.0
          %500 = vmatprep.subr.mxu0 0.0
          %501 = vmatpush1.msra.mxu0 0.0
          %502 = vmatprep.subr.mxu0 0.0
          %503 = vmatpush1.msra.mxu0 0.0
          %504 = vmatprep.subr.mxu0 0.0
          %505 = vmatpush1.msra.mxu0 0.0
          %506 = vmatprep.subr.mxu0 0.0
          %507 = vmatpush1.msra.mxu0 0.0
          %508 = vmatprep.subr.mxu0 0.0
          %509 = vmatpush1.msra.mxu0 0.0
          %510 = vmatprep.subr.mxu0 0.0
          %511 = vmatpush1.msra.mxu0 0.0
          %512 = vmatprep.subr.mxu0 0.0
          %513 = vmatpush1.msra.mxu0 0.0
          %514 = vmatprep.subr.mxu0 0.0
          %515 = vmatpush1.msra.mxu0 0.0
          %516 = vmatprep.mubr.f32.mxu0 0.0
          %517 = vmatmul.mubr.f32.gmra.mrb[0].mxu0 %v447
          %v518 = vpop.f32.mrb[0].mxu0
          %v519 = vadd.f32 0.0, %v518
          %v520 = vpop.f32.mrb[0].mxu0
          %521 = vmatprep.mubr.f32.mxu0 0.0
          %522 = vmatmul.mubr.f32.gmra.mrb[0].mxu0 %v449
          %v523 = vpop.f32.mrb[0].mxu0
          %v524 = vadd.f32 0.0, %v523
          %v525 = vpop.f32.mrb[0].mxu0
          %526 = vdwg.mxu0
          %v527 = vadd.f32 %v419, %v519
          %v528 = vadd.f32 %v424, %v524
          %s529 = scalar_lea.vmem [#allocation5], 384
          %v530 = vld [vmem:[%s529] sm:$0xff]
          %v531 = vld [vmem:[%s529 + $0x8] sm:$0xff]
          %v532 = vld [vmem:[%s529 + $0x10] sm:$0xff]
          %v533 = vld [vmem:[%s529 + $0x18] sm:$0xff]
          %v534 = vld [vmem:[%s529 + $0x20] sm:$0xff]
          %v535 = vld [vmem:[%s529 + $0x28] sm:$0xff]
          %v536 = vld [vmem:[%s529 + $0x30] sm:$0xff]
          %v537 = vld [vmem:[%s529 + $0x38] sm:$0xff]
          %v538 = vld [vmem:[%s529 + $0x40] sm:$0xff]
          %v539 = vld [vmem:[%s529 + $0x48] sm:$0xff]
          %v540 = vld [vmem:[%s529 + $0x50] sm:$0xff]
          %v541 = vld [vmem:[%s529 + $0x58] sm:$0xff]
          %v542 = vld [vmem:[%s529 + $0x60] sm:$0xff]
          %v543 = vld [vmem:[%s529 + $0x68] sm:$0xff]
          %v544 = vld [vmem:[%s529 + $0x70] sm:$0xff]
          %v545 = vld [vmem:[%s529 + $0x78] sm:$0xff]
          %546 = vmatprep.subr.mxu0 0.0
          %547 = vmatpush1.msra.mxu0 %v530
          %548 = vmatprep.subr.mxu0 0.0
          %549 = vmatpush1.msra.mxu0 %v531
          %550 = vmatprep.subr.mxu0 0.0
          %551 = vmatpush1.msra.mxu0 %v532
          %552 = vmatprep.subr.mxu0 0.0
          %553 = vmatpush1.msra.mxu0 %v533
          %554 = vmatprep.subr.mxu0 0.0
          %555 = vmatpush1.msra.mxu0 %v534
          %556 = vmatprep.subr.mxu0 0.0
          %557 = vmatpush1.msra.mxu0 %v535
          %558 = vmatprep.subr.mxu0 0.0
          %559 = vmatpush1.msra.mxu0 %v536
          %560 = vmatprep.subr.mxu0 0.0
          %561 = vmatpush1.msra.mxu0 %v537
          %562 = vmatprep.subr.mxu0 0.0
          %563 = vmatpush1.msra.mxu0 %v538
          %564 = vmatprep.subr.mxu0 0.0
          %565 = vmatpush1.msra.mxu0 %v539
          %566 = vmatprep.subr.mxu0 0.0
          %567 = vmatpush1.msra.mxu0 %v540
          %568 = vmatprep.subr.mxu0 0.0
          %569 = vmatpush1.msra.mxu0 %v541
          %570 = vmatprep.subr.mxu0 0.0
          %571 = vmatpush1.msra.mxu0 %v542
          %572 = vmatprep.subr.mxu0 0.0
          %573 = vmatpush1.msra.mxu0 %v543
          %574 = vmatprep.subr.mxu0 0.0
          %575 = vmatpush1.msra.mxu0 %v544
          %576 = vmatprep.subr.mxu0 0.0
          %577 = vmatpush1.msra.mxu0 %v545
          %578 = vmatprep.subr.mxu0 0.0
          %579 = vmatpush1.msra.mxu0 0.0
          %580 = vmatprep.subr.mxu0 0.0
          %581 = vmatpush1.msra.mxu0 0.0
          %582 = vmatprep.subr.mxu0 0.0
          %583 = vmatpush1.msra.mxu0 0.0
          %584 = vmatprep.subr.mxu0 0.0
          %585 = vmatpush1.msra.mxu0 0.0
          %586 = vmatprep.subr.mxu0 0.0
          %587 = vmatpush1.msra.mxu0 0.0
          %588 = vmatprep.subr.mxu0 0.0
          %589 = vmatpush1.msra.mxu0 0.0
          %590 = vmatprep.subr.mxu0 0.0
          %591 = vmatpush1.msra.mxu0 0.0
          %592 = vmatprep.subr.mxu0 0.0
          %593 = vmatpush1.msra.mxu0 0.0
          %594 = vmatprep.subr.mxu0 0.0
          %595 = vmatpush1.msra.mxu0 0.0
          %596 = vmatprep.subr.mxu0 0.0
          %597 = vmatpush1.msra.mxu0 0.0
          %598 = vmatprep.subr.mxu0 0.0
          %599 = vmatpush1.msra.mxu0 0.0
          %600 = vmatprep.subr.mxu0 0.0
          %601 = vmatpush1.msra.mxu0 0.0
          %602 = vmatprep.subr.mxu0 0.0
          %603 = vmatpush1.msra.mxu0 0.0
          %604 = vmatprep.subr.mxu0 0.0
          %605 = vmatpush1.msra.mxu0 0.0
          %606 = vmatprep.subr.mxu0 0.0
          %607 = vmatpush1.msra.mxu0 0.0
          %608 = vmatprep.subr.mxu0 0.0
          %609 = vmatpush1.msra.mxu0 0.0
          %610 = vmatprep.mubr.f32.mxu0 0.0
          %611 = vmatmul.mubr.f32.gmra.mrb[0].mxu0 %v227
          %v612 = vpop.f32.mrb[0].mxu0
          %v613 = vadd.f32 0.0, %v612
          %v614 = vpop.f32.mrb[0].mxu0
          %615 = vmatprep.mubr.f32.mxu0 0.0
          %616 = vmatmul.mubr.f32.gmra.mrb[0].mxu0 %v228
          %v617 = vpop.f32.mrb[0].mxu0
          %v618 = vadd.f32 0.0, %v617
          %v619 = vpop.f32.mrb[0].mxu0
          %620 = vdwg.mxu0
          %v621 = vadd.f32 %v527, %v613
          %v622 = vadd.f32 %v528, %v618
          %s623 = scalar_lea.vmem [#allocation5], 512
          %v624 = vld [vmem:[%s623] sm:$0xff]
          %v625 = vld [vmem:[%s623 + $0x8] sm:$0xff]
          %v626 = vld [vmem:[%s623 + $0x10] sm:$0xff]
          %v627 = vld [vmem:[%s623 + $0x18] sm:$0xff]
          %v628 = vld [vmem:[%s623 + $0x20] sm:$0xff]
          %v629 = vld [vmem:[%s623 + $0x28] sm:$0xff]
          %v630 = vld [vmem:[%s623 + $0x30] sm:$0xff]
          %v631 = vld [vmem:[%s623 + $0x38] sm:$0xff]
          %v632 = vld [vmem:[%s623 + $0x40] sm:$0xff]
          %v633 = vld [vmem:[%s623 + $0x48] sm:$0xff]
          %v634 = vld [vmem:[%s623 + $0x50] sm:$0xff]
          %v635 = vld [vmem:[%s623 + $0x58] sm:$0xff]
          %v636 = vld [vmem:[%s623 + $0x60] sm:$0xff]
          %v637 = vld [vmem:[%s623 + $0x68] sm:$0xff]
          %v638 = vld [vmem:[%s623 + $0x70] sm:$0xff]
          %v639 = vld [vmem:[%s623 + $0x78] sm:$0xff]
          %v643 = vrot.slane %v227, 1
          %v644 = vrot.slane %v228, 1
          %v645 = vsel %vm269, %v643, %v644
          %v646 = vrot.slane %v229, 1
          %v647 = vsel %vm269, %v644, %v646
          %650 = vmatprep.subr.mxu0 0.0
          %651 = vmatpush1.msra.mxu0 %v624
          %652 = vmatprep.subr.mxu0 0.0
          %653 = vmatpush1.msra.mxu0 %v625
          %654 = vmatprep.subr.mxu0 0.0
          %655 = vmatpush1.msra.mxu0 %v626
          %656 = vmatprep.subr.mxu0 0.0
          %657 = vmatpush1.msra.mxu0 %v627
          %658 = vmatprep.subr.mxu0 0.0
          %659 = vmatpush1.msra.mxu0 %v628
          %660 = vmatprep.subr.mxu0 0.0
          %661 = vmatpush1.msra.mxu0 %v629
          %662 = vmatprep.subr.mxu0 0.0
          %663 = vmatpush1.msra.mxu0 %v630
          %664 = vmatprep.subr.mxu0 0.0
          %665 = vmatpush1.msra.mxu0 %v631
          %666 = vmatprep.subr.mxu0 0.0
          %667 = vmatpush1.msra.mxu0 %v632
          %668 = vmatprep.subr.mxu0 0.0
          %669 = vmatpush1.msra.mxu0 %v633
          %670 = vmatprep.subr.mxu0 0.0
          %671 = vmatpush1.msra.mxu0 %v634
          %672 = vmatprep.subr.mxu0 0.0
          %673 = vmatpush1.msra.mxu0 %v635
          %674 = vmatprep.subr.mxu0 0.0
          %675 = vmatpush1.msra.mxu0 %v636
          %676 = vmatprep.subr.mxu0 0.0
          %677 = vmatpush1.msra.mxu0 %v637
          %678 = vmatprep.subr.mxu0 0.0
          %679 = vmatpush1.msra.mxu0 %v638
          %680 = vmatprep.subr.mxu0 0.0
          %681 = vmatpush1.msra.mxu0 %v639
          %682 = vmatprep.subr.mxu0 0.0
          %683 = vmatpush1.msra.mxu0 0.0
          %684 = vmatprep.subr.mxu0 0.0
          %685 = vmatpush1.msra.mxu0 0.0
          %686 = vmatprep.subr.mxu0 0.0
          %687 = vmatpush1.msra.mxu0 0.0
          %688 = vmatprep.subr.mxu0 0.0
          %689 = vmatpush1.msra.mxu0 0.0
          %690 = vmatprep.subr.mxu0 0.0
          %691 = vmatpush1.msra.mxu0 0.0
          %692 = vmatprep.subr.mxu0 0.0
          %693 = vmatpush1.msra.mxu0 0.0
          %694 = vmatprep.subr.mxu0 0.0
          %695 = vmatpush1.msra.mxu0 0.0
          %696 = vmatprep.subr.mxu0 0.0
          %697 = vmatpush1.msra.mxu0 0.0
          %698 = vmatprep.subr.mxu0 0.0
          %699 = vmatpush1.msra.mxu0 0.0
          %700 = vmatprep.subr.mxu0 0.0
          %701 = vmatpush1.msra.mxu0 0.0
          %702 = vmatprep.subr.mxu0 0.0
          %703 = vmatpush1.msra.mxu0 0.0
          %704 = vmatprep.subr.mxu0 0.0
          %705 = vmatpush1.msra.mxu0 0.0
          %706 = vmatprep.subr.mxu0 0.0
          %707 = vmatpush1.msra.mxu0 0.0
          %708 = vmatprep.subr.mxu0 0.0
          %709 = vmatpush1.msra.mxu0 0.0
          %710 = vmatprep.subr.mxu0 0.0
          %711 = vmatpush1.msra.mxu0 0.0
          %712 = vmatprep.subr.mxu0 0.0
          %713 = vmatpush1.msra.mxu0 0.0
          %714 = vmatprep.mubr.f32.mxu0 0.0
          %715 = vmatmul.mubr.f32.gmra.mrb[0].mxu0 %v645
          %v716 = vpop.f32.mrb[0].mxu0
          %v717 = vadd.f32 0.0, %v716
          %v718 = vpop.f32.mrb[0].mxu0
          %719 = vmatprep.mubr.f32.mxu0 0.0
          %720 = vmatmul.mubr.f32.gmra.mrb[0].mxu0 %v647
          %v721 = vpop.f32.mrb[0].mxu0
          %v722 = vadd.f32 0.0, %v721
          %v723 = vpop.f32.mrb[0].mxu0
          %724 = vdwg.mxu0
          %v725 = vadd.f32 %v621, %v717
          %v726 = vadd.f32 %v622, %v722
          %s727 = scalar_lea.vmem [#allocation5], 640
          %v728 = vld [vmem:[%s727] sm:$0xff]
          %v729 = vld [vmem:[%s727 + $0x8] sm:$0xff]
          %v730 = vld [vmem:[%s727 + $0x10] sm:$0xff]
          %v731 = vld [vmem:[%s727 + $0x18] sm:$0xff]
          %v732 = vld [vmem:[%s727 + $0x20] sm:$0xff]
          %v733 = vld [vmem:[%s727 + $0x28] sm:$0xff]
          %v734 = vld [vmem:[%s727 + $0x30] sm:$0xff]
          %v735 = vld [vmem:[%s727 + $0x38] sm:$0xff]
          %v736 = vld [vmem:[%s727 + $0x40] sm:$0xff]
          %v737 = vld [vmem:[%s727 + $0x48] sm:$0xff]
          %v738 = vld [vmem:[%s727 + $0x50] sm:$0xff]
          %v739 = vld [vmem:[%s727 + $0x58] sm:$0xff]
          %v740 = vld [vmem:[%s727 + $0x60] sm:$0xff]
          %v741 = vld [vmem:[%s727 + $0x68] sm:$0xff]
          %v742 = vld [vmem:[%s727 + $0x70] sm:$0xff]
          %v743 = vld [vmem:[%s727 + $0x78] sm:$0xff]
          %v744 = vrot.slane %v227, 2
          %v745 = vrot.slane %v228, 2
          %v746 = vsel %vm444, %v744, %v745
          %v747 = vrot.slane %v229, 2
          %v748 = vsel %vm444, %v745, %v747
          %751 = vmatprep.subr.mxu0 0.0
          %752 = vmatpush1.msra.mxu0 %v728
          %753 = vmatprep.subr.mxu0 0.0
          %754 = vmatpush1.msra.mxu0 %v729
          %755 = vmatprep.subr.mxu0 0.0
          %756 = vmatpush1.msra.mxu0 %v730
          %757 = vmatprep.subr.mxu0 0.0
          %758 = vmatpush1.msra.mxu0 %v731
          %759 = vmatprep.subr.mxu0 0.0
          %760 = vmatpush1.msra.mxu0 %v732
          %761 = vmatprep.subr.mxu0 0.0
          %762 = vmatpush1.msra.mxu0 %v733
          %763 = vmatprep.subr.mxu0 0.0
          %764 = vmatpush1.msra.mxu0 %v734
          %765 = vmatprep.subr.mxu0 0.0
          %766 = vmatpush1.msra.mxu0 %v735
          %767 = vmatprep.subr.mxu0 0.0
          %768 = vmatpush1.msra.mxu0 %v736
          %769 = vmatprep.subr.mxu0 0.0
          %770 = vmatpush1.msra.mxu0 %v737
          %771 = vmatprep.subr.mxu0 0.0
          %772 = vmatpush1.msra.mxu0 %v738
          %773 = vmatprep.subr.mxu0 0.0
          %774 = vmatpush1.msra.mxu0 %v739
          %775 = vmatprep.subr.mxu0 0.0
          %776 = vmatpush1.msra.mxu0 %v740
          %777 = vmatprep.subr.mxu0 0.0
          %778 = vmatpush1.msra.mxu0 %v741
          %779 = vmatprep.subr.mxu0 0.0
          %780 = vmatpush1.msra.mxu0 %v742
          %781 = vmatprep.subr.mxu0 0.0
          %782 = vmatpush1.msra.mxu0 %v743
          %783 = vmatprep.subr.mxu0 0.0
          %784 = vmatpush1.msra.mxu0 0.0
          %785 = vmatprep.subr.mxu0 0.0
          %786 = vmatpush1.msra.mxu0 0.0
          %787 = vmatprep.subr.mxu0 0.0
          %788 = vmatpush1.msra.mxu0 0.0
          %789 = vmatprep.subr.mxu0 0.0
          %790 = vmatpush1.msra.mxu0 0.0
          %791 = vmatprep.subr.mxu0 0.0
          %792 = vmatpush1.msra.mxu0 0.0
          %793 = vmatprep.subr.mxu0 0.0
          %794 = vmatpush1.msra.mxu0 0.0
          %795 = vmatprep.subr.mxu0 0.0
          %796 = vmatpush1.msra.mxu0 0.0
          %797 = vmatprep.subr.mxu0 0.0
          %798 = vmatpush1.msra.mxu0 0.0
          %799 = vmatprep.subr.mxu0 0.0
          %800 = vmatpush1.msra.mxu0 0.0
          %801 = vmatprep.subr.mxu0 0.0
          %802 = vmatpush1.msra.mxu0 0.0
          %803 = vmatprep.subr.mxu0 0.0
          %804 = vmatpush1.msra.mxu0 0.0
          %805 = vmatprep.subr.mxu0 0.0
          %806 = vmatpush1.msra.mxu0 0.0
          %807 = vmatprep.subr.mxu0 0.0
          %808 = vmatpush1.msra.mxu0 0.0
          %809 = vmatprep.subr.mxu0 0.0
          %810 = vmatpush1.msra.mxu0 0.0
          %811 = vmatprep.subr.mxu0 0.0
          %812 = vmatpush1.msra.mxu0 0.0
          %813 = vmatprep.subr.mxu0 0.0
          %814 = vmatpush1.msra.mxu0 0.0
          %815 = vmatprep.mubr.f32.mxu0 0.0
          %816 = vmatmul.mubr.f32.gmra.mrb[0].mxu0 %v746
          %v817 = vpop.f32.mrb[0].mxu0
          %v818 = vadd.f32 0.0, %v817
          %v819 = vpop.f32.mrb[0].mxu0
          %820 = vmatprep.mubr.f32.mxu0 0.0
          %821 = vmatmul.mubr.f32.gmra.mrb[0].mxu0 %v748
          %v822 = vpop.f32.mrb[0].mxu0
          %v823 = vadd.f32 0.0, %v822
          %v824 = vpop.f32.mrb[0].mxu0
          %825 = vdwg.mxu0
          %v826 = vadd.f32 %v725, %v818
          %v827 = vadd.f32 %v726, %v823
          %s828 = scalar_lea.vmem [#allocation5], 768
          %v829 = vld [vmem:[%s828] sm:$0xff]
          %v830 = vld [vmem:[%s828 + $0x8] sm:$0xff]
          %v831 = vld [vmem:[%s828 + $0x10] sm:$0xff]
          %v832 = vld [vmem:[%s828 + $0x18] sm:$0xff]
          %v833 = vld [vmem:[%s828 + $0x20] sm:$0xff]
          %v834 = vld [vmem:[%s828 + $0x28] sm:$0xff]
          %v835 = vld [vmem:[%s828 + $0x30] sm:$0xff]
          %v836 = vld [vmem:[%s828 + $0x38] sm:$0xff]
          %v837 = vld [vmem:[%s828 + $0x40] sm:$0xff]
          %v838 = vld [vmem:[%s828 + $0x48] sm:$0xff]
          %v839 = vld [vmem:[%s828 + $0x50] sm:$0xff]
          %v840 = vld [vmem:[%s828 + $0x58] sm:$0xff]
          %v841 = vld [vmem:[%s828 + $0x60] sm:$0xff]
          %v842 = vld [vmem:[%s828 + $0x68] sm:$0xff]
          %v843 = vld [vmem:[%s828 + $0x70] sm:$0xff]
          %v844 = vld [vmem:[%s828 + $0x78] sm:$0xff]
          %845 = vmatprep.subr.mxu0 0.0
          %846 = vmatpush1.msra.mxu0 %v829
          %847 = vmatprep.subr.mxu0 0.0
          %848 = vmatpush1.msra.mxu0 %v830
          %849 = vmatprep.subr.mxu0 0.0
          %850 = vmatpush1.msra.mxu0 %v831
          %851 = vmatprep.subr.mxu0 0.0
          %852 = vmatpush1.msra.mxu0 %v832
          %853 = vmatprep.subr.mxu0 0.0
          %854 = vmatpush1.msra.mxu0 %v833
          %855 = vmatprep.subr.mxu0 0.0
          %856 = vmatpush1.msra.mxu0 %v834
          %857 = vmatprep.subr.mxu0 0.0
          %858 = vmatpush1.msra.mxu0 %v835
          %859 = vmatprep.subr.mxu0 0.0
          %860 = vmatpush1.msra.mxu0 %v836
          %861 = vmatprep.subr.mxu0 0.0
          %862 = vmatpush1.msra.mxu0 %v837
          %863 = vmatprep.subr.mxu0 0.0
          %864 = vmatpush1.msra.mxu0 %v838
          %865 = vmatprep.subr.mxu0 0.0
          %866 = vmatpush1.msra.mxu0 %v839
          %867 = vmatprep.subr.mxu0 0.0
          %868 = vmatpush1.msra.mxu0 %v840
          %869 = vmatprep.subr.mxu0 0.0
          %870 = vmatpush1.msra.mxu0 %v841
          %871 = vmatprep.subr.mxu0 0.0
          %872 = vmatpush1.msra.mxu0 %v842
          %873 = vmatprep.subr.mxu0 0.0
          %874 = vmatpush1.msra.mxu0 %v843
          %875 = vmatprep.subr.mxu0 0.0
          %876 = vmatpush1.msra.mxu0 %v844
          %877 = vmatprep.subr.mxu0 0.0
          %878 = vmatpush1.msra.mxu0 0.0
          %879 = vmatprep.subr.mxu0 0.0
          %880 = vmatpush1.msra.mxu0 0.0
          %881 = vmatprep.subr.mxu0 0.0
          %882 = vmatpush1.msra.mxu0 0.0
          %883 = vmatprep.subr.mxu0 0.0
          %884 = vmatpush1.msra.mxu0 0.0
          %885 = vmatprep.subr.mxu0 0.0
          %886 = vmatpush1.msra.mxu0 0.0
          %887 = vmatprep.subr.mxu0 0.0
          %888 = vmatpush1.msra.mxu0 0.0
          %889 = vmatprep.subr.mxu0 0.0
          %890 = vmatpush1.msra.mxu0 0.0
          %891 = vmatprep.subr.mxu0 0.0
          %892 = vmatpush1.msra.mxu0 0.0
          %893 = vmatprep.subr.mxu0 0.0
          %894 = vmatpush1.msra.mxu0 0.0
          %895 = vmatprep.subr.mxu0 0.0
          %896 = vmatpush1.msra.mxu0 0.0
          %897 = vmatprep.subr.mxu0 0.0
          %898 = vmatpush1.msra.mxu0 0.0
          %899 = vmatprep.subr.mxu0 0.0
          %900 = vmatpush1.msra.mxu0 0.0
          %901 = vmatprep.subr.mxu0 0.0
          %902 = vmatpush1.msra.mxu0 0.0
          %903 = vmatprep.subr.mxu0 0.0
          %904 = vmatpush1.msra.mxu0 0.0
          %905 = vmatprep.subr.mxu0 0.0
          %906 = vmatpush1.msra.mxu0 0.0
          %907 = vmatprep.subr.mxu0 0.0
          %908 = vmatpush1.msra.mxu0 0.0
          %909 = vmatprep.mubr.f32.mxu0 0.0
          %910 = vmatmul.mubr.f32.gmra.mrb[0].mxu0 %v230
          %v911 = vpop.f32.mrb[0].mxu0
          %v912 = vadd.f32 0.0, %v911
          %v913 = vpop.f32.mrb[0].mxu0
          %914 = vmatprep.mubr.f32.mxu0 0.0
          %915 = vmatmul.mubr.f32.gmra.mrb[0].mxu0 %v231
          %v916 = vpop.f32.mrb[0].mxu0
          %v917 = vadd.f32 0.0, %v916
          %v918 = vpop.f32.mrb[0].mxu0
          %919 = vdwg.mxu0
          %v920 = vadd.f32 %v826, %v912
          %v921 = vadd.f32 %v827, %v917
          %s922 = scalar_lea.vmem [#allocation5], 896
          %v923 = vld [vmem:[%s922] sm:$0xff]
          %v924 = vld [vmem:[%s922 + $0x8] sm:$0xff]
          %v925 = vld [vmem:[%s922 + $0x10] sm:$0xff]
          %v926 = vld [vmem:[%s922 + $0x18] sm:$0xff]
          %v927 = vld [vmem:[%s922 + $0x20] sm:$0xff]
          %v928 = vld [vmem:[%s922 + $0x28] sm:$0xff]
          %v929 = vld [vmem:[%s922 + $0x30] sm:$0xff]
          %v930 = vld [vmem:[%s922 + $0x38] sm:$0xff]
          %v931 = vld [vmem:[%s922 + $0x40] sm:$0xff]
          %v932 = vld [vmem:[%s922 + $0x48] sm:$0xff]
          %v933 = vld [vmem:[%s922 + $0x50] sm:$0xff]
          %v934 = vld [vmem:[%s922 + $0x58] sm:$0xff]
          %v935 = vld [vmem:[%s922 + $0x60] sm:$0xff]
          %v936 = vld [vmem:[%s922 + $0x68] sm:$0xff]
          %v937 = vld [vmem:[%s922 + $0x70] sm:$0xff]
          %v938 = vld [vmem:[%s922 + $0x78] sm:$0xff]
          %v942 = vrot.slane %v230, 1
          %v943 = vrot.slane %v231, 1
          %v944 = vsel %vm269, %v942, %v943
          %v945 = vrot.slane %v232, 1
          %v946 = vsel %vm269, %v943, %v945
          %949 = vmatprep.subr.mxu0 0.0
          %950 = vmatpush1.msra.mxu0 %v923
          %951 = vmatprep.subr.mxu0 0.0
          %952 = vmatpush1.msra.mxu0 %v924
          %953 = vmatprep.subr.mxu0 0.0
          %954 = vmatpush1.msra.mxu0 %v925
          %955 = vmatprep.subr.mxu0 0.0
          %956 = vmatpush1.msra.mxu0 %v926
          %957 = vmatprep.subr.mxu0 0.0
          %958 = vmatpush1.msra.mxu0 %v927
          %959 = vmatprep.subr.mxu0 0.0
          %960 = vmatpush1.msra.mxu0 %v928
          %961 = vmatprep.subr.mxu0 0.0
          %962 = vmatpush1.msra.mxu0 %v929
          %963 = vmatprep.subr.mxu0 0.0
          %964 = vmatpush1.msra.mxu0 %v930
          %965 = vmatprep.subr.mxu0 0.0
          %966 = vmatpush1.msra.mxu0 %v931
          %967 = vmatprep.subr.mxu0 0.0
          %968 = vmatpush1.msra.mxu0 %v932
          %969 = vmatprep.subr.mxu0 0.0
          %970 = vmatpush1.msra.mxu0 %v933
          %971 = vmatprep.subr.mxu0 0.0
          %972 = vmatpush1.msra.mxu0 %v934
          %973 = vmatprep.subr.mxu0 0.0
          %974 = vmatpush1.msra.mxu0 %v935
          %975 = vmatprep.subr.mxu0 0.0
          %976 = vmatpush1.msra.mxu0 %v936
          %977 = vmatprep.subr.mxu0 0.0
          %978 = vmatpush1.msra.mxu0 %v937
          %979 = vmatprep.subr.mxu0 0.0
          %980 = vmatpush1.msra.mxu0 %v938
          %981 = vmatprep.subr.mxu0 0.0
          %982 = vmatpush1.msra.mxu0 0.0
          %983 = vmatprep.subr.mxu0 0.0
          %984 = vmatpush1.msra.mxu0 0.0
          %985 = vmatprep.subr.mxu0 0.0
          %986 = vmatpush1.msra.mxu0 0.0
          %987 = vmatprep.subr.mxu0 0.0
          %988 = vmatpush1.msra.mxu0 0.0
          %989 = vmatprep.subr.mxu0 0.0
          %990 = vmatpush1.msra.mxu0 0.0
          %991 = vmatprep.subr.mxu0 0.0
          %992 = vmatpush1.msra.mxu0 0.0
          %993 = vmatprep.subr.mxu0 0.0
          %994 = vmatpush1.msra.mxu0 0.0
          %995 = vmatprep.subr.mxu0 0.0
          %996 = vmatpush1.msra.mxu0 0.0
          %997 = vmatprep.subr.mxu0 0.0
          %998 = vmatpush1.msra.mxu0 0.0
          %999 = vmatprep.subr.mxu0 0.0
          %1000 = vmatpush1.msra.mxu0 0.0
          %1001 = vmatprep.subr.mxu0 0.0
          %1002 = vmatpush1.msra.mxu0 0.0
          %1003 = vmatprep.subr.mxu0 0.0
          %1004 = vmatpush1.msra.mxu0 0.0
          %1005 = vmatprep.subr.mxu0 0.0
          %1006 = vmatpush1.msra.mxu0 0.0
          %1007 = vmatprep.subr.mxu0 0.0
          %1008 = vmatpush1.msra.mxu0 0.0
          %1009 = vmatprep.subr.mxu0 0.0
          %1010 = vmatpush1.msra.mxu0 0.0
          %1011 = vmatprep.subr.mxu0 0.0
          %1012 = vmatpush1.msra.mxu0 0.0
          %1013 = vmatprep.mubr.f32.mxu0 0.0
          %1014 = vmatmul.mubr.f32.gmra.mrb[0].mxu0 %v944
          %v1015 = vpop.f32.mrb[0].mxu0
          %v1016 = vadd.f32 0.0, %v1015
          %v1017 = vpop.f32.mrb[0].mxu0
          %1018 = vmatprep.mubr.f32.mxu0 0.0
          %1019 = vmatmul.mubr.f32.gmra.mrb[0].mxu0 %v946
          %v1020 = vpop.f32.mrb[0].mxu0
          %v1021 = vadd.f32 0.0, %v1020
          %v1022 = vpop.f32.mrb[0].mxu0
          %1023 = vdwg.mxu0
          %v1024 = vadd.f32 %v920, %v1016
          %v1025 = vadd.f32 %v921, %v1021
          %s1026 = scalar_lea.vmem [#allocation5], 1024
          %v1027 = vld [vmem:[%s1026] sm:$0xff]
          %v1028 = vld [vmem:[%s1026 + $0x8] sm:$0xff]
          %v1029 = vld [vmem:[%s1026 + $0x10] sm:$0xff]
          %v1030 = vld [vmem:[%s1026 + $0x18] sm:$0xff]
          %v1031 = vld [vmem:[%s1026 + $0x20] sm:$0xff]
          %v1032 = vld [vmem:[%s1026 + $0x28] sm:$0xff]
          %v1033 = vld [vmem:[%s1026 + $0x30] sm:$0xff]
          %v1034 = vld [vmem:[%s1026 + $0x38] sm:$0xff]
          %v1035 = vld [vmem:[%s1026 + $0x40] sm:$0xff]
          %v1036 = vld [vmem:[%s1026 + $0x48] sm:$0xff]
          %v1037 = vld [vmem:[%s1026 + $0x50] sm:$0xff]
          %v1038 = vld [vmem:[%s1026 + $0x58] sm:$0xff]
          %v1039 = vld [vmem:[%s1026 + $0x60] sm:$0xff]
          %v1040 = vld [vmem:[%s1026 + $0x68] sm:$0xff]
          %v1041 = vld [vmem:[%s1026 + $0x70] sm:$0xff]
          %v1042 = vld [vmem:[%s1026 + $0x78] sm:$0xff]
          %v1043 = vrot.slane %v230, 2
          %v1044 = vrot.slane %v231, 2
          %v1045 = vsel %vm444, %v1043, %v1044
          %v1046 = vrot.slane %v232, 2
          %v1047 = vsel %vm444, %v1044, %v1046
          %1050 = vmatprep.subr.mxu0 0.0
          %1051 = vmatpush1.msra.mxu0 %v1027
          %1052 = vmatprep.subr.mxu0 0.0
          %1053 = vmatpush1.msra.mxu0 %v1028
          %1054 = vmatprep.subr.mxu0 0.0
          %1055 = vmatpush1.msra.mxu0 %v1029
          %1056 = vmatprep.subr.mxu0 0.0
          %1057 = vmatpush1.msra.mxu0 %v1030
          %1058 = vmatprep.subr.mxu0 0.0
          %1059 = vmatpush1.msra.mxu0 %v1031
          %1060 = vmatprep.subr.mxu0 0.0
          %1061 = vmatpush1.msra.mxu0 %v1032
          %1062 = vmatprep.subr.mxu0 0.0
          %1063 = vmatpush1.msra.mxu0 %v1033
          %1064 = vmatprep.subr.mxu0 0.0
          %1065 = vmatpush1.msra.mxu0 %v1034
          %1066 = vmatprep.subr.mxu0 0.0
          %1067 = vmatpush1.msra.mxu0 %v1035
          %1068 = vmatprep.subr.mxu0 0.0
          %1069 = vmatpush1.msra.mxu0 %v1036
          %1070 = vmatprep.subr.mxu0 0.0
          %1071 = vmatpush1.msra.mxu0 %v1037
          %1072 = vmatprep.subr.mxu0 0.0
          %1073 = vmatpush1.msra.mxu0 %v1038
          %1074 = vmatprep.subr.mxu0 0.0
          %1075 = vmatpush1.msra.mxu0 %v1039
          %1076 = vmatprep.subr.mxu0 0.0
          %1077 = vmatpush1.msra.mxu0 %v1040
          %1078 = vmatprep.subr.mxu0 0.0
          %1079 = vmatpush1.msra.mxu0 %v1041
          %1080 = vmatprep.subr.mxu0 0.0
          %1081 = vmatpush1.msra.mxu0 %v1042
          %1082 = vmatprep.subr.mxu0 0.0
          %1083 = vmatpush1.msra.mxu0 0.0
          %1084 = vmatprep.subr.mxu0 0.0
          %1085 = vmatpush1.msra.mxu0 0.0
          %1086 = vmatprep.subr.mxu0 0.0
          %1087 = vmatpush1.msra.mxu0 0.0
          %1088 = vmatprep.subr.mxu0 0.0
          %1089 = vmatpush1.msra.mxu0 0.0
          %1090 = vmatprep.subr.mxu0 0.0
          %1091 = vmatpush1.msra.mxu0 0.0
          %1092 = vmatprep.subr.mxu0 0.0
          %1093 = vmatpush1.msra.mxu0 0.0
          %1094 = vmatprep.subr.mxu0 0.0
          %1095 = vmatpush1.msra.mxu0 0.0
          %1096 = vmatprep.subr.mxu0 0.0
          %1097 = vmatpush1.msra.mxu0 0.0
          %1098 = vmatprep.subr.mxu0 0.0
          %1099 = vmatpush1.msra.mxu0 0.0
          %1100 = vmatprep.subr.mxu0 0.0
          %1101 = vmatpush1.msra.mxu0 0.0
          %1102 = vmatprep.subr.mxu0 0.0
          %1103 = vmatpush1.msra.mxu0 0.0
          %1104 = vmatprep.subr.mxu0 0.0
          %1105 = vmatpush1.msra.mxu0 0.0
          %1106 = vmatprep.subr.mxu0 0.0
          %1107 = vmatpush1.msra.mxu0 0.0
          %1108 = vmatprep.subr.mxu0 0.0
          %1109 = vmatpush1.msra.mxu0 0.0
          %1110 = vmatprep.subr.mxu0 0.0
          %1111 = vmatpush1.msra.mxu0 0.0
          %1112 = vmatprep.subr.mxu0 0.0
          %1113 = vmatpush1.msra.mxu0 0.0
          %1114 = vmatprep.mubr.f32.mxu0 0.0
          %1115 = vmatmul.mubr.f32.gmra.mrb[0].mxu0 %v1045
          %v1116 = vpop.f32.mrb[0].mxu0
          %v1117 = vadd.f32 0.0, %v1116
          %v1118 = vpop.f32.mrb[0].mxu0
          %1119 = vmatprep.mubr.f32.mxu0 0.0
          %1120 = vmatmul.mubr.f32.gmra.mrb[0].mxu0 %v1047
          %v1121 = vpop.f32.mrb[0].mxu0
          %v1122 = vadd.f32 0.0, %v1121
          %v1123 = vpop.f32.mrb[0].mxu0
          %1124 = vdwg.mxu0
          %v1125 = vadd.f32 %v1024, %v1117
          %v1126 = vadd.f32 %v1025, %v1122
          %s1127 = smul.u32 %s216, 16
          %s1128 = scalar_lea.vmem %s207, %s1127 [#allocation7]
          %1129 = vst [vmem:[%s1128] sm:$0xff] %v1125
          %1130 = vst [vmem:[%s1128 + $0x8] sm:$0xff] %v1126
          %v1131 = vadd.f32 %v1125, %v1126
          %v1132 = vrot.slane %v1131, 4
          %v1133 = vadd.f32 %v1131, %v1132
          %v1134 = vrot.slane %v1133, 2
          %v1135 = vadd.f32 %v1133, %v1134
          %v1136 = vrot.slane %v1135, 1
          %v1137 = vadd.f32 %v1135, %v1136
          %v1138 = vmul.f32 %v1125, %v1125
          %v1139 = vmul.f32 %v1126, %v1126
          %v1140 = vadd.f32 %v1138, %v1139
          %v1141 = vrot.slane %v1140, 4
          %v1142 = vadd.f32 %v1140, %v1141
          %v1143 = vrot.slane %v1142, 2
          %v1144 = vadd.f32 %v1142, %v1143
          %v1145 = vrot.slane %v1144, 1
          %v1146 = vadd.f32 %v1144, %v1145
          %vm1147 = vcmask 1040384
          %v1148 = vsel %vm1147, %v1137, %v1146
          %v1149 = vadd.f32 %v221, %v1148
        $region41: #{res_block.3} parent=27 // loop_footer
          %s220 = sadd.s32 1, %s216
        $region42: #{res_block.3} parent=27 // loop_footer_branch
          %215 = sbr.rel target = $region38
        $region43: #{res_block.3} parent=27 // loop_exit
          _
        %1150 = vst [vmem:[%s214] sm:$0x3] %v221
        %s1151 = sand.u32 %s80, 1
        %s1152 = scalar_lea.sflag [#allocation4], %s1151
        %s1153 = sand.u32 %s80, 1
        %s1154 = smul.addr %s1153, 256
        %s1155 = scalar_lea.vmem [#allocation7], %s1154
        %s1156 = sand.u32 %s106, 1
        %s1157 = scalar_lea.sflag [#allocation9], %s1156
        %s1158 = sand.u32 %s106, 1
        %s1159 = smul.addr %s1158, 2
        %s1160 = scalar_lea.vmem [#allocation8], %s1159
        // Predicated region
        $region44: #{res_block.3} parent=27 // pred_check
          %p1161 = pneg %p90
        $region45: #{res_block.3} parent=27 // pred_check_branch
          %1163 = sbr.rel (%p1161) target = $region47
        $region46: #{res_block.3} parent=27 // pred_region
          %s1165 = ssub.s32 4096, 4096
          %1166 = vsyncadd %s1152, %s1165
          %s1167 = smul.addr %s25, 32
          %s1168 = smul.addr %s1167, 128
          %s1169 = scalar_lea.hbm %s2, %s1168
          %s1170 = sshll.u32 %s1155, 4
          %s1171 = int_to_ptr.vmem [resolvable:$true] %s1170
          %1176 = dma.vmem_to_hbm [thread:$0]  %s1171, 4096, %s1169, %s1152, 128, 128, 8
        $region47: #{res_block.3} parent=27 // pred_fallthru
          _
        // Predicated region
        $region48: #{res_block.3} parent=27 // pred_check
          %p1177 = pneg %p116
        $region49: #{res_block.3} parent=27 // pred_check_branch
          %1179 = sbr.rel (%p1177) target = $region51
        $region50: #{res_block.3} parent=27 // pred_region
          %s1181 = ssub.s32 32, 32
          %1182 = vsyncadd %s1157, %s1181
          %s1183 = smul.addr %s25, 32
          %s1184 = scalar_lea.hbm %s3, %s1183
          %s1186 = sshll.u32 %s1160, 4
          %s1187 = int_to_ptr.vmem [resolvable:$true] %s1186
          %1189 = dma.vmem_to_hbm [thread:$0]  %s1187, 32, %s1184, %s1157
        $region51: #{res_block.3} parent=27 // pred_fallthru
          _
      $region28: #{res_block.3} parent=5 // pred_fallthru
        _
      %p1190 = scmp.le.s32.totalorder 2, %s20
      // Predicated region
      $region52: #{res_block.3} parent=5 // pred_check
        %p1191 = pneg %p1190
      $region53: #{res_block.3} parent=5 // pred_check_branch
        %1193 = sbr.rel (%p1191) target = $region55
      $region54: #{res_block.3} parent=5 // pred_region
        %s1194 = ssub.s32 %s20, 2
        // Predicated region
        $region56: #{res_block.3} parent=54 // pred_check
          %p1195 = pneg %p96
        $region57: #{res_block.3} parent=54 // pred_check_branch
          %1197 = sbr.rel (%p1195) target = $region59
        $region58: #{res_block.3} parent=54 // pred_region
          %s1198 = sand.u32 %s81, 1
          %s1199 = scalar_lea.sflag [#allocation4], %s1198
          %s1200 = sand.u32 %s81, 1
          %s1201 = smul.addr %s1200, 256
          %s1202 = scalar_lea.vmem [#allocation7], %s1201
          %1203 = dma.done %s1199, 4096
        $region59: #{res_block.3} parent=54 // pred_fallthru
          _
        // Predicated region
        $region60: #{res_block.3} parent=54 // pred_check
          %p1204 = pneg %p122
        $region61: #{res_block.3} parent=54 // pred_check_branch
          %1206 = sbr.rel (%p1204) target = $region63
        $region62: #{res_block.3} parent=54 // pred_region
          %s1207 = sand.u32 %s107, 1
          %s1208 = scalar_lea.sflag [#allocation9], %s1207
          %s1209 = sand.u32 %s107, 1
          %s1210 = smul.addr %s1209, 2
          %s1211 = scalar_lea.vmem [#allocation8], %s1210
          %1212 = dma.done %s1208, 32
        $region63: #{res_block.3} parent=54 // pred_fallthru
          _
      $region55: #{res_block.3} parent=5 // pred_fallthru
        _
    $region6: #{res_block.3} parent=1 // loop_footer
      %s24 = sadd.s32 1, %s20
    $region7: #{res_block.3} parent=1 // loop_footer_branch
      %19 = sbr.rel target = $region3
    $region8: #{res_block.3} parent=1 // loop_exit
      _
    %1213 = vsyncpa [#allocation3], 1
    %s1214 = scalar_lea.sflag [#allocation3], 1
    %1215 = vsyncpa %s1214, 1
    %1216 = vsyncpa [#allocation6], 1
    %1217 = vsyncpa [#allocation4], 1
    %s1218 = scalar_lea.sflag [#allocation4], 1
    %1219 = vsyncpa %s1218, 1
    %1220 = vsyncpa [#allocation9], 1
    %s1221 = scalar_lea.sflag [#allocation9], 1
    %1222 = vsyncpa %s1221, 1

</llo_original>
